<compile_context>
chip_gen: v6e
topology: v6e:2x2x1
jax: 0.10.0
libtpu: 0.0.40
codegen_flags: <defaults>
</compile_context>

<pallas_src>
import math

import numpy as np
import jax
import jax.numpy as jnp
from jax.experimental import pallas as pl
from jax.experimental.pallas import tpu as pltpu

# ----------------------------- hyper-parameters ------------------------------
# The reference forward pass is only shape-consistent when pf_num == 2 and
# g_h_dims == 2 * pf_hidden_dims (c_x is used as h0 of generation_gru and
# linear_out takes g_h_dims * pf_num inputs).
INPUT_DIMS = 32          # == z_dims in the original (256); shrunk for the demo
PF_HIDDEN = 16
G_HIDDEN = 2 * PF_HIDDEN  # 32
PF_NUM = 2
INPAINT_LEN = 4
BATCH = 2
T_PAST = 8
T_FUT = 8


# ------------------------------- Pallas kernel --------------------------------
def _gru_fused(gi, gh, h):
    """Fused multi-stream GRU gate math (torch gate order r, z, n).

    gi/gh: [B, 3*S] gate-major (r-block | z-block | n-block), each block S wide with
    streams concatenated on lanes in the same order as h.  h: [B, S].
    """
    S = h.shape[-1]
    r = jax.nn.sigmoid(gi[:, :S] + gh[:, :S])
    z = jax.nn.sigmoid(gi[:, S:2 * S] + gh[:, S:2 * S])
    n = jnp.tanh(gi[:, 2 * S:] + r * gh[:, 2 * S:])
    return (1.0 - z) * n + z * h


def _inpaint_kernel(xp_ref, xf_ref, encw_ref, encb_ref, decw_ref, decb_ref,
                    lin_ref, ys_ref):
    """Full InpaintingNet forward (eval, no teacher forcing) in one grid step.

    xp_ref/xf_ref : [B, T, D]      past / future latent sequences
    encw_ref      : [4D+16H, 12H]  packed encoder weights (gate-major, 4 streams)
    encb_ref      : [4, 12H]       packed encoder biases (bih0, bhh0, bih1, bhh1)
    decw_ref      : [D+6G, 6G]     packed generation-GRU weights (gate-major, 2 dirs)
    decb_ref      : [4, 6G]        packed decoder biases (bg0, bhg0, bg1, bhg1)
    lin_ref       : [2G+1, D]      linear_out weight (rows 0:2G) + bias (last row)
    ys_ref        : [B, L*D]       generated frames, lane-dense, written once
    """
    B, T, D = xp_ref.shape
    H = encw_ref.shape[-1] // 12      # pf_hidden_dims
    G = decw_ref.shape[-1] // 6       # g_h_dims
    L = ys_ref.shape[-1] // D         # inpaint_len
    S = 4 * H                         # fused encoder hidden width
    SG = 2 * G                        # fused decoder hidden width (== S)

    # ---- one-time weight loads via static, 8-aligned row slices of the slabs ----
    o = 0
    wih0 = encw_ref[o:o + 4 * D, :]; o += 4 * D        # [4D, 12H]
    whh0 = encw_ref[o:o + S, :];     o += S            # [4H, 12H]
    wih1 = encw_ref[o:o + 8 * H, :]; o += 8 * H        # [8H, 12H]
    whh1 = encw_ref[o:o + S, :]                        # [4H, 12H]
    encb = encb_ref[...]
    bih0, bhh0, bih1, bhh1 = encb[0:1], encb[1:2], encb[2:3], encb[3:4]

    o = 0
    wg0 = decw_ref[o:o + D, :];   o += D               # [D, 6G]
    whg0 = decw_ref[o:o + SG, :]; o += SG              # [2G, 6G]
    wg1 = decw_ref[o:o + SG, :];  o += SG              # [2G, 6G]
    whg1 = decw_ref[o:o + SG, :]                       # [2G, 6G]
    decb = decb_ref[...]
    bg0, bhg0, bg1, bhg1 = decb[0:1], decb[1:2], decb[2:3], decb[3:4]

    lw = lin_ref[0:SG, :]                              # [2G, D]
    lb = lin_ref[SG:SG + 1, :]                         # [1, D]

    xp = xp_ref[...]                                   # [B, T, D]
    xf = xf_ref[...]

    # ---------------- encoders: 4 streams fused on the lane axis ----------------
    # stream lane order: (past_fwd | fut_fwd | past_bwd | fut_bwd), H lanes each.
    # Layer-0 fused input is pre-arranged per *step* so the recurrence only needs a
    # sublane slice: row block p = [past[p] | fut[p] | past[T-1-p] | fut[T-1-p]].
    x0 = jnp.concatenate(
        [jnp.concatenate([xp[:, p, :], xf[:, p, :],
                          xp[:, T - 1 - p, :], xf[:, T - 1 - p, :]], axis=-1)
         for p in range(T)], axis=0)                                   # [T*B, 4D]
    gi0 = jnp.dot(x0, wih0, preferred_element_type=jnp.float32) + bih0  # [T*B, 12H]

    h = jnp.zeros((B, S), jnp.float32)
    hs0 = []                              # per-step fused hidden, kept in registers
    for p in range(T):                    # short fixed trip count -> full unroll
        gi = gi0[p * B:(p + 1) * B, :]
        gh = jnp.dot(h, whh0, preferred_element_type=jnp.float32) + bhh0
        h = _gru_fused(gi, gh, h)
        hs0.append(h)
    hd0 = h   # final layer-0 states == c_x[0] || c_x[1] == decoder layer-0 h0

    # Layer-1 fused input: row block p = [hs0[p] | hs0[T-1-p]]; the packed layer-1
    # input weight absorbs the fwd/bwd re-ordering, so this is shuffle-free.
    x1 = jnp.concatenate(
        [jnp.concatenate([hs0[p], hs0[T - 1 - p]], axis=-1) for p in range(T)],
        axis=0)                                                        # [T*B, 8H]
    gi1 = jnp.dot(x1, wih1, preferred_element_type=jnp.float32) + bih1  # [T*B, 12H]

    h = jnp.zeros((B, S), jnp.float32)
    for p in range(T):
        gi = gi1[p * B:(p + 1) * B, :]
        gh = jnp.dot(h, whh1, preferred_element_type=jnp.float32) + bhh1
        h = _gru_fused(gi, gh, h)
    hd1 = h   # final layer-1 states == c_x[2] || c_x[3] == decoder layer-1 h0

    # ---------------- autoregressive decoder (eval branch) ----------------
    # Both generation-GRU directions live fused in hd0/hd1 [B, 2G]; the layer-1
    # input x1 and the output gf are the fused hidden itself (zero-copy).
    y = xp[:, T - 1, :]                                # init_gc = past_x[:, -1, :]
    ys = []
    for _ in range(L):
        gi = jnp.dot(y, wg0, preferred_element_type=jnp.float32) + bg0      # [B,6G]
        gh = jnp.dot(hd0, whg0, preferred_element_type=jnp.float32) + bhg0
        hd0 = _gru_fused(gi, gh, hd0)
        gi = jnp.dot(hd0, wg1, preferred_element_type=jnp.float32) + bg1
        gh = jnp.dot(hd1, whg1, preferred_element_type=jnp.float32) + bhg1
        hd1 = _gru_fused(gi, gh, hd1)
        y = jnp.dot(hd1, lw, preferred_element_type=jnp.float32) + lb       # [B,D]
        ys.append(y)

    # single lane-dense store: [B, L*D] = [2, 128]
    ys_ref[...] = jnp.concatenate(ys, axis=-1).astype(ys_ref.dtype)


# ----------------------------- parameter packing ------------------------------
def pack_params(params):
    """One-time host-side repack into lane-dense, gate-major fused slabs."""
    H, D, G = PF_HIDDEN, INPUT_DIMS, G_HIDDEN
    GW, GC = 12 * H, 6 * G
    past, fut, gen = params["past_gru"], params["future_gru"], params["generation_gru"]

    def npa(t):  # layer tuples are (wih, whh, bih, bhh)
        return tuple(np.asarray(a, np.float32) for a in t)

    # encoder stream order: s0=past_fwd, s1=fut_fwd, s2=past_bwd, s3=fut_bwd.
    # gate-major columns: gate g in (r,z,n), stream s -> cols (g*4+s)*H : +H.
    # ---- layer 0 ----
    Wih0 = np.zeros((4 * D, GW), np.float32)
    Whh0 = np.zeros((4 * H, GW), np.float32)
    bih0 = np.zeros((1, GW), np.float32)
    bhh0 = np.zeros((1, GW), np.float32)
    for s, (wih, whh, bi, bh) in enumerate(
            [npa(past[0][0]), npa(fut[0][0]), npa(past[0][1]), npa(fut[0][1])]):
        for g in range(3):
            c = (g * 4 + s) * H
            Wih0[s * D:(s + 1) * D, c:c + H] = wih[:, g * H:(g + 1) * H]
            Whh0[s * H:(s + 1) * H, c:c + H] = whh[:, g * H:(g + 1) * H]
            bih0[0, c:c + H] = bi[0, g * H:(g + 1) * H]
            bhh0[0, c:c + H] = bh[0, g * H:(g + 1) * H]

    # ---- layer 1 ----
    # Fused layer-1 input row block p is [h_step[p] | h_step[T-1-p]] with
    # h_step[q] = [fw_past[q] | fw_fut[q] | bw_past[T-1-q] | bw_fut[T-1-q]];
    # rb maps (stream, input half {0: fwd-half, 1: bwd-half}) -> H-wide row block.
    rb = {(0, 0): 0, (0, 1): 6, (1, 0): 1, (1, 1): 7,
          (2, 0): 4, (2, 1): 2, (3, 0): 5, (3, 1): 3}
    Wih1 = np.zeros((8 * H, GW), np.float32)
    Whh1 = np.zeros((4 * H, GW), np.float32)
    bih1 = np.zeros((1, GW), np.float32)
    bhh1 = np.zeros((1, GW), np.float32)
    for s, (wih, whh, bi, bh) in enumerate(
            [npa(past[1][0]), npa(fut[1][0]), npa(past[1][1]), npa(fut[1][1])]):
        for g in range(3):
            c = (g * 4 + s) * H
            for half in range(2):
                r = rb[(s, half)] * H
                Wih1[r:r + H, c:c + H] = wih[half * H:(half + 1) * H, g * H:(g + 1) * H]
            Whh1[s * H:(s + 1) * H, c:c + H] = whh[:, g * H:(g + 1) * H]
            bih1[0, c:c + H] = bi[0, g * H:(g + 1) * H]
            bhh1[0, c:c + H] = bh[0, g * H:(g + 1) * H]

    enc_w = np.concatenate([Wih0, Whh0, Wih1, Whh1], axis=0)       # [4D+16H, 12H]
    enc_b = np.concatenate([bih0, bhh0, bih1, bhh1], axis=0)       # [4, 12H]

    # decoder direction order: d0=fwd, d1=bwd; gate-major cols (g*2+d)*G : +G
    Wg0 = np.zeros((D, GC), np.float32)
    Whg0 = np.zeros((2 * G, GC), np.float32)
    Wg1 = np.zeros((2 * G, GC), np.float32)
    Whg1 = np.zeros((2 * G, GC), np.float32)
    dec_b = np.zeros((4, GC), np.float32)          # rows: bg0, bhg0, bg1, bhg1
    for d in range(2):
        wih0g, whh0g, bi0g, bh0g = npa(gen[0][d])
        wih1g, whh1g, bi1g, bh1g = npa(gen[1][d])
        for g in range(3):
            c = (g * 2 + d) * G
            Wg0[:, c:c + G] = wih0g[:, g * G:(g + 1) * G]
            Whg0[d * G:(d + 1) * G, c:c + G] = whh0g[:, g * G:(g + 1) * G]
            Wg1[:, c:c + G] = wih1g[:, g * G:(g + 1) * G]
            Whg1[d * G:(d + 1) * G, c:c + G] = whh1g[:, g * G:(g + 1) * G]
            dec_b[0, c:c + G] = bi0g[0, g * G:(g + 1) * G]
            dec_b[1, c:c + G] = bh0g[0, g * G:(g + 1) * G]
            dec_b[2, c:c + G] = bi1g[0, g * G:(g + 1) * G]
            dec_b[3, c:c + G] = bh1g[0, g * G:(g + 1) * G]

    dec_w = np.concatenate([Wg0, Whg0, Wg1, Whg1], axis=0)         # [D+6G, 6G]

    lin = np.concatenate([np.asarray(params["linear_w"], np.float32),
                          np.asarray(params["linear_b"], np.float32)], axis=0)

    return (jnp.asarray(enc_w), jnp.asarray(enc_b),
            jnp.asarray(dec_w), jnp.asarray(dec_b), jnp.asarray(lin))


# ------------------------------- full forward --------------------------------
@jax.jit
def _forward_core(enc_w, enc_b, dec_w, dec_b, lin, past_x, future_x):
    B, Tp, D = past_x.shape
    assert future_x.shape == past_x.shape, (
        "past/future lengths must match for the fused encoder kernel")
    L = INPAINT_LEN

    args = (past_x, future_x, enc_w, enc_b, dec_w, dec_b, lin)
    in_specs = [pl.BlockSpec(a.shape, lambda i, n=a.ndim: (0,) * n) for a in args]

    ys_flat = pl.pallas_call(
        _inpaint_kernel,
        out_shape=jax.ShapeDtypeStruct((B, L * D), jnp.float32),
        grid_spec=pltpu.PrefetchScalarGridSpec(
            num_scalar_prefetch=0,
            grid=(1,),
            in_specs=in_specs,
            out_specs=pl.BlockSpec((B, L * D), lambda i: (0, 0)),
        ),
        compiler_params=pltpu.CompilerParams(dimension_semantics=("arbitrary",)),
    )(*args)
    return ys_flat.reshape(B, L, D)


def inpainting_forward(packed_params, past_x, future_x, inpaint_x):
    """Eval-mode forward of InpaintingNet (train_mse=True, no teacher forcing)."""
    ys = _forward_core(*packed_params, past_x, future_x)
    gen_x = (ys, inpaint_x)        # train_mse=True branch returns (stacked ys, inpaint_x)
    iteration = 0                  # not training
    use_teacher = False
    return gen_x, iteration, use_teacher


# --------------------------- pure-JAX reference ------------------------------
def _cell_ref(x, h, wih, whh, bih, bhh):
    H = h.shape[-1]
    gi = x @ wih + bih
    gh = h @ whh + bhh
    r = jax.nn.sigmoid(gi[:, :H] + gh[:, :H])
    z = jax.nn.sigmoid(gi[:, H:2 * H] + gh[:, H:2 * H])
    n = jnp.tanh(gi[:, 2 * H:] + r * gh[:, 2 * H:])
    return (1.0 - z) * n + z * h


def _bi_gru_ref(x_btd, params, hidden):
    B, T, _ = x_btd.shape
    layer_in = x_btd
    h_list = []
    for layer in params:
        h = jnp.zeros((B, hidden), jnp.float32)
        fw = []
        for t in range(T):
            h = _cell_ref(layer_in[:, t], h, *layer[0])
            fw.append(h)
        h_list.append(h)
        hb = jnp.zeros((B, hidden), jnp.float32)
        bw = [None] * T
        for t in reversed(range(T)):
            hb = _cell_ref(layer_in[:, t], hb, *layer[1])
            bw[t] = hb
        h_list.append(hb)
        layer_in = jnp.concatenate([jnp.stack(fw, 1), jnp.stack(bw, 1)], axis=-1)
    return layer_in, jnp.stack(h_list, 0)


def _forward_ref(params, past_x, future_x):
    init_gc = past_x[:, -1, :]
    _, h_past = _bi_gru_ref(past_x, params["past_gru"], PF_HIDDEN)
    _, h_future = _bi_gru_ref(future_x, params["future_gru"], PF_HIDDEN)
    c_x = jnp.concatenate([h_past, h_future], axis=2)
    y = init_gc
    h = [c_x[0], c_x[1], c_x[2], c_x[3]]
    ys = []
    gp = params["generation_gru"]
    for _ in range(INPAINT_LEN):
        h[0] = _cell_ref(y, h[0], *gp[0][0])
        h[1] = _cell_ref(y, h[1], *gp[0][1])
        x1 = jnp.concatenate([h[0], h[1]], -1)
        h[2] = _cell_ref(x1, h[2], *gp[1][0])
        h[3] = _cell_ref(x1, h[3], *gp[1][1])
        out = jnp.concatenate([h[2], h[3]], -1)
        y = out @ params["linear_w"] + params["linear_b"]
        ys.append(y)
    return jnp.stack(ys, 1)


# ------------------------- deterministic parameter init ----------------------
def _make_gru_params(key, input_size, hidden, num_layers):
    """xavier_normal_ weights (as in xavier_initialization), torch-default uniform biases."""
    params = []
    for l in range(num_layers):
        d_in = input_size if l == 0 else 2 * hidden
        layer = []
        for _ in range(2):  # forward, backward
            key, k1, k2, k3, k4 = jax.random.split(key, 5)
            std_ih = math.sqrt(2.0 / (d_in + 3 * hidden))
            std_hh = math.sqrt(2.0 / (hidden + 3 * hidden))
            wih = std_ih * jax.random.normal(k1, (d_in, 3 * hidden), jnp.float32)
            whh = std_hh * jax.random.normal(k2, (hidden, 3 * hidden), jnp.float32)
            b = 1.0 / math.sqrt(hidden)
            bih = jax.random.uniform(k3, (1, 3 * hidden), jnp.float32, -b, b)
            bhh = jax.random.uniform(k4, (1, 3 * hidden), jnp.float32, -b, b)
            layer.append((wih, whh, bih, bhh))
        params.append(layer)
    return params, key


def make_params(key):
    params = {}
    params["past_gru"], key = _make_gru_params(key, INPUT_DIMS, PF_HIDDEN, PF_NUM)
    params["future_gru"], key = _make_gru_params(key, INPUT_DIMS, PF_HIDDEN, PF_NUM)
    params["generation_gru"], key = _make_gru_params(key, INPUT_DIMS, G_HIDDEN, PF_NUM)
    key, k1, k2 = jax.random.split(key, 3)
    lin_in = G_HIDDEN * PF_NUM
    std = math.sqrt(2.0 / (lin_in + INPUT_DIMS))
    params["linear_w"] = std * jax.random.normal(k1, (lin_in, INPUT_DIMS), jnp.float32)
    b = 1.0 / math.sqrt(lin_in)
    params["linear_b"] = jax.random.uniform(k2, (1, INPUT_DIMS), jnp.float32, -b, b)
    return params, key


# ------------------------------------ main -----------------------------------
if __name__ == "__main__":
    key = jax.random.PRNGKey(0)
    params, key = make_params(key)
    packed = pack_params(params)       # one-time host-side weight packing

    key, kp, kf, ki = jax.random.split(key, 4)
    # pre-encoded latent sequences (what get_z_seq would have produced)
    past_x = jax.random.normal(kp, (BATCH, T_PAST, INPUT_DIMS), jnp.float32)
    future_x = jax.random.normal(kf, (BATCH, T_FUT, INPUT_DIMS), jnp.float32)
    inpaint_x = jax.random.normal(ki, (BATCH, INPAINT_LEN, INPUT_DIMS), jnp.float32)

    (gen_ys, inpaint_ret), iteration, use_teacher = inpainting_forward(
        packed, past_x, future_x, inpaint_x)
    gen_ys = jax.block_until_ready(gen_ys)
    jax.block_until_ready(inpaint_ret)

    assert gen_ys.shape == (BATCH, INPAINT_LEN, INPUT_DIMS)
    assert inpaint_ret.shape == (BATCH, INPAINT_LEN, INPUT_DIMS)
    assert iteration == 0 and use_teacher is False

    # numerical check against a plain-JAX reference of the same math
    ref_ys = jax.block_until_ready(_forward_ref(params, past_x, future_x))
    assert jnp.allclose(gen_ys, ref_ys, rtol=1e-3, atol=1e-3), (
        float(jnp.max(jnp.abs(gen_ys - ref_ys))))

    print("KERNEL_OK")
</pallas_src>

<mosaic_0001>
module attributes {stable_mosaic.version = 11 : i64} {
  func.func @_inpaint_kernel(%arg0: i32, %arg1: memref<2x8x32xf32, #tpu.memory_space<vmem>>, %arg2: memref<2x8x32xf32, #tpu.memory_space<vmem>>, %arg3: memref<384x192xf32, #tpu.memory_space<vmem>>, %arg4: memref<4x192xf32, #tpu.memory_space<vmem>>, %arg5: memref<224x192xf32, #tpu.memory_space<vmem>>, %arg6: memref<4x192xf32, #tpu.memory_space<vmem>>, %arg7: memref<65x32xf32, #tpu.memory_space<vmem>>, %arg8: memref<2x128xf32, #tpu.memory_space<vmem>>) attributes {dimension_semantics = [#tpu.dimension_semantics<arbitrary>], iteration_bounds = array<i64: 1>, scalar_prefetch = 0 : i64, scratch_operands = 0 : i64, tpu.core_type = #tpu.core_type<tc>, window_params = [{pipeline_mode = #tpu.pipeline_mode<synchronous>, transform_indices = @transform_0, window_bounds = array<i64: 2, 8, 32>}, {pipeline_mode = #tpu.pipeline_mode<synchronous>, transform_indices = @transform_1, window_bounds = array<i64: 2, 8, 32>}, {pipeline_mode = #tpu.pipeline_mode<synchronous>, transform_indices = @transform_2, window_bounds = array<i64: 384, 192>}, {pipeline_mode = #tpu.pipeline_mode<synchronous>, transform_indices = @transform_3, window_bounds = array<i64: 4, 192>}, {pipeline_mode = #tpu.pipeline_mode<synchronous>, transform_indices = @transform_4, window_bounds = array<i64: 224, 192>}, {pipeline_mode = #tpu.pipeline_mode<synchronous>, transform_indices = @transform_5, window_bounds = array<i64: 4, 192>}, {pipeline_mode = #tpu.pipeline_mode<synchronous>, transform_indices = @transform_6, window_bounds = array<i64: 65, 32>}, {pipeline_mode = #tpu.pipeline_mode<synchronous>, transform_indices = @transform_7, window_bounds = array<i64: 2, 128>}]} {
    %c0 = arith.constant 0 : index
    %c0_0 = arith.constant 0 : index
    %0 = vector.load %arg3[%c0, %c0_0] : memref<384x192xf32, #tpu.memory_space<vmem>>, vector<128x192xf32>
    %c128 = arith.constant 128 : index
    %c0_1 = arith.constant 0 : index
    %1 = vector.load %arg3[%c128, %c0_1] : memref<384x192xf32, #tpu.memory_space<vmem>>, vector<64x192xf32>
    %c192 = arith.constant 192 : index
    %c0_2 = arith.constant 0 : index
    %2 = vector.load %arg3[%c192, %c0_2] : memref<384x192xf32, #tpu.memory_space<vmem>>, vector<128x192xf32>
    %c320 = arith.constant 320 : index
    %c0_3 = arith.constant 0 : index
    %3 = vector.load %arg3[%c320, %c0_3] : memref<384x192xf32, #tpu.memory_space<vmem>>, vector<64x192xf32>
    %c0_4 = arith.constant 0 : index
    %c0_5 = arith.constant 0 : index
    %4 = vector.load %arg4[%c0_4, %c0_5] : memref<4x192xf32, #tpu.memory_space<vmem>>, vector<4x192xf32>
    %5 = vector.extract_strided_slice %4 {offsets = [0, 0], sizes = [1, 192], strides = [1, 1]} : vector<4x192xf32> to vector<1x192xf32>
    %6 = vector.extract_strided_slice %4 {offsets = [1, 0], sizes = [1, 192], strides = [1, 1]} : vector<4x192xf32> to vector<1x192xf32>
    %7 = vector.extract_strided_slice %4 {offsets = [2, 0], sizes = [1, 192], strides = [1, 1]} : vector<4x192xf32> to vector<1x192xf32>
    %8 = vector.extract_strided_slice %4 {offsets = [3, 0], sizes = [1, 192], strides = [1, 1]} : vector<4x192xf32> to vector<1x192xf32>
    %c0_6 = arith.constant 0 : index
    %c0_7 = arith.constant 0 : index
    %9 = vector.load %arg5[%c0_6, %c0_7] : memref<224x192xf32, #tpu.memory_space<vmem>>, vector<32x192xf32>
    %c32 = arith.constant 32 : index
    %c0_8 = arith.constant 0 : index
    %10 = vector.load %arg5[%c32, %c0_8] : memref<224x192xf32, #tpu.memory_space<vmem>>, vector<64x192xf32>
    %c96 = arith.constant 96 : index
    %c0_9 = arith.constant 0 : index
    %11 = vector.load %arg5[%c96, %c0_9] : memref<224x192xf32, #tpu.memory_space<vmem>>, vector<64x192xf32>
    %c160 = arith.constant 160 : index
    %c0_10 = arith.constant 0 : index
    %12 = vector.load %arg5[%c160, %c0_10] : memref<224x192xf32, #tpu.memory_space<vmem>>, vector<64x192xf32>
    %c0_11 = arith.constant 0 : index
    %c0_12 = arith.constant 0 : index
    %13 = vector.load %arg6[%c0_11, %c0_12] : memref<4x192xf32, #tpu.memory_space<vmem>>, vector<4x192xf32>
    %14 = vector.extract_strided_slice %13 {offsets = [0, 0], sizes = [1, 192], strides = [1, 1]} : vector<4x192xf32> to vector<1x192xf32>
    %15 = vector.extract_strided_slice %13 {offsets = [1, 0], sizes = [1, 192], strides = [1, 1]} : vector<4x192xf32> to vector<1x192xf32>
    %16 = vector.extract_strided_slice %13 {offsets = [2, 0], sizes = [1, 192], strides = [1, 1]} : vector<4x192xf32> to vector<1x192xf32>
    %17 = vector.extract_strided_slice %13 {offsets = [3, 0], sizes = [1, 192], strides = [1, 1]} : vector<4x192xf32> to vector<1x192xf32>
    %c0_13 = arith.constant 0 : index
    %c0_14 = arith.constant 0 : index
    %18 = vector.load %arg7[%c0_13, %c0_14] : memref<65x32xf32, #tpu.memory_space<vmem>>, vector<64x32xf32>
    %c64 = arith.constant 64 : index
    %c0_15 = arith.constant 0 : index
    %19 = vector.load %arg7[%c64, %c0_15] : memref<65x32xf32, #tpu.memory_space<vmem>>, vector<1x32xf32>
    %c0_16 = arith.constant 0 : index
    %c0_17 = arith.constant 0 : index
    %c0_18 = arith.constant 0 : index
    %20 = vector.load %arg1[%c0_16, %c0_17, %c0_18] : memref<2x8x32xf32, #tpu.memory_space<vmem>>, vector<2x8x32xf32>
    %c0_19 = arith.constant 0 : index
    %c0_20 = arith.constant 0 : index
    %c0_21 = arith.constant 0 : index
    %21 = vector.load %arg2[%c0_19, %c0_20, %c0_21] : memref<2x8x32xf32, #tpu.memory_space<vmem>>, vector<2x8x32xf32>
    %22 = vector.extract_strided_slice %20 {offsets = [0, 0, 0], sizes = [2, 1, 32], strides = [1, 1, 1]} : vector<2x8x32xf32> to vector<2x1x32xf32>
    %23 = vector.shape_cast %22 : vector<2x1x32xf32> to vector<2x32xf32>
    %24 = vector.extract_strided_slice %21 {offsets = [0, 0, 0], sizes = [2, 1, 32], strides = [1, 1, 1]} : vector<2x8x32xf32> to vector<2x1x32xf32>
    %25 = vector.shape_cast %24 : vector<2x1x32xf32> to vector<2x32xf32>
    %26 = vector.extract_strided_slice %20 {offsets = [0, 7, 0], sizes = [2, 1, 32], strides = [1, 1, 1]} : vector<2x8x32xf32> to vector<2x1x32xf32>
    %27 = vector.shape_cast %26 : vector<2x1x32xf32> to vector<2x32xf32>
    %28 = vector.extract_strided_slice %21 {offsets = [0, 7, 0], sizes = [2, 1, 32], strides = [1, 1, 1]} : vector<2x8x32xf32> to vector<2x1x32xf32>
    %29 = vector.shape_cast %28 : vector<2x1x32xf32> to vector<2x32xf32>
    %30 = tpu.concatenate %23, %25, %27, %29 in 1 : vector<2x32xf32>, vector<2x32xf32>, vector<2x32xf32>, vector<2x32xf32> -> vector<2x128xf32>
    %31 = vector.extract_strided_slice %20 {offsets = [0, 1, 0], sizes = [2, 1, 32], strides = [1, 1, 1]} : vector<2x8x32xf32> to vector<2x1x32xf32>
    %32 = vector.shape_cast %31 : vector<2x1x32xf32> to vector<2x32xf32>
    %33 = vector.extract_strided_slice %21 {offsets = [0, 1, 0], sizes = [2, 1, 32], strides = [1, 1, 1]} : vector<2x8x32xf32> to vector<2x1x32xf32>
    %34 = vector.shape_cast %33 : vector<2x1x32xf32> to vector<2x32xf32>
    %35 = vector.extract_strided_slice %20 {offsets = [0, 6, 0], sizes = [2, 1, 32], strides = [1, 1, 1]} : vector<2x8x32xf32> to vector<2x1x32xf32>
    %36 = vector.shape_cast %35 : vector<2x1x32xf32> to vector<2x32xf32>
    %37 = vector.extract_strided_slice %21 {offsets = [0, 6, 0], sizes = [2, 1, 32], strides = [1, 1, 1]} : vector<2x8x32xf32> to vector<2x1x32xf32>
    %38 = vector.shape_cast %37 : vector<2x1x32xf32> to vector<2x32xf32>
    %39 = tpu.concatenate %32, %34, %36, %38 in 1 : vector<2x32xf32>, vector<2x32xf32>, vector<2x32xf32>, vector<2x32xf32> -> vector<2x128xf32>
    %40 = vector.extract_strided_slice %20 {offsets = [0, 2, 0], sizes = [2, 1, 32], strides = [1, 1, 1]} : vector<2x8x32xf32> to vector<2x1x32xf32>
    %41 = vector.shape_cast %40 : vector<2x1x32xf32> to vector<2x32xf32>
    %42 = vector.extract_strided_slice %21 {offsets = [0, 2, 0], sizes = [2, 1, 32], strides = [1, 1, 1]} : vector<2x8x32xf32> to vector<2x1x32xf32>
    %43 = vector.shape_cast %42 : vector<2x1x32xf32> to vector<2x32xf32>
    %44 = vector.extract_strided_slice %20 {offsets = [0, 5, 0], sizes = [2, 1, 32], strides = [1, 1, 1]} : vector<2x8x32xf32> to vector<2x1x32xf32>
    %45 = vector.shape_cast %44 : vector<2x1x32xf32> to vector<2x32xf32>
    %46 = vector.extract_strided_slice %21 {offsets = [0, 5, 0], sizes = [2, 1, 32], strides = [1, 1, 1]} : vector<2x8x32xf32> to vector<2x1x32xf32>
    %47 = vector.shape_cast %46 : vector<2x1x32xf32> to vector<2x32xf32>
    %48 = tpu.concatenate %41, %43, %45, %47 in 1 : vector<2x32xf32>, vector<2x32xf32>, vector<2x32xf32>, vector<2x32xf32> -> vector<2x128xf32>
    %49 = vector.extract_strided_slice %20 {offsets = [0, 3, 0], sizes = [2, 1, 32], strides = [1, 1, 1]} : vector<2x8x32xf32> to vector<2x1x32xf32>
    %50 = vector.shape_cast %49 : vector<2x1x32xf32> to vector<2x32xf32>
    %51 = vector.extract_strided_slice %21 {offsets = [0, 3, 0], sizes = [2, 1, 32], strides = [1, 1, 1]} : vector<2x8x32xf32> to vector<2x1x32xf32>
    %52 = vector.shape_cast %51 : vector<2x1x32xf32> to vector<2x32xf32>
    %53 = vector.extract_strided_slice %20 {offsets = [0, 4, 0], sizes = [2, 1, 32], strides = [1, 1, 1]} : vector<2x8x32xf32> to vector<2x1x32xf32>
    %54 = vector.shape_cast %53 : vector<2x1x32xf32> to vector<2x32xf32>
    %55 = vector.extract_strided_slice %21 {offsets = [0, 4, 0], sizes = [2, 1, 32], strides = [1, 1, 1]} : vector<2x8x32xf32> to vector<2x1x32xf32>
    %56 = vector.shape_cast %55 : vector<2x1x32xf32> to vector<2x32xf32>
    %57 = tpu.concatenate %50, %52, %54, %56 in 1 : vector<2x32xf32>, vector<2x32xf32>, vector<2x32xf32>, vector<2x32xf32> -> vector<2x128xf32>
    %58 = vector.extract_strided_slice %20 {offsets = [0, 4, 0], sizes = [2, 1, 32], strides = [1, 1, 1]} : vector<2x8x32xf32> to vector<2x1x32xf32>
    %59 = vector.shape_cast %58 : vector<2x1x32xf32> to vector<2x32xf32>
    %60 = vector.extract_strided_slice %21 {offsets = [0, 4, 0], sizes = [2, 1, 32], strides = [1, 1, 1]} : vector<2x8x32xf32> to vector<2x1x32xf32>
    %61 = vector.shape_cast %60 : vector<2x1x32xf32> to vector<2x32xf32>
    %62 = vector.extract_strided_slice %20 {offsets = [0, 3, 0], sizes = [2, 1, 32], strides = [1, 1, 1]} : vector<2x8x32xf32> to vector<2x1x32xf32>
    %63 = vector.shape_cast %62 : vector<2x1x32xf32> to vector<2x32xf32>
    %64 = vector.extract_strided_slice %21 {offsets = [0, 3, 0], sizes = [2, 1, 32], strides = [1, 1, 1]} : vector<2x8x32xf32> to vector<2x1x32xf32>
    %65 = vector.shape_cast %64 : vector<2x1x32xf32> to vector<2x32xf32>
    %66 = tpu.concatenate %59, %61, %63, %65 in 1 : vector<2x32xf32>, vector<2x32xf32>, vector<2x32xf32>, vector<2x32xf32> -> vector<2x128xf32>
    %67 = vector.extract_strided_slice %20 {offsets = [0, 5, 0], sizes = [2, 1, 32], strides = [1, 1, 1]} : vector<2x8x32xf32> to vector<2x1x32xf32>
    %68 = vector.shape_cast %67 : vector<2x1x32xf32> to vector<2x32xf32>
    %69 = vector.extract_strided_slice %21 {offsets = [0, 5, 0], sizes = [2, 1, 32], strides = [1, 1, 1]} : vector<2x8x32xf32> to vector<2x1x32xf32>
    %70 = vector.shape_cast %69 : vector<2x1x32xf32> to vector<2x32xf32>
    %71 = vector.extract_strided_slice %20 {offsets = [0, 2, 0], sizes = [2, 1, 32], strides = [1, 1, 1]} : vector<2x8x32xf32> to vector<2x1x32xf32>
    %72 = vector.shape_cast %71 : vector<2x1x32xf32> to vector<2x32xf32>
    %73 = vector.extract_strided_slice %21 {offsets = [0, 2, 0], sizes = [2, 1, 32], strides = [1, 1, 1]} : vector<2x8x32xf32> to vector<2x1x32xf32>
    %74 = vector.shape_cast %73 : vector<2x1x32xf32> to vector<2x32xf32>
    %75 = tpu.concatenate %68, %70, %72, %74 in 1 : vector<2x32xf32>, vector<2x32xf32>, vector<2x32xf32>, vector<2x32xf32> -> vector<2x128xf32>
    %76 = vector.extract_strided_slice %20 {offsets = [0, 6, 0], sizes = [2, 1, 32], strides = [1, 1, 1]} : vector<2x8x32xf32> to vector<2x1x32xf32>
    %77 = vector.shape_cast %76 : vector<2x1x32xf32> to vector<2x32xf32>
    %78 = vector.extract_strided_slice %21 {offsets = [0, 6, 0], sizes = [2, 1, 32], strides = [1, 1, 1]} : vector<2x8x32xf32> to vector<2x1x32xf32>
    %79 = vector.shape_cast %78 : vector<2x1x32xf32> to vector<2x32xf32>
    %80 = vector.extract_strided_slice %20 {offsets = [0, 1, 0], sizes = [2, 1, 32], strides = [1, 1, 1]} : vector<2x8x32xf32> to vector<2x1x32xf32>
    %81 = vector.shape_cast %80 : vector<2x1x32xf32> to vector<2x32xf32>
    %82 = vector.extract_strided_slice %21 {offsets = [0, 1, 0], sizes = [2, 1, 32], strides = [1, 1, 1]} : vector<2x8x32xf32> to vector<2x1x32xf32>
    %83 = vector.shape_cast %82 : vector<2x1x32xf32> to vector<2x32xf32>
    %84 = tpu.concatenate %77, %79, %81, %83 in 1 : vector<2x32xf32>, vector<2x32xf32>, vector<2x32xf32>, vector<2x32xf32> -> vector<2x128xf32>
    %85 = vector.extract_strided_slice %20 {offsets = [0, 7, 0], sizes = [2, 1, 32], strides = [1, 1, 1]} : vector<2x8x32xf32> to vector<2x1x32xf32>
    %86 = vector.shape_cast %85 : vector<2x1x32xf32> to vector<2x32xf32>
    %87 = vector.extract_strided_slice %21 {offsets = [0, 7, 0], sizes = [2, 1, 32], strides = [1, 1, 1]} : vector<2x8x32xf32> to vector<2x1x32xf32>
    %88 = vector.shape_cast %87 : vector<2x1x32xf32> to vector<2x32xf32>
    %89 = vector.extract_strided_slice %20 {offsets = [0, 0, 0], sizes = [2, 1, 32], strides = [1, 1, 1]} : vector<2x8x32xf32> to vector<2x1x32xf32>
    %90 = vector.shape_cast %89 : vector<2x1x32xf32> to vector<2x32xf32>
    %91 = vector.extract_strided_slice %21 {offsets = [0, 0, 0], sizes = [2, 1, 32], strides = [1, 1, 1]} : vector<2x8x32xf32> to vector<2x1x32xf32>
    %92 = vector.shape_cast %91 : vector<2x1x32xf32> to vector<2x32xf32>
    %93 = tpu.concatenate %86, %88, %90, %92 in 1 : vector<2x32xf32>, vector<2x32xf32>, vector<2x32xf32>, vector<2x32xf32> -> vector<2x128xf32>
    %94 = tpu.concatenate %30, %39, %48, %57, %66, %75, %84, %93 in 0 : vector<2x128xf32>, vector<2x128xf32>, vector<2x128xf32>, vector<2x128xf32>, vector<2x128xf32>, vector<2x128xf32>, vector<2x128xf32>, vector<2x128xf32> -> vector<16x128xf32>
    %cst = arith.constant dense<0.000000e+00> : vector<16x192xf32>
    %95 = tpu.matmul %94, %0, %cst {dimension_numbers = #tpu.dot_dimension_numbers<[1], [0], [0], [1], [0, 0, 1, 1], [], []>} : vector<16x128xf32>, vector<128x192xf32>, vector<16x192xf32> -> vector<16x192xf32>
    %96 = vector.broadcast %5 : vector<1x192xf32> to vector<16x192xf32>
    %97 = arith.addf %95, %96 : vector<16x192xf32>
    %cst_22 = arith.constant 0.000000e+00 : f32
    %98 = vector.broadcast %cst_22 : f32 to vector<2x64xf32>
    %99 = vector.extract_strided_slice %97 {offsets = [0, 0], sizes = [2, 192], strides = [1, 1]} : vector<16x192xf32> to vector<2x192xf32>
    %cst_23 = arith.constant dense<0.000000e+00> : vector<2x192xf32>
    %100 = tpu.matmul %98, %1, %cst_23 {dimension_numbers = #tpu.dot_dimension_numbers<[1], [0], [0], [1], [0, 0, 1, 1], [], []>} : vector<2x64xf32>, vector<64x192xf32>, vector<2x192xf32> -> vector<2x192xf32>
    %101 = vector.broadcast %6 : vector<1x192xf32> to vector<2x192xf32>
    %102 = arith.addf %100, %101 : vector<2x192xf32>
    %103 = vector.extract_strided_slice %99 {offsets = [0, 0], sizes = [2, 64], strides = [1, 1]} : vector<2x192xf32> to vector<2x64xf32>
    %104 = vector.extract_strided_slice %102 {offsets = [0, 0], sizes = [2, 64], strides = [1, 1]} : vector<2x192xf32> to vector<2x64xf32>
    %105 = arith.addf %103, %104 : vector<2x64xf32>
    %106 = arith.negf %105 : vector<2x64xf32>
    %107 = math.exp %106 : vector<2x64xf32>
    %cst_24 = arith.constant 1.000000e+00 : f32
    %108 = vector.broadcast %cst_24 : f32 to vector<2x64xf32>
    %109 = arith.addf %108, %107 : vector<2x64xf32>
    %110 = arith.divf %108, %109 : vector<2x64xf32>
    %111 = vector.extract_strided_slice %99 {offsets = [0, 64], sizes = [2, 64], strides = [1, 1]} : vector<2x192xf32> to vector<2x64xf32>
    %112 = vector.extract_strided_slice %102 {offsets = [0, 64], sizes = [2, 64], strides = [1, 1]} : vector<2x192xf32> to vector<2x64xf32>
    %113 = arith.addf %111, %112 : vector<2x64xf32>
    %114 = arith.negf %113 : vector<2x64xf32>
    %115 = math.exp %114 : vector<2x64xf32>
    %cst_25 = arith.constant 1.000000e+00 : f32
    %116 = vector.broadcast %cst_25 : f32 to vector<2x64xf32>
    %117 = arith.addf %116, %115 : vector<2x64xf32>
    %118 = arith.divf %116, %117 : vector<2x64xf32>
    %119 = vector.extract_strided_slice %99 {offsets = [0, 128], sizes = [2, 64], strides = [1, 1]} : vector<2x192xf32> to vector<2x64xf32>
    %120 = vector.extract_strided_slice %102 {offsets = [0, 128], sizes = [2, 64], strides = [1, 1]} : vector<2x192xf32> to vector<2x64xf32>
    %121 = arith.mulf %110, %120 : vector<2x64xf32>
    %122 = arith.addf %119, %121 : vector<2x64xf32>
    %123 = math.tanh %122 : vector<2x64xf32>
    %cst_26 = arith.constant 1.000000e+00 : f32
    %124 = vector.broadcast %cst_26 : f32 to vector<2x64xf32>
    %125 = arith.subf %124, %118 : vector<2x64xf32>
    %126 = arith.mulf %125, %123 : vector<2x64xf32>
    %127 = arith.mulf %118, %98 : vector<2x64xf32>
    %128 = arith.addf %126, %127 : vector<2x64xf32>
    %129 = vector.extract_strided_slice %97 {offsets = [2, 0], sizes = [2, 192], strides = [1, 1]} : vector<16x192xf32> to vector<2x192xf32>
    %cst_27 = arith.constant dense<0.000000e+00> : vector<2x192xf32>
    %130 = tpu.matmul %128, %1, %cst_27 {dimension_numbers = #tpu.dot_dimension_numbers<[1], [0], [0], [1], [0, 0, 1, 1], [], []>} : vector<2x64xf32>, vector<64x192xf32>, vector<2x192xf32> -> vector<2x192xf32>
    %131 = vector.broadcast %6 : vector<1x192xf32> to vector<2x192xf32>
    %132 = arith.addf %130, %131 : vector<2x192xf32>
    %133 = vector.extract_strided_slice %129 {offsets = [0, 0], sizes = [2, 64], strides = [1, 1]} : vector<2x192xf32> to vector<2x64xf32>
    %134 = vector.extract_strided_slice %132 {offsets = [0, 0], sizes = [2, 64], strides = [1, 1]} : vector<2x192xf32> to vector<2x64xf32>
    %135 = arith.addf %133, %134 : vector<2x64xf32>
    %136 = arith.negf %135 : vector<2x64xf32>
    %137 = math.exp %136 : vector<2x64xf32>
    %cst_28 = arith.constant 1.000000e+00 : f32
    %138 = vector.broadcast %cst_28 : f32 to vector<2x64xf32>
    %139 = arith.addf %138, %137 : vector<2x64xf32>
    %140 = arith.divf %138, %139 : vector<2x64xf32>
    %141 = vector.extract_strided_slice %129 {offsets = [0, 64], sizes = [2, 64], strides = [1, 1]} : vector<2x192xf32> to vector<2x64xf32>
    %142 = vector.extract_strided_slice %132 {offsets = [0, 64], sizes = [2, 64], strides = [1, 1]} : vector<2x192xf32> to vector<2x64xf32>
    %143 = arith.addf %141, %142 : vector<2x64xf32>
    %144 = arith.negf %143 : vector<2x64xf32>
    %145 = math.exp %144 : vector<2x64xf32>
    %cst_29 = arith.constant 1.000000e+00 : f32
    %146 = vector.broadcast %cst_29 : f32 to vector<2x64xf32>
    %147 = arith.addf %146, %145 : vector<2x64xf32>
    %148 = arith.divf %146, %147 : vector<2x64xf32>
    %149 = vector.extract_strided_slice %129 {offsets = [0, 128], sizes = [2, 64], strides = [1, 1]} : vector<2x192xf32> to vector<2x64xf32>
    %150 = vector.extract_strided_slice %132 {offsets = [0, 128], sizes = [2, 64], strides = [1, 1]} : vector<2x192xf32> to vector<2x64xf32>
    %151 = arith.mulf %140, %150 : vector<2x64xf32>
    %152 = arith.addf %149, %151 : vector<2x64xf32>
    %153 = math.tanh %152 : vector<2x64xf32>
    %cst_30 = arith.constant 1.000000e+00 : f32
    %154 = vector.broadcast %cst_30 : f32 to vector<2x64xf32>
    %155 = arith.subf %154, %148 : vector<2x64xf32>
    %156 = arith.mulf %155, %153 : vector<2x64xf32>
    %157 = arith.mulf %148, %128 : vector<2x64xf32>
    %158 = arith.addf %156, %157 : vector<2x64xf32>
    %159 = vector.extract_strided_slice %97 {offsets = [4, 0], sizes = [2, 192], strides = [1, 1]} : vector<16x192xf32> to vector<2x192xf32>
    %cst_31 = arith.constant dense<0.000000e+00> : vector<2x192xf32>
    %160 = tpu.matmul %158, %1, %cst_31 {dimension_numbers = #tpu.dot_dimension_numbers<[1], [0], [0], [1], [0, 0, 1, 1], [], []>} : vector<2x64xf32>, vector<64x192xf32>, vector<2x192xf32> -> vector<2x192xf32>
    %161 = vector.broadcast %6 : vector<1x192xf32> to vector<2x192xf32>
    %162 = arith.addf %160, %161 : vector<2x192xf32>
    %163 = vector.extract_strided_slice %159 {offsets = [0, 0], sizes = [2, 64], strides = [1, 1]} : vector<2x192xf32> to vector<2x64xf32>
    %164 = vector.extract_strided_slice %162 {offsets = [0, 0], sizes = [2, 64], strides = [1, 1]} : vector<2x192xf32> to vector<2x64xf32>
    %165 = arith.addf %163, %164 : vector<2x64xf32>
    %166 = arith.negf %165 : vector<2x64xf32>
    %167 = math.exp %166 : vector<2x64xf32>
    %cst_32 = arith.constant 1.000000e+00 : f32
    %168 = vector.broadcast %cst_32 : f32 to vector<2x64xf32>
    %169 = arith.addf %168, %167 : vector<2x64xf32>
    %170 = arith.divf %168, %169 : vector<2x64xf32>
    %171 = vector.extract_strided_slice %159 {offsets = [0, 64], sizes = [2, 64], strides = [1, 1]} : vector<2x192xf32> to vector<2x64xf32>
    %172 = vector.extract_strided_slice %162 {offsets = [0, 64], sizes = [2, 64], strides = [1, 1]} : vector<2x192xf32> to vector<2x64xf32>
    %173 = arith.addf %171, %172 : vector<2x64xf32>
    %174 = arith.negf %173 : vector<2x64xf32>
    %175 = math.exp %174 : vector<2x64xf32>
    %cst_33 = arith.constant 1.000000e+00 : f32
    %176 = vector.broadcast %cst_33 : f32 to vector<2x64xf32>
    %177 = arith.addf %176, %175 : vector<2x64xf32>
    %178 = arith.divf %176, %177 : vector<2x64xf32>
    %179 = vector.extract_strided_slice %159 {offsets = [0, 128], sizes = [2, 64], strides = [1, 1]} : vector<2x192xf32> to vector<2x64xf32>
    %180 = vector.extract_strided_slice %162 {offsets = [0, 128], sizes = [2, 64], strides = [1, 1]} : vector<2x192xf32> to vector<2x64xf32>
    %181 = arith.mulf %170, %180 : vector<2x64xf32>
    %182 = arith.addf %179, %181 : vector<2x64xf32>
    %183 = math.tanh %182 : vector<2x64xf32>
    %cst_34 = arith.constant 1.000000e+00 : f32
    %184 = vector.broadcast %cst_34 : f32 to vector<2x64xf32>
    %185 = arith.subf %184, %178 : vector<2x64xf32>
    %186 = arith.mulf %185, %183 : vector<2x64xf32>
    %187 = arith.mulf %178, %158 : vector<2x64xf32>
    %188 = arith.addf %186, %187 : vector<2x64xf32>
    %189 = vector.extract_strided_slice %97 {offsets = [6, 0], sizes = [2, 192], strides = [1, 1]} : vector<16x192xf32> to vector<2x192xf32>
    %cst_35 = arith.constant dense<0.000000e+00> : vector<2x192xf32>
    %190 = tpu.matmul %188, %1, %cst_35 {dimension_numbers = #tpu.dot_dimension_numbers<[1], [0], [0], [1], [0, 0, 1, 1], [], []>} : vector<2x64xf32>, vector<64x192xf32>, vector<2x192xf32> -> vector<2x192xf32>
    %191 = vector.broadcast %6 : vector<1x192xf32> to vector<2x192xf32>
    %192 = arith.addf %190, %191 : vector<2x192xf32>
    %193 = vector.extract_strided_slice %189 {offsets = [0, 0], sizes = [2, 64], strides = [1, 1]} : vector<2x192xf32> to vector<2x64xf32>
    %194 = vector.extract_strided_slice %192 {offsets = [0, 0], sizes = [2, 64], strides = [1, 1]} : vector<2x192xf32> to vector<2x64xf32>
    %195 = arith.addf %193, %194 : vector<2x64xf32>
    %196 = arith.negf %195 : vector<2x64xf32>
    %197 = math.exp %196 : vector<2x64xf32>
    %cst_36 = arith.constant 1.000000e+00 : f32
    %198 = vector.broadcast %cst_36 : f32 to vector<2x64xf32>
    %199 = arith.addf %198, %197 : vector<2x64xf32>
    %200 = arith.divf %198, %199 : vector<2x64xf32>
    %201 = vector.extract_strided_slice %189 {offsets = [0, 64], sizes = [2, 64], strides = [1, 1]} : vector<2x192xf32> to vector<2x64xf32>
    %202 = vector.extract_strided_slice %192 {offsets = [0, 64], sizes = [2, 64], strides = [1, 1]} : vector<2x192xf32> to vector<2x64xf32>
    %203 = arith.addf %201, %202 : vector<2x64xf32>
    %204 = arith.negf %203 : vector<2x64xf32>
    %205 = math.exp %204 : vector<2x64xf32>
    %cst_37 = arith.constant 1.000000e+00 : f32
    %206 = vector.broadcast %cst_37 : f32 to vector<2x64xf32>
    %207 = arith.addf %206, %205 : vector<2x64xf32>
    %208 = arith.divf %206, %207 : vector<2x64xf32>
    %209 = vector.extract_strided_slice %189 {offsets = [0, 128], sizes = [2, 64], strides = [1, 1]} : vector<2x192xf32> to vector<2x64xf32>
    %210 = vector.extract_strided_slice %192 {offsets = [0, 128], sizes = [2, 64], strides = [1, 1]} : vector<2x192xf32> to vector<2x64xf32>
    %211 = arith.mulf %200, %210 : vector<2x64xf32>
    %212 = arith.addf %209, %211 : vector<2x64xf32>
    %213 = math.tanh %212 : vector<2x64xf32>
    %cst_38 = arith.constant 1.000000e+00 : f32
    %214 = vector.broadcast %cst_38 : f32 to vector<2x64xf32>
    %215 = arith.subf %214, %208 : vector<2x64xf32>
    %216 = arith.mulf %215, %213 : vector<2x64xf32>
    %217 = arith.mulf %208, %188 : vector<2x64xf32>
    %218 = arith.addf %216, %217 : vector<2x64xf32>
    %219 = vector.extract_strided_slice %97 {offsets = [8, 0], sizes = [2, 192], strides = [1, 1]} : vector<16x192xf32> to vector<2x192xf32>
    %cst_39 = arith.constant dense<0.000000e+00> : vector<2x192xf32>
    %220 = tpu.matmul %218, %1, %cst_39 {dimension_numbers = #tpu.dot_dimension_numbers<[1], [0], [0], [1], [0, 0, 1, 1], [], []>} : vector<2x64xf32>, vector<64x192xf32>, vector<2x192xf32> -> vector<2x192xf32>
    %221 = vector.broadcast %6 : vector<1x192xf32> to vector<2x192xf32>
    %222 = arith.addf %220, %221 : vector<2x192xf32>
    %223 = vector.extract_strided_slice %219 {offsets = [0, 0], sizes = [2, 64], strides = [1, 1]} : vector<2x192xf32> to vector<2x64xf32>
    %224 = vector.extract_strided_slice %222 {offsets = [0, 0], sizes = [2, 64], strides = [1, 1]} : vector<2x192xf32> to vector<2x64xf32>
    %225 = arith.addf %223, %224 : vector<2x64xf32>
    %226 = arith.negf %225 : vector<2x64xf32>
    %227 = math.exp %226 : vector<2x64xf32>
    %cst_40 = arith.constant 1.000000e+00 : f32
    %228 = vector.broadcast %cst_40 : f32 to vector<2x64xf32>
    %229 = arith.addf %228, %227 : vector<2x64xf32>
    %230 = arith.divf %228, %229 : vector<2x64xf32>
    %231 = vector.extract_strided_slice %219 {offsets = [0, 64], sizes = [2, 64], strides = [1, 1]} : vector<2x192xf32> to vector<2x64xf32>
    %232 = vector.extract_strided_slice %222 {offsets = [0, 64], sizes = [2, 64], strides = [1, 1]} : vector<2x192xf32> to vector<2x64xf32>
    %233 = arith.addf %231, %232 : vector<2x64xf32>
    %234 = arith.negf %233 : vector<2x64xf32>
    %235 = math.exp %234 : vector<2x64xf32>
    %cst_41 = arith.constant 1.000000e+00 : f32
    %236 = vector.broadcast %cst_41 : f32 to vector<2x64xf32>
    %237 = arith.addf %236, %235 : vector<2x64xf32>
    %238 = arith.divf %236, %237 : vector<2x64xf32>
    %239 = vector.extract_strided_slice %219 {offsets = [0, 128], sizes = [2, 64], strides = [1, 1]} : vector<2x192xf32> to vector<2x64xf32>
    %240 = vector.extract_strided_slice %222 {offsets = [0, 128], sizes = [2, 64], strides = [1, 1]} : vector<2x192xf32> to vector<2x64xf32>
    %241 = arith.mulf %230, %240 : vector<2x64xf32>
    %242 = arith.addf %239, %241 : vector<2x64xf32>
    %243 = math.tanh %242 : vector<2x64xf32>
    %cst_42 = arith.constant 1.000000e+00 : f32
    %244 = vector.broadcast %cst_42 : f32 to vector<2x64xf32>
    %245 = arith.subf %244, %238 : vector<2x64xf32>
    %246 = arith.mulf %245, %243 : vector<2x64xf32>
    %247 = arith.mulf %238, %218 : vector<2x64xf32>
    %248 = arith.addf %246, %247 : vector<2x64xf32>
    %249 = vector.extract_strided_slice %97 {offsets = [10, 0], sizes = [2, 192], strides = [1, 1]} : vector<16x192xf32> to vector<2x192xf32>
    %cst_43 = arith.constant dense<0.000000e+00> : vector<2x192xf32>
    %250 = tpu.matmul %248, %1, %cst_43 {dimension_numbers = #tpu.dot_dimension_numbers<[1], [0], [0], [1], [0, 0, 1, 1], [], []>} : vector<2x64xf32>, vector<64x192xf32>, vector<2x192xf32> -> vector<2x192xf32>
    %251 = vector.broadcast %6 : vector<1x192xf32> to vector<2x192xf32>
    %252 = arith.addf %250, %251 : vector<2x192xf32>
    %253 = vector.extract_strided_slice %249 {offsets = [0, 0], sizes = [2, 64], strides = [1, 1]} : vector<2x192xf32> to vector<2x64xf32>
    %254 = vector.extract_strided_slice %252 {offsets = [0, 0], sizes = [2, 64], strides = [1, 1]} : vector<2x192xf32> to vector<2x64xf32>
    %255 = arith.addf %253, %254 : vector<2x64xf32>
    %256 = arith.negf %255 : vector<2x64xf32>
    %257 = math.exp %256 : vector<2x64xf32>
    %cst_44 = arith.constant 1.000000e+00 : f32
    %258 = vector.broadcast %cst_44 : f32 to vector<2x64xf32>
    %259 = arith.addf %258, %257 : vector<2x64xf32>
    %260 = arith.divf %258, %259 : vector<2x64xf32>
    %261 = vector.extract_strided_slice %249 {offsets = [0, 64], sizes = [2, 64], strides = [1, 1]} : vector<2x192xf32> to vector<2x64xf32>
    %262 = vector.extract_strided_slice %252 {offsets = [0, 64], sizes = [2, 64], strides = [1, 1]} : vector<2x192xf32> to vector<2x64xf32>
    %263 = arith.addf %261, %262 : vector<2x64xf32>
    %264 = arith.negf %263 : vector<2x64xf32>
    %265 = math.exp %264 : vector<2x64xf32>
    %cst_45 = arith.constant 1.000000e+00 : f32
    %266 = vector.broadcast %cst_45 : f32 to vector<2x64xf32>
    %267 = arith.addf %266, %265 : vector<2x64xf32>
    %268 = arith.divf %266, %267 : vector<2x64xf32>
    %269 = vector.extract_strided_slice %249 {offsets = [0, 128], sizes = [2, 64], strides = [1, 1]} : vector<2x192xf32> to vector<2x64xf32>
    %270 = vector.extract_strided_slice %252 {offsets = [0, 128], sizes = [2, 64], strides = [1, 1]} : vector<2x192xf32> to vector<2x64xf32>
    %271 = arith.mulf %260, %270 : vector<2x64xf32>
    %272 = arith.addf %269, %271 : vector<2x64xf32>
    %273 = math.tanh %272 : vector<2x64xf32>
    %cst_46 = arith.constant 1.000000e+00 : f32
    %274 = vector.broadcast %cst_46 : f32 to vector<2x64xf32>
    %275 = arith.subf %274, %268 : vector<2x64xf32>
    %276 = arith.mulf %275, %273 : vector<2x64xf32>
    %277 = arith.mulf %268, %248 : vector<2x64xf32>
    %278 = arith.addf %276, %277 : vector<2x64xf32>
    %279 = vector.extract_strided_slice %97 {offsets = [12, 0], sizes = [2, 192], strides = [1, 1]} : vector<16x192xf32> to vector<2x192xf32>
    %cst_47 = arith.constant dense<0.000000e+00> : vector<2x192xf32>
    %280 = tpu.matmul %278, %1, %cst_47 {dimension_numbers = #tpu.dot_dimension_numbers<[1], [0], [0], [1], [0, 0, 1, 1], [], []>} : vector<2x64xf32>, vector<64x192xf32>, vector<2x192xf32> -> vector<2x192xf32>
    %281 = vector.broadcast %6 : vector<1x192xf32> to vector<2x192xf32>
    %282 = arith.addf %280, %281 : vector<2x192xf32>
    %283 = vector.extract_strided_slice %279 {offsets = [0, 0], sizes = [2, 64], strides = [1, 1]} : vector<2x192xf32> to vector<2x64xf32>
    %284 = vector.extract_strided_slice %282 {offsets = [0, 0], sizes = [2, 64], strides = [1, 1]} : vector<2x192xf32> to vector<2x64xf32>
    %285 = arith.addf %283, %284 : vector<2x64xf32>
    %286 = arith.negf %285 : vector<2x64xf32>
    %287 = math.exp %286 : vector<2x64xf32>
    %cst_48 = arith.constant 1.000000e+00 : f32
    %288 = vector.broadcast %cst_48 : f32 to vector<2x64xf32>
    %289 = arith.addf %288, %287 : vector<2x64xf32>
    %290 = arith.divf %288, %289 : vector<2x64xf32>
    %291 = vector.extract_strided_slice %279 {offsets = [0, 64], sizes = [2, 64], strides = [1, 1]} : vector<2x192xf32> to vector<2x64xf32>
    %292 = vector.extract_strided_slice %282 {offsets = [0, 64], sizes = [2, 64], strides = [1, 1]} : vector<2x192xf32> to vector<2x64xf32>
    %293 = arith.addf %291, %292 : vector<2x64xf32>
    %294 = arith.negf %293 : vector<2x64xf32>
    %295 = math.exp %294 : vector<2x64xf32>
    %cst_49 = arith.constant 1.000000e+00 : f32
    %296 = vector.broadcast %cst_49 : f32 to vector<2x64xf32>
    %297 = arith.addf %296, %295 : vector<2x64xf32>
    %298 = arith.divf %296, %297 : vector<2x64xf32>
    %299 = vector.extract_strided_slice %279 {offsets = [0, 128], sizes = [2, 64], strides = [1, 1]} : vector<2x192xf32> to vector<2x64xf32>
    %300 = vector.extract_strided_slice %282 {offsets = [0, 128], sizes = [2, 64], strides = [1, 1]} : vector<2x192xf32> to vector<2x64xf32>
    %301 = arith.mulf %290, %300 : vector<2x64xf32>
    %302 = arith.addf %299, %301 : vector<2x64xf32>
    %303 = math.tanh %302 : vector<2x64xf32>
    %cst_50 = arith.constant 1.000000e+00 : f32
    %304 = vector.broadcast %cst_50 : f32 to vector<2x64xf32>
    %305 = arith.subf %304, %298 : vector<2x64xf32>
    %306 = arith.mulf %305, %303 : vector<2x64xf32>
    %307 = arith.mulf %298, %278 : vector<2x64xf32>
    %308 = arith.addf %306, %307 : vector<2x64xf32>
    %309 = vector.extract_strided_slice %97 {offsets = [14, 0], sizes = [2, 192], strides = [1, 1]} : vector<16x192xf32> to vector<2x192xf32>
    %cst_51 = arith.constant dense<0.000000e+00> : vector<2x192xf32>
    %310 = tpu.matmul %308, %1, %cst_51 {dimension_numbers = #tpu.dot_dimension_numbers<[1], [0], [0], [1], [0, 0, 1, 1], [], []>} : vector<2x64xf32>, vector<64x192xf32>, vector<2x192xf32> -> vector<2x192xf32>
    %311 = vector.broadcast %6 : vector<1x192xf32> to vector<2x192xf32>
    %312 = arith.addf %310, %311 : vector<2x192xf32>
    %313 = vector.extract_strided_slice %309 {offsets = [0, 0], sizes = [2, 64], strides = [1, 1]} : vector<2x192xf32> to vector<2x64xf32>
    %314 = vector.extract_strided_slice %312 {offsets = [0, 0], sizes = [2, 64], strides = [1, 1]} : vector<2x192xf32> to vector<2x64xf32>
    %315 = arith.addf %313, %314 : vector<2x64xf32>
    %316 = arith.negf %315 : vector<2x64xf32>
    %317 = math.exp %316 : vector<2x64xf32>
    %cst_52 = arith.constant 1.000000e+00 : f32
    %318 = vector.broadcast %cst_52 : f32 to vector<2x64xf32>
    %319 = arith.addf %318, %317 : vector<2x64xf32>
    %320 = arith.divf %318, %319 : vector<2x64xf32>
    %321 = vector.extract_strided_slice %309 {offsets = [0, 64], sizes = [2, 64], strides = [1, 1]} : vector<2x192xf32> to vector<2x64xf32>
    %322 = vector.extract_strided_slice %312 {offsets = [0, 64], sizes = [2, 64], strides = [1, 1]} : vector<2x192xf32> to vector<2x64xf32>
    %323 = arith.addf %321, %322 : vector<2x64xf32>
    %324 = arith.negf %323 : vector<2x64xf32>
    %325 = math.exp %324 : vector<2x64xf32>
    %cst_53 = arith.constant 1.000000e+00 : f32
    %326 = vector.broadcast %cst_53 : f32 to vector<2x64xf32>
    %327 = arith.addf %326, %325 : vector<2x64xf32>
    %328 = arith.divf %326, %327 : vector<2x64xf32>
    %329 = vector.extract_strided_slice %309 {offsets = [0, 128], sizes = [2, 64], strides = [1, 1]} : vector<2x192xf32> to vector<2x64xf32>
    %330 = vector.extract_strided_slice %312 {offsets = [0, 128], sizes = [2, 64], strides = [1, 1]} : vector<2x192xf32> to vector<2x64xf32>
    %331 = arith.mulf %320, %330 : vector<2x64xf32>
    %332 = arith.addf %329, %331 : vector<2x64xf32>
    %333 = math.tanh %332 : vector<2x64xf32>
    %cst_54 = arith.constant 1.000000e+00 : f32
    %334 = vector.broadcast %cst_54 : f32 to vector<2x64xf32>
    %335 = arith.subf %334, %328 : vector<2x64xf32>
    %336 = arith.mulf %335, %333 : vector<2x64xf32>
    %337 = arith.mulf %328, %308 : vector<2x64xf32>
    %338 = arith.addf %336, %337 : vector<2x64xf32>
    %339 = tpu.concatenate %128, %338 in 1 : vector<2x64xf32>, vector<2x64xf32> -> vector<2x128xf32>
    %340 = tpu.concatenate %158, %308 in 1 : vector<2x64xf32>, vector<2x64xf32> -> vector<2x128xf32>
    %341 = tpu.concatenate %188, %278 in 1 : vector<2x64xf32>, vector<2x64xf32> -> vector<2x128xf32>
    %342 = tpu.concatenate %218, %248 in 1 : vector<2x64xf32>, vector<2x64xf32> -> vector<2x128xf32>
    %343 = tpu.concatenate %248, %218 in 1 : vector<2x64xf32>, vector<2x64xf32> -> vector<2x128xf32>
    %344 = tpu.concatenate %278, %188 in 1 : vector<2x64xf32>, vector<2x64xf32> -> vector<2x128xf32>
    %345 = tpu.concatenate %308, %158 in 1 : vector<2x64xf32>, vector<2x64xf32> -> vector<2x128xf32>
    %346 = tpu.concatenate %338, %128 in 1 : vector<2x64xf32>, vector<2x64xf32> -> vector<2x128xf32>
    %347 = tpu.concatenate %339, %340, %341, %342, %343, %344, %345, %346 in 0 : vector<2x128xf32>, vector<2x128xf32>, vector<2x128xf32>, vector<2x128xf32>, vector<2x128xf32>, vector<2x128xf32>, vector<2x128xf32>, vector<2x128xf32> -> vector<16x128xf32>
    %cst_55 = arith.constant dense<0.000000e+00> : vector<16x192xf32>
    %348 = tpu.matmul %347, %2, %cst_55 {dimension_numbers = #tpu.dot_dimension_numbers<[1], [0], [0], [1], [0, 0, 1, 1], [], []>} : vector<16x128xf32>, vector<128x192xf32>, vector<16x192xf32> -> vector<16x192xf32>
    %349 = vector.broadcast %7 : vector<1x192xf32> to vector<16x192xf32>
    %350 = arith.addf %348, %349 : vector<16x192xf32>
    %cst_56 = arith.constant 0.000000e+00 : f32
    %351 = vector.broadcast %cst_56 : f32 to vector<2x64xf32>
    %352 = vector.extract_strided_slice %350 {offsets = [0, 0], sizes = [2, 192], strides = [1, 1]} : vector<16x192xf32> to vector<2x192xf32>
    %cst_57 = arith.constant dense<0.000000e+00> : vector<2x192xf32>
    %353 = tpu.matmul %351, %3, %cst_57 {dimension_numbers = #tpu.dot_dimension_numbers<[1], [0], [0], [1], [0, 0, 1, 1], [], []>} : vector<2x64xf32>, vector<64x192xf32>, vector<2x192xf32> -> vector<2x192xf32>
    %354 = vector.broadcast %8 : vector<1x192xf32> to vector<2x192xf32>
    %355 = arith.addf %353, %354 : vector<2x192xf32>
    %356 = vector.extract_strided_slice %352 {offsets = [0, 0], sizes = [2, 64], strides = [1, 1]} : vector<2x192xf32> to vector<2x64xf32>
    %357 = vector.extract_strided_slice %355 {offsets = [0, 0], sizes = [2, 64], strides = [1, 1]} : vector<2x192xf32> to vector<2x64xf32>
    %358 = arith.addf %356, %357 : vector<2x64xf32>
    %359 = arith.negf %358 : vector<2x64xf32>
    %360 = math.exp %359 : vector<2x64xf32>
    %cst_58 = arith.constant 1.000000e+00 : f32
    %361 = vector.broadcast %cst_58 : f32 to vector<2x64xf32>
    %362 = arith.addf %361, %360 : vector<2x64xf32>
    %363 = arith.divf %361, %362 : vector<2x64xf32>
    %364 = vector.extract_strided_slice %352 {offsets = [0, 64], sizes = [2, 64], strides = [1, 1]} : vector<2x192xf32> to vector<2x64xf32>
    %365 = vector.extract_strided_slice %355 {offsets = [0, 64], sizes = [2, 64], strides = [1, 1]} : vector<2x192xf32> to vector<2x64xf32>
    %366 = arith.addf %364, %365 : vector<2x64xf32>
    %367 = arith.negf %366 : vector<2x64xf32>
    %368 = math.exp %367 : vector<2x64xf32>
    %cst_59 = arith.constant 1.000000e+00 : f32
    %369 = vector.broadcast %cst_59 : f32 to vector<2x64xf32>
    %370 = arith.addf %369, %368 : vector<2x64xf32>
    %371 = arith.divf %369, %370 : vector<2x64xf32>
    %372 = vector.extract_strided_slice %352 {offsets = [0, 128], sizes = [2, 64], strides = [1, 1]} : vector<2x192xf32> to vector<2x64xf32>
    %373 = vector.extract_strided_slice %355 {offsets = [0, 128], sizes = [2, 64], strides = [1, 1]} : vector<2x192xf32> to vector<2x64xf32>
    %374 = arith.mulf %363, %373 : vector<2x64xf32>
    %375 = arith.addf %372, %374 : vector<2x64xf32>
    %376 = math.tanh %375 : vector<2x64xf32>
    %cst_60 = arith.constant 1.000000e+00 : f32
    %377 = vector.broadcast %cst_60 : f32 to vector<2x64xf32>
    %378 = arith.subf %377, %371 : vector<2x64xf32>
    %379 = arith.mulf %378, %376 : vector<2x64xf32>
    %380 = arith.mulf %371, %351 : vector<2x64xf32>
    %381 = arith.addf %379, %380 : vector<2x64xf32>
    %382 = vector.extract_strided_slice %350 {offsets = [2, 0], sizes = [2, 192], strides = [1, 1]} : vector<16x192xf32> to vector<2x192xf32>
    %cst_61 = arith.constant dense<0.000000e+00> : vector<2x192xf32>
    %383 = tpu.matmul %381, %3, %cst_61 {dimension_numbers = #tpu.dot_dimension_numbers<[1], [0], [0], [1], [0, 0, 1, 1], [], []>} : vector<2x64xf32>, vector<64x192xf32>, vector<2x192xf32> -> vector<2x192xf32>
    %384 = vector.broadcast %8 : vector<1x192xf32> to vector<2x192xf32>
    %385 = arith.addf %383, %384 : vector<2x192xf32>
    %386 = vector.extract_strided_slice %382 {offsets = [0, 0], sizes = [2, 64], strides = [1, 1]} : vector<2x192xf32> to vector<2x64xf32>
    %387 = vector.extract_strided_slice %385 {offsets = [0, 0], sizes = [2, 64], strides = [1, 1]} : vector<2x192xf32> to vector<2x64xf32>
    %388 = arith.addf %386, %387 : vector<2x64xf32>
    %389 = arith.negf %388 : vector<2x64xf32>
    %390 = math.exp %389 : vector<2x64xf32>
    %cst_62 = arith.constant 1.000000e+00 : f32
    %391 = vector.broadcast %cst_62 : f32 to vector<2x64xf32>
    %392 = arith.addf %391, %390 : vector<2x64xf32>
    %393 = arith.divf %391, %392 : vector<2x64xf32>
    %394 = vector.extract_strided_slice %382 {offsets = [0, 64], sizes = [2, 64], strides = [1, 1]} : vector<2x192xf32> to vector<2x64xf32>
    %395 = vector.extract_strided_slice %385 {offsets = [0, 64], sizes = [2, 64], strides = [1, 1]} : vector<2x192xf32> to vector<2x64xf32>
    %396 = arith.addf %394, %395 : vector<2x64xf32>
    %397 = arith.negf %396 : vector<2x64xf32>
    %398 = math.exp %397 : vector<2x64xf32>
    %cst_63 = arith.constant 1.000000e+00 : f32
    %399 = vector.broadcast %cst_63 : f32 to vector<2x64xf32>
    %400 = arith.addf %399, %398 : vector<2x64xf32>
    %401 = arith.divf %399, %400 : vector<2x64xf32>
    %402 = vector.extract_strided_slice %382 {offsets = [0, 128], sizes = [2, 64], strides = [1, 1]} : vector<2x192xf32> to vector<2x64xf32>
    %403 = vector.extract_strided_slice %385 {offsets = [0, 128], sizes = [2, 64], strides = [1, 1]} : vector<2x192xf32> to vector<2x64xf32>
    %404 = arith.mulf %393, %403 : vector<2x64xf32>
    %405 = arith.addf %402, %404 : vector<2x64xf32>
    %406 = math.tanh %405 : vector<2x64xf32>
    %cst_64 = arith.constant 1.000000e+00 : f32
    %407 = vector.broadcast %cst_64 : f32 to vector<2x64xf32>
    %408 = arith.subf %407, %401 : vector<2x64xf32>
    %409 = arith.mulf %408, %406 : vector<2x64xf32>
    %410 = arith.mulf %401, %381 : vector<2x64xf32>
    %411 = arith.addf %409, %410 : vector<2x64xf32>
    %412 = vector.extract_strided_slice %350 {offsets = [4, 0], sizes = [2, 192], strides = [1, 1]} : vector<16x192xf32> to vector<2x192xf32>
    %cst_65 = arith.constant dense<0.000000e+00> : vector<2x192xf32>
    %413 = tpu.matmul %411, %3, %cst_65 {dimension_numbers = #tpu.dot_dimension_numbers<[1], [0], [0], [1], [0, 0, 1, 1], [], []>} : vector<2x64xf32>, vector<64x192xf32>, vector<2x192xf32> -> vector<2x192xf32>
    %414 = vector.broadcast %8 : vector<1x192xf32> to vector<2x192xf32>
    %415 = arith.addf %413, %414 : vector<2x192xf32>
    %416 = vector.extract_strided_slice %412 {offsets = [0, 0], sizes = [2, 64], strides = [1, 1]} : vector<2x192xf32> to vector<2x64xf32>
    %417 = vector.extract_strided_slice %415 {offsets = [0, 0], sizes = [2, 64], strides = [1, 1]} : vector<2x192xf32> to vector<2x64xf32>
    %418 = arith.addf %416, %417 : vector<2x64xf32>
    %419 = arith.negf %418 : vector<2x64xf32>
    %420 = math.exp %419 : vector<2x64xf32>
    %cst_66 = arith.constant 1.000000e+00 : f32
    %421 = vector.broadcast %cst_66 : f32 to vector<2x64xf32>
    %422 = arith.addf %421, %420 : vector<2x64xf32>
    %423 = arith.divf %421, %422 : vector<2x64xf32>
    %424 = vector.extract_strided_slice %412 {offsets = [0, 64], sizes = [2, 64], strides = [1, 1]} : vector<2x192xf32> to vector<2x64xf32>
    %425 = vector.extract_strided_slice %415 {offsets = [0, 64], sizes = [2, 64], strides = [1, 1]} : vector<2x192xf32> to vector<2x64xf32>
    %426 = arith.addf %424, %425 : vector<2x64xf32>
    %427 = arith.negf %426 : vector<2x64xf32>
    %428 = math.exp %427 : vector<2x64xf32>
    %cst_67 = arith.constant 1.000000e+00 : f32
    %429 = vector.broadcast %cst_67 : f32 to vector<2x64xf32>
    %430 = arith.addf %429, %428 : vector<2x64xf32>
    %431 = arith.divf %429, %430 : vector<2x64xf32>
    %432 = vector.extract_strided_slice %412 {offsets = [0, 128], sizes = [2, 64], strides = [1, 1]} : vector<2x192xf32> to vector<2x64xf32>
    %433 = vector.extract_strided_slice %415 {offsets = [0, 128], sizes = [2, 64], strides = [1, 1]} : vector<2x192xf32> to vector<2x64xf32>
    %434 = arith.mulf %423, %433 : vector<2x64xf32>
    %435 = arith.addf %432, %434 : vector<2x64xf32>
    %436 = math.tanh %435 : vector<2x64xf32>
    %cst_68 = arith.constant 1.000000e+00 : f32
    %437 = vector.broadcast %cst_68 : f32 to vector<2x64xf32>
    %438 = arith.subf %437, %431 : vector<2x64xf32>
    %439 = arith.mulf %438, %436 : vector<2x64xf32>
    %440 = arith.mulf %431, %411 : vector<2x64xf32>
    %441 = arith.addf %439, %440 : vector<2x64xf32>
    %442 = vector.extract_strided_slice %350 {offsets = [6, 0], sizes = [2, 192], strides = [1, 1]} : vector<16x192xf32> to vector<2x192xf32>
    %cst_69 = arith.constant dense<0.000000e+00> : vector<2x192xf32>
    %443 = tpu.matmul %441, %3, %cst_69 {dimension_numbers = #tpu.dot_dimension_numbers<[1], [0], [0], [1], [0, 0, 1, 1], [], []>} : vector<2x64xf32>, vector<64x192xf32>, vector<2x192xf32> -> vector<2x192xf32>
    %444 = vector.broadcast %8 : vector<1x192xf32> to vector<2x192xf32>
    %445 = arith.addf %443, %444 : vector<2x192xf32>
    %446 = vector.extract_strided_slice %442 {offsets = [0, 0], sizes = [2, 64], strides = [1, 1]} : vector<2x192xf32> to vector<2x64xf32>
    %447 = vector.extract_strided_slice %445 {offsets = [0, 0], sizes = [2, 64], strides = [1, 1]} : vector<2x192xf32> to vector<2x64xf32>
    %448 = arith.addf %446, %447 : vector<2x64xf32>
    %449 = arith.negf %448 : vector<2x64xf32>
    %450 = math.exp %449 : vector<2x64xf32>
    %cst_70 = arith.constant 1.000000e+00 : f32
    %451 = vector.broadcast %cst_70 : f32 to vector<2x64xf32>
    %452 = arith.addf %451, %450 : vector<2x64xf32>
    %453 = arith.divf %451, %452 : vector<2x64xf32>
    %454 = vector.extract_strided_slice %442 {offsets = [0, 64], sizes = [2, 64], strides = [1, 1]} : vector<2x192xf32> to vector<2x64xf32>
    %455 = vector.extract_strided_slice %445 {offsets = [0, 64], sizes = [2, 64], strides = [1, 1]} : vector<2x192xf32> to vector<2x64xf32>
    %456 = arith.addf %454, %455 : vector<2x64xf32>
    %457 = arith.negf %456 : vector<2x64xf32>
    %458 = math.exp %457 : vector<2x64xf32>
    %cst_71 = arith.constant 1.000000e+00 : f32
    %459 = vector.broadcast %cst_71 : f32 to vector<2x64xf32>
    %460 = arith.addf %459, %458 : vector<2x64xf32>
    %461 = arith.divf %459, %460 : vector<2x64xf32>
    %462 = vector.extract_strided_slice %442 {offsets = [0, 128], sizes = [2, 64], strides = [1, 1]} : vector<2x192xf32> to vector<2x64xf32>
    %463 = vector.extract_strided_slice %445 {offsets = [0, 128], sizes = [2, 64], strides = [1, 1]} : vector<2x192xf32> to vector<2x64xf32>
    %464 = arith.mulf %453, %463 : vector<2x64xf32>
    %465 = arith.addf %462, %464 : vector<2x64xf32>
    %466 = math.tanh %465 : vector<2x64xf32>
    %cst_72 = arith.constant 1.000000e+00 : f32
    %467 = vector.broadcast %cst_72 : f32 to vector<2x64xf32>
    %468 = arith.subf %467, %461 : vector<2x64xf32>
    %469 = arith.mulf %468, %466 : vector<2x64xf32>
    %470 = arith.mulf %461, %441 : vector<2x64xf32>
    %471 = arith.addf %469, %470 : vector<2x64xf32>
    %472 = vector.extract_strided_slice %350 {offsets = [8, 0], sizes = [2, 192], strides = [1, 1]} : vector<16x192xf32> to vector<2x192xf32>
    %cst_73 = arith.constant dense<0.000000e+00> : vector<2x192xf32>
    %473 = tpu.matmul %471, %3, %cst_73 {dimension_numbers = #tpu.dot_dimension_numbers<[1], [0], [0], [1], [0, 0, 1, 1], [], []>} : vector<2x64xf32>, vector<64x192xf32>, vector<2x192xf32> -> vector<2x192xf32>
    %474 = vector.broadcast %8 : vector<1x192xf32> to vector<2x192xf32>
    %475 = arith.addf %473, %474 : vector<2x192xf32>
    %476 = vector.extract_strided_slice %472 {offsets = [0, 0], sizes = [2, 64], strides = [1, 1]} : vector<2x192xf32> to vector<2x64xf32>
    %477 = vector.extract_strided_slice %475 {offsets = [0, 0], sizes = [2, 64], strides = [1, 1]} : vector<2x192xf32> to vector<2x64xf32>
    %478 = arith.addf %476, %477 : vector<2x64xf32>
    %479 = arith.negf %478 : vector<2x64xf32>
    %480 = math.exp %479 : vector<2x64xf32>
    %cst_74 = arith.constant 1.000000e+00 : f32
    %481 = vector.broadcast %cst_74 : f32 to vector<2x64xf32>
    %482 = arith.addf %481, %480 : vector<2x64xf32>
    %483 = arith.divf %481, %482 : vector<2x64xf32>
    %484 = vector.extract_strided_slice %472 {offsets = [0, 64], sizes = [2, 64], strides = [1, 1]} : vector<2x192xf32> to vector<2x64xf32>
    %485 = vector.extract_strided_slice %475 {offsets = [0, 64], sizes = [2, 64], strides = [1, 1]} : vector<2x192xf32> to vector<2x64xf32>
    %486 = arith.addf %484, %485 : vector<2x64xf32>
    %487 = arith.negf %486 : vector<2x64xf32>
    %488 = math.exp %487 : vector<2x64xf32>
    %cst_75 = arith.constant 1.000000e+00 : f32
    %489 = vector.broadcast %cst_75 : f32 to vector<2x64xf32>
    %490 = arith.addf %489, %488 : vector<2x64xf32>
    %491 = arith.divf %489, %490 : vector<2x64xf32>
    %492 = vector.extract_strided_slice %472 {offsets = [0, 128], sizes = [2, 64], strides = [1, 1]} : vector<2x192xf32> to vector<2x64xf32>
    %493 = vector.extract_strided_slice %475 {offsets = [0, 128], sizes = [2, 64], strides = [1, 1]} : vector<2x192xf32> to vector<2x64xf32>
    %494 = arith.mulf %483, %493 : vector<2x64xf32>
    %495 = arith.addf %492, %494 : vector<2x64xf32>
    %496 = math.tanh %495 : vector<2x64xf32>
    %cst_76 = arith.constant 1.000000e+00 : f32
    %497 = vector.broadcast %cst_76 : f32 to vector<2x64xf32>
    %498 = arith.subf %497, %491 : vector<2x64xf32>
    %499 = arith.mulf %498, %496 : vector<2x64xf32>
    %500 = arith.mulf %491, %471 : vector<2x64xf32>
    %501 = arith.addf %499, %500 : vector<2x64xf32>
    %502 = vector.extract_strided_slice %350 {offsets = [10, 0], sizes = [2, 192], strides = [1, 1]} : vector<16x192xf32> to vector<2x192xf32>
    %cst_77 = arith.constant dense<0.000000e+00> : vector<2x192xf32>
    %503 = tpu.matmul %501, %3, %cst_77 {dimension_numbers = #tpu.dot_dimension_numbers<[1], [0], [0], [1], [0, 0, 1, 1], [], []>} : vector<2x64xf32>, vector<64x192xf32>, vector<2x192xf32> -> vector<2x192xf32>
    %504 = vector.broadcast %8 : vector<1x192xf32> to vector<2x192xf32>
    %505 = arith.addf %503, %504 : vector<2x192xf32>
    %506 = vector.extract_strided_slice %502 {offsets = [0, 0], sizes = [2, 64], strides = [1, 1]} : vector<2x192xf32> to vector<2x64xf32>
    %507 = vector.extract_strided_slice %505 {offsets = [0, 0], sizes = [2, 64], strides = [1, 1]} : vector<2x192xf32> to vector<2x64xf32>
    %508 = arith.addf %506, %507 : vector<2x64xf32>
    %509 = arith.negf %508 : vector<2x64xf32>
    %510 = math.exp %509 : vector<2x64xf32>
    %cst_78 = arith.constant 1.000000e+00 : f32
    %511 = vector.broadcast %cst_78 : f32 to vector<2x64xf32>
    %512 = arith.addf %511, %510 : vector<2x64xf32>
    %513 = arith.divf %511, %512 : vector<2x64xf32>
    %514 = vector.extract_strided_slice %502 {offsets = [0, 64], sizes = [2, 64], strides = [1, 1]} : vector<2x192xf32> to vector<2x64xf32>
    %515 = vector.extract_strided_slice %505 {offsets = [0, 64], sizes = [2, 64], strides = [1, 1]} : vector<2x192xf32> to vector<2x64xf32>
    %516 = arith.addf %514, %515 : vector<2x64xf32>
    %517 = arith.negf %516 : vector<2x64xf32>
    %518 = math.exp %517 : vector<2x64xf32>
    %cst_79 = arith.constant 1.000000e+00 : f32
    %519 = vector.broadcast %cst_79 : f32 to vector<2x64xf32>
    %520 = arith.addf %519, %518 : vector<2x64xf32>
    %521 = arith.divf %519, %520 : vector<2x64xf32>
    %522 = vector.extract_strided_slice %502 {offsets = [0, 128], sizes = [2, 64], strides = [1, 1]} : vector<2x192xf32> to vector<2x64xf32>
    %523 = vector.extract_strided_slice %505 {offsets = [0, 128], sizes = [2, 64], strides = [1, 1]} : vector<2x192xf32> to vector<2x64xf32>
    %524 = arith.mulf %513, %523 : vector<2x64xf32>
    %525 = arith.addf %522, %524 : vector<2x64xf32>
    %526 = math.tanh %525 : vector<2x64xf32>
    %cst_80 = arith.constant 1.000000e+00 : f32
    %527 = vector.broadcast %cst_80 : f32 to vector<2x64xf32>
    %528 = arith.subf %527, %521 : vector<2x64xf32>
    %529 = arith.mulf %528, %526 : vector<2x64xf32>
    %530 = arith.mulf %521, %501 : vector<2x64xf32>
    %531 = arith.addf %529, %530 : vector<2x64xf32>
    %532 = vector.extract_strided_slice %350 {offsets = [12, 0], sizes = [2, 192], strides = [1, 1]} : vector<16x192xf32> to vector<2x192xf32>
    %cst_81 = arith.constant dense<0.000000e+00> : vector<2x192xf32>
    %533 = tpu.matmul %531, %3, %cst_81 {dimension_numbers = #tpu.dot_dimension_numbers<[1], [0], [0], [1], [0, 0, 1, 1], [], []>} : vector<2x64xf32>, vector<64x192xf32>, vector<2x192xf32> -> vector<2x192xf32>
    %534 = vector.broadcast %8 : vector<1x192xf32> to vector<2x192xf32>
    %535 = arith.addf %533, %534 : vector<2x192xf32>
    %536 = vector.extract_strided_slice %532 {offsets = [0, 0], sizes = [2, 64], strides = [1, 1]} : vector<2x192xf32> to vector<2x64xf32>
    %537 = vector.extract_strided_slice %535 {offsets = [0, 0], sizes = [2, 64], strides = [1, 1]} : vector<2x192xf32> to vector<2x64xf32>
    %538 = arith.addf %536, %537 : vector<2x64xf32>
    %539 = arith.negf %538 : vector<2x64xf32>
    %540 = math.exp %539 : vector<2x64xf32>
    %cst_82 = arith.constant 1.000000e+00 : f32
    %541 = vector.broadcast %cst_82 : f32 to vector<2x64xf32>
    %542 = arith.addf %541, %540 : vector<2x64xf32>
    %543 = arith.divf %541, %542 : vector<2x64xf32>
    %544 = vector.extract_strided_slice %532 {offsets = [0, 64], sizes = [2, 64], strides = [1, 1]} : vector<2x192xf32> to vector<2x64xf32>
    %545 = vector.extract_strided_slice %535 {offsets = [0, 64], sizes = [2, 64], strides = [1, 1]} : vector<2x192xf32> to vector<2x64xf32>
    %546 = arith.addf %544, %545 : vector<2x64xf32>
    %547 = arith.negf %546 : vector<2x64xf32>
    %548 = math.exp %547 : vector<2x64xf32>
    %cst_83 = arith.constant 1.000000e+00 : f32
    %549 = vector.broadcast %cst_83 : f32 to vector<2x64xf32>
    %550 = arith.addf %549, %548 : vector<2x64xf32>
    %551 = arith.divf %549, %550 : vector<2x64xf32>
    %552 = vector.extract_strided_slice %532 {offsets = [0, 128], sizes = [2, 64], strides = [1, 1]} : vector<2x192xf32> to vector<2x64xf32>
    %553 = vector.extract_strided_slice %535 {offsets = [0, 128], sizes = [2, 64], strides = [1, 1]} : vector<2x192xf32> to vector<2x64xf32>
    %554 = arith.mulf %543, %553 : vector<2x64xf32>
    %555 = arith.addf %552, %554 : vector<2x64xf32>
    %556 = math.tanh %555 : vector<2x64xf32>
    %cst_84 = arith.constant 1.000000e+00 : f32
    %557 = vector.broadcast %cst_84 : f32 to vector<2x64xf32>
    %558 = arith.subf %557, %551 : vector<2x64xf32>
    %559 = arith.mulf %558, %556 : vector<2x64xf32>
    %560 = arith.mulf %551, %531 : vector<2x64xf32>
    %561 = arith.addf %559, %560 : vector<2x64xf32>
    %562 = vector.extract_strided_slice %350 {offsets = [14, 0], sizes = [2, 192], strides = [1, 1]} : vector<16x192xf32> to vector<2x192xf32>
    %cst_85 = arith.constant dense<0.000000e+00> : vector<2x192xf32>
    %563 = tpu.matmul %561, %3, %cst_85 {dimension_numbers = #tpu.dot_dimension_numbers<[1], [0], [0], [1], [0, 0, 1, 1], [], []>} : vector<2x64xf32>, vector<64x192xf32>, vector<2x192xf32> -> vector<2x192xf32>
    %564 = vector.broadcast %8 : vector<1x192xf32> to vector<2x192xf32>
    %565 = arith.addf %563, %564 : vector<2x192xf32>
    %566 = vector.extract_strided_slice %562 {offsets = [0, 0], sizes = [2, 64], strides = [1, 1]} : vector<2x192xf32> to vector<2x64xf32>
    %567 = vector.extract_strided_slice %565 {offsets = [0, 0], sizes = [2, 64], strides = [1, 1]} : vector<2x192xf32> to vector<2x64xf32>
    %568 = arith.addf %566, %567 : vector<2x64xf32>
    %569 = arith.negf %568 : vector<2x64xf32>
    %570 = math.exp %569 : vector<2x64xf32>
    %cst_86 = arith.constant 1.000000e+00 : f32
    %571 = vector.broadcast %cst_86 : f32 to vector<2x64xf32>
    %572 = arith.addf %571, %570 : vector<2x64xf32>
    %573 = arith.divf %571, %572 : vector<2x64xf32>
    %574 = vector.extract_strided_slice %562 {offsets = [0, 64], sizes = [2, 64], strides = [1, 1]} : vector<2x192xf32> to vector<2x64xf32>
    %575 = vector.extract_strided_slice %565 {offsets = [0, 64], sizes = [2, 64], strides = [1, 1]} : vector<2x192xf32> to vector<2x64xf32>
    %576 = arith.addf %574, %575 : vector<2x64xf32>
    %577 = arith.negf %576 : vector<2x64xf32>
    %578 = math.exp %577 : vector<2x64xf32>
    %cst_87 = arith.constant 1.000000e+00 : f32
    %579 = vector.broadcast %cst_87 : f32 to vector<2x64xf32>
    %580 = arith.addf %579, %578 : vector<2x64xf32>
    %581 = arith.divf %579, %580 : vector<2x64xf32>
    %582 = vector.extract_strided_slice %562 {offsets = [0, 128], sizes = [2, 64], strides = [1, 1]} : vector<2x192xf32> to vector<2x64xf32>
    %583 = vector.extract_strided_slice %565 {offsets = [0, 128], sizes = [2, 64], strides = [1, 1]} : vector<2x192xf32> to vector<2x64xf32>
    %584 = arith.mulf %573, %583 : vector<2x64xf32>
    %585 = arith.addf %582, %584 : vector<2x64xf32>
    %586 = math.tanh %585 : vector<2x64xf32>
    %cst_88 = arith.constant 1.000000e+00 : f32
    %587 = vector.broadcast %cst_88 : f32 to vector<2x64xf32>
    %588 = arith.subf %587, %581 : vector<2x64xf32>
    %589 = arith.mulf %588, %586 : vector<2x64xf32>
    %590 = arith.mulf %581, %561 : vector<2x64xf32>
    %591 = arith.addf %589, %590 : vector<2x64xf32>
    %592 = vector.extract_strided_slice %20 {offsets = [0, 7, 0], sizes = [2, 1, 32], strides = [1, 1, 1]} : vector<2x8x32xf32> to vector<2x1x32xf32>
    %593 = vector.shape_cast %592 : vector<2x1x32xf32> to vector<2x32xf32>
    %cst_89 = arith.constant dense<0.000000e+00> : vector<2x192xf32>
    %594 = tpu.matmul %593, %9, %cst_89 {dimension_numbers = #tpu.dot_dimension_numbers<[1], [0], [0], [1], [0, 0, 1, 1], [], []>} : vector<2x32xf32>, vector<32x192xf32>, vector<2x192xf32> -> vector<2x192xf32>
    %595 = vector.broadcast %14 : vector<1x192xf32> to vector<2x192xf32>
    %596 = arith.addf %594, %595 : vector<2x192xf32>
    %cst_90 = arith.constant dense<0.000000e+00> : vector<2x192xf32>
    %597 = tpu.matmul %338, %10, %cst_90 {dimension_numbers = #tpu.dot_dimension_numbers<[1], [0], [0], [1], [0, 0, 1, 1], [], []>} : vector<2x64xf32>, vector<64x192xf32>, vector<2x192xf32> -> vector<2x192xf32>
    %598 = vector.broadcast %15 : vector<1x192xf32> to vector<2x192xf32>
    %599 = arith.addf %597, %598 : vector<2x192xf32>
    %600 = vector.extract_strided_slice %596 {offsets = [0, 0], sizes = [2, 64], strides = [1, 1]} : vector<2x192xf32> to vector<2x64xf32>
    %601 = vector.extract_strided_slice %599 {offsets = [0, 0], sizes = [2, 64], strides = [1, 1]} : vector<2x192xf32> to vector<2x64xf32>
    %602 = arith.addf %600, %601 : vector<2x64xf32>
    %603 = arith.negf %602 : vector<2x64xf32>
    %604 = math.exp %603 : vector<2x64xf32>
    %cst_91 = arith.constant 1.000000e+00 : f32
    %605 = vector.broadcast %cst_91 : f32 to vector<2x64xf32>
    %606 = arith.addf %605, %604 : vector<2x64xf32>
    %607 = arith.divf %605, %606 : vector<2x64xf32>
    %608 = vector.extract_strided_slice %596 {offsets = [0, 64], sizes = [2, 64], strides = [1, 1]} : vector<2x192xf32> to vector<2x64xf32>
    %609 = vector.extract_strided_slice %599 {offsets = [0, 64], sizes = [2, 64], strides = [1, 1]} : vector<2x192xf32> to vector<2x64xf32>
    %610 = arith.addf %608, %609 : vector<2x64xf32>
    %611 = arith.negf %610 : vector<2x64xf32>
    %612 = math.exp %611 : vector<2x64xf32>
    %cst_92 = arith.constant 1.000000e+00 : f32
    %613 = vector.broadcast %cst_92 : f32 to vector<2x64xf32>
    %614 = arith.addf %613, %612 : vector<2x64xf32>
    %615 = arith.divf %613, %614 : vector<2x64xf32>
    %616 = vector.extract_strided_slice %596 {offsets = [0, 128], sizes = [2, 64], strides = [1, 1]} : vector<2x192xf32> to vector<2x64xf32>
    %617 = vector.extract_strided_slice %599 {offsets = [0, 128], sizes = [2, 64], strides = [1, 1]} : vector<2x192xf32> to vector<2x64xf32>
    %618 = arith.mulf %607, %617 : vector<2x64xf32>
    %619 = arith.addf %616, %618 : vector<2x64xf32>
    %620 = math.tanh %619 : vector<2x64xf32>
    %cst_93 = arith.constant 1.000000e+00 : f32
    %621 = vector.broadcast %cst_93 : f32 to vector<2x64xf32>
    %622 = arith.subf %621, %615 : vector<2x64xf32>
    %623 = arith.mulf %622, %620 : vector<2x64xf32>
    %624 = arith.mulf %615, %338 : vector<2x64xf32>
    %625 = arith.addf %623, %624 : vector<2x64xf32>
    %cst_94 = arith.constant dense<0.000000e+00> : vector<2x192xf32>
    %626 = tpu.matmul %625, %11, %cst_94 {dimension_numbers = #tpu.dot_dimension_numbers<[1], [0], [0], [1], [0, 0, 1, 1], [], []>} : vector<2x64xf32>, vector<64x192xf32>, vector<2x192xf32> -> vector<2x192xf32>
    %627 = vector.broadcast %16 : vector<1x192xf32> to vector<2x192xf32>
    %628 = arith.addf %626, %627 : vector<2x192xf32>
    %cst_95 = arith.constant dense<0.000000e+00> : vector<2x192xf32>
    %629 = tpu.matmul %591, %12, %cst_95 {dimension_numbers = #tpu.dot_dimension_numbers<[1], [0], [0], [1], [0, 0, 1, 1], [], []>} : vector<2x64xf32>, vector<64x192xf32>, vector<2x192xf32> -> vector<2x192xf32>
    %630 = vector.broadcast %17 : vector<1x192xf32> to vector<2x192xf32>
    %631 = arith.addf %629, %630 : vector<2x192xf32>
    %632 = vector.extract_strided_slice %628 {offsets = [0, 0], sizes = [2, 64], strides = [1, 1]} : vector<2x192xf32> to vector<2x64xf32>
    %633 = vector.extract_strided_slice %631 {offsets = [0, 0], sizes = [2, 64], strides = [1, 1]} : vector<2x192xf32> to vector<2x64xf32>
    %634 = arith.addf %632, %633 : vector<2x64xf32>
    %635 = arith.negf %634 : vector<2x64xf32>
    %636 = math.exp %635 : vector<2x64xf32>
    %cst_96 = arith.constant 1.000000e+00 : f32
    %637 = vector.broadcast %cst_96 : f32 to vector<2x64xf32>
    %638 = arith.addf %637, %636 : vector<2x64xf32>
    %639 = arith.divf %637, %638 : vector<2x64xf32>
    %640 = vector.extract_strided_slice %628 {offsets = [0, 64], sizes = [2, 64], strides = [1, 1]} : vector<2x192xf32> to vector<2x64xf32>
    %641 = vector.extract_strided_slice %631 {offsets = [0, 64], sizes = [2, 64], strides = [1, 1]} : vector<2x192xf32> to vector<2x64xf32>
    %642 = arith.addf %640, %641 : vector<2x64xf32>
    %643 = arith.negf %642 : vector<2x64xf32>
    %644 = math.exp %643 : vector<2x64xf32>
    %cst_97 = arith.constant 1.000000e+00 : f32
    %645 = vector.broadcast %cst_97 : f32 to vector<2x64xf32>
    %646 = arith.addf %645, %644 : vector<2x64xf32>
    %647 = arith.divf %645, %646 : vector<2x64xf32>
    %648 = vector.extract_strided_slice %628 {offsets = [0, 128], sizes = [2, 64], strides = [1, 1]} : vector<2x192xf32> to vector<2x64xf32>
    %649 = vector.extract_strided_slice %631 {offsets = [0, 128], sizes = [2, 64], strides = [1, 1]} : vector<2x192xf32> to vector<2x64xf32>
    %650 = arith.mulf %639, %649 : vector<2x64xf32>
    %651 = arith.addf %648, %650 : vector<2x64xf32>
    %652 = math.tanh %651 : vector<2x64xf32>
    %cst_98 = arith.constant 1.000000e+00 : f32
    %653 = vector.broadcast %cst_98 : f32 to vector<2x64xf32>
    %654 = arith.subf %653, %647 : vector<2x64xf32>
    %655 = arith.mulf %654, %652 : vector<2x64xf32>
    %656 = arith.mulf %647, %591 : vector<2x64xf32>
    %657 = arith.addf %655, %656 : vector<2x64xf32>
    %cst_99 = arith.constant dense<0.000000e+00> : vector<2x32xf32>
    %658 = tpu.matmul %657, %18, %cst_99 {dimension_numbers = #tpu.dot_dimension_numbers<[1], [0], [0], [1], [0, 0, 1, 1], [], []>} : vector<2x64xf32>, vector<64x32xf32>, vector<2x32xf32> -> vector<2x32xf32>
    %659 = vector.broadcast %19 : vector<1x32xf32> to vector<2x32xf32>
    %660 = arith.addf %658, %659 : vector<2x32xf32>
    %cst_100 = arith.constant dense<0.000000e+00> : vector<2x192xf32>
    %661 = tpu.matmul %660, %9, %cst_100 {dimension_numbers = #tpu.dot_dimension_numbers<[1], [0], [0], [1], [0, 0, 1, 1], [], []>} : vector<2x32xf32>, vector<32x192xf32>, vector<2x192xf32> -> vector<2x192xf32>
    %662 = vector.broadcast %14 : vector<1x192xf32> to vector<2x192xf32>
    %663 = arith.addf %661, %662 : vector<2x192xf32>
    %cst_101 = arith.constant dense<0.000000e+00> : vector<2x192xf32>
    %664 = tpu.matmul %625, %10, %cst_101 {dimension_numbers = #tpu.dot_dimension_numbers<[1], [0], [0], [1], [0, 0, 1, 1], [], []>} : vector<2x64xf32>, vector<64x192xf32>, vector<2x192xf32> -> vector<2x192xf32>
    %665 = vector.broadcast %15 : vector<1x192xf32> to vector<2x192xf32>
    %666 = arith.addf %664, %665 : vector<2x192xf32>
    %667 = vector.extract_strided_slice %663 {offsets = [0, 0], sizes = [2, 64], strides = [1, 1]} : vector<2x192xf32> to vector<2x64xf32>
    %668 = vector.extract_strided_slice %666 {offsets = [0, 0], sizes = [2, 64], strides = [1, 1]} : vector<2x192xf32> to vector<2x64xf32>
    %669 = arith.addf %667, %668 : vector<2x64xf32>
    %670 = arith.negf %669 : vector<2x64xf32>
    %671 = math.exp %670 : vector<2x64xf32>
    %cst_102 = arith.constant 1.000000e+00 : f32
    %672 = vector.broadcast %cst_102 : f32 to vector<2x64xf32>
    %673 = arith.addf %672, %671 : vector<2x64xf32>
    %674 = arith.divf %672, %673 : vector<2x64xf32>
    %675 = vector.extract_strided_slice %663 {offsets = [0, 64], sizes = [2, 64], strides = [1, 1]} : vector<2x192xf32> to vector<2x64xf32>
    %676 = vector.extract_strided_slice %666 {offsets = [0, 64], sizes = [2, 64], strides = [1, 1]} : vector<2x192xf32> to vector<2x64xf32>
    %677 = arith.addf %675, %676 : vector<2x64xf32>
    %678 = arith.negf %677 : vector<2x64xf32>
    %679 = math.exp %678 : vector<2x64xf32>
    %cst_103 = arith.constant 1.000000e+00 : f32
    %680 = vector.broadcast %cst_103 : f32 to vector<2x64xf32>
    %681 = arith.addf %680, %679 : vector<2x64xf32>
    %682 = arith.divf %680, %681 : vector<2x64xf32>
    %683 = vector.extract_strided_slice %663 {offsets = [0, 128], sizes = [2, 64], strides = [1, 1]} : vector<2x192xf32> to vector<2x64xf32>
    %684 = vector.extract_strided_slice %666 {offsets = [0, 128], sizes = [2, 64], strides = [1, 1]} : vector<2x192xf32> to vector<2x64xf32>
    %685 = arith.mulf %674, %684 : vector<2x64xf32>
    %686 = arith.addf %683, %685 : vector<2x64xf32>
    %687 = math.tanh %686 : vector<2x64xf32>
    %cst_104 = arith.constant 1.000000e+00 : f32
    %688 = vector.broadcast %cst_104 : f32 to vector<2x64xf32>
    %689 = arith.subf %688, %682 : vector<2x64xf32>
    %690 = arith.mulf %689, %687 : vector<2x64xf32>
    %691 = arith.mulf %682, %625 : vector<2x64xf32>
    %692 = arith.addf %690, %691 : vector<2x64xf32>
    %cst_105 = arith.constant dense<0.000000e+00> : vector<2x192xf32>
    %693 = tpu.matmul %692, %11, %cst_105 {dimension_numbers = #tpu.dot_dimension_numbers<[1], [0], [0], [1], [0, 0, 1, 1], [], []>} : vector<2x64xf32>, vector<64x192xf32>, vector<2x192xf32> -> vector<2x192xf32>
    %694 = vector.broadcast %16 : vector<1x192xf32> to vector<2x192xf32>
    %695 = arith.addf %693, %694 : vector<2x192xf32>
    %cst_106 = arith.constant dense<0.000000e+00> : vector<2x192xf32>
    %696 = tpu.matmul %657, %12, %cst_106 {dimension_numbers = #tpu.dot_dimension_numbers<[1], [0], [0], [1], [0, 0, 1, 1], [], []>} : vector<2x64xf32>, vector<64x192xf32>, vector<2x192xf32> -> vector<2x192xf32>
    %697 = vector.broadcast %17 : vector<1x192xf32> to vector<2x192xf32>
    %698 = arith.addf %696, %697 : vector<2x192xf32>
    %699 = vector.extract_strided_slice %695 {offsets = [0, 0], sizes = [2, 64], strides = [1, 1]} : vector<2x192xf32> to vector<2x64xf32>
    %700 = vector.extract_strided_slice %698 {offsets = [0, 0], sizes = [2, 64], strides = [1, 1]} : vector<2x192xf32> to vector<2x64xf32>
    %701 = arith.addf %699, %700 : vector<2x64xf32>
    %702 = arith.negf %701 : vector<2x64xf32>
    %703 = math.exp %702 : vector<2x64xf32>
    %cst_107 = arith.constant 1.000000e+00 : f32
    %704 = vector.broadcast %cst_107 : f32 to vector<2x64xf32>
    %705 = arith.addf %704, %703 : vector<2x64xf32>
    %706 = arith.divf %704, %705 : vector<2x64xf32>
    %707 = vector.extract_strided_slice %695 {offsets = [0, 64], sizes = [2, 64], strides = [1, 1]} : vector<2x192xf32> to vector<2x64xf32>
    %708 = vector.extract_strided_slice %698 {offsets = [0, 64], sizes = [2, 64], strides = [1, 1]} : vector<2x192xf32> to vector<2x64xf32>
    %709 = arith.addf %707, %708 : vector<2x64xf32>
    %710 = arith.negf %709 : vector<2x64xf32>
    %711 = math.exp %710 : vector<2x64xf32>
    %cst_108 = arith.constant 1.000000e+00 : f32
    %712 = vector.broadcast %cst_108 : f32 to vector<2x64xf32>
    %713 = arith.addf %712, %711 : vector<2x64xf32>
    %714 = arith.divf %712, %713 : vector<2x64xf32>
    %715 = vector.extract_strided_slice %695 {offsets = [0, 128], sizes = [2, 64], strides = [1, 1]} : vector<2x192xf32> to vector<2x64xf32>
    %716 = vector.extract_strided_slice %698 {offsets = [0, 128], sizes = [2, 64], strides = [1, 1]} : vector<2x192xf32> to vector<2x64xf32>
    %717 = arith.mulf %706, %716 : vector<2x64xf32>
    %718 = arith.addf %715, %717 : vector<2x64xf32>
    %719 = math.tanh %718 : vector<2x64xf32>
    %cst_109 = arith.constant 1.000000e+00 : f32
    %720 = vector.broadcast %cst_109 : f32 to vector<2x64xf32>
    %721 = arith.subf %720, %714 : vector<2x64xf32>
    %722 = arith.mulf %721, %719 : vector<2x64xf32>
    %723 = arith.mulf %714, %657 : vector<2x64xf32>
    %724 = arith.addf %722, %723 : vector<2x64xf32>
    %cst_110 = arith.constant dense<0.000000e+00> : vector<2x32xf32>
    %725 = tpu.matmul %724, %18, %cst_110 {dimension_numbers = #tpu.dot_dimension_numbers<[1], [0], [0], [1], [0, 0, 1, 1], [], []>} : vector<2x64xf32>, vector<64x32xf32>, vector<2x32xf32> -> vector<2x32xf32>
    %726 = vector.broadcast %19 : vector<1x32xf32> to vector<2x32xf32>
    %727 = arith.addf %725, %726 : vector<2x32xf32>
    %cst_111 = arith.constant dense<0.000000e+00> : vector<2x192xf32>
    %728 = tpu.matmul %727, %9, %cst_111 {dimension_numbers = #tpu.dot_dimension_numbers<[1], [0], [0], [1], [0, 0, 1, 1], [], []>} : vector<2x32xf32>, vector<32x192xf32>, vector<2x192xf32> -> vector<2x192xf32>
    %729 = vector.broadcast %14 : vector<1x192xf32> to vector<2x192xf32>
    %730 = arith.addf %728, %729 : vector<2x192xf32>
    %cst_112 = arith.constant dense<0.000000e+00> : vector<2x192xf32>
    %731 = tpu.matmul %692, %10, %cst_112 {dimension_numbers = #tpu.dot_dimension_numbers<[1], [0], [0], [1], [0, 0, 1, 1], [], []>} : vector<2x64xf32>, vector<64x192xf32>, vector<2x192xf32> -> vector<2x192xf32>
    %732 = vector.broadcast %15 : vector<1x192xf32> to vector<2x192xf32>
    %733 = arith.addf %731, %732 : vector<2x192xf32>
    %734 = vector.extract_strided_slice %730 {offsets = [0, 0], sizes = [2, 64], strides = [1, 1]} : vector<2x192xf32> to vector<2x64xf32>
    %735 = vector.extract_strided_slice %733 {offsets = [0, 0], sizes = [2, 64], strides = [1, 1]} : vector<2x192xf32> to vector<2x64xf32>
    %736 = arith.addf %734, %735 : vector<2x64xf32>
    %737 = arith.negf %736 : vector<2x64xf32>
    %738 = math.exp %737 : vector<2x64xf32>
    %cst_113 = arith.constant 1.000000e+00 : f32
    %739 = vector.broadcast %cst_113 : f32 to vector<2x64xf32>
    %740 = arith.addf %739, %738 : vector<2x64xf32>
    %741 = arith.divf %739, %740 : vector<2x64xf32>
    %742 = vector.extract_strided_slice %730 {offsets = [0, 64], sizes = [2, 64], strides = [1, 1]} : vector<2x192xf32> to vector<2x64xf32>
    %743 = vector.extract_strided_slice %733 {offsets = [0, 64], sizes = [2, 64], strides = [1, 1]} : vector<2x192xf32> to vector<2x64xf32>
    %744 = arith.addf %742, %743 : vector<2x64xf32>
    %745 = arith.negf %744 : vector<2x64xf32>
    %746 = math.exp %745 : vector<2x64xf32>
    %cst_114 = arith.constant 1.000000e+00 : f32
    %747 = vector.broadcast %cst_114 : f32 to vector<2x64xf32>
    %748 = arith.addf %747, %746 : vector<2x64xf32>
    %749 = arith.divf %747, %748 : vector<2x64xf32>
    %750 = vector.extract_strided_slice %730 {offsets = [0, 128], sizes = [2, 64], strides = [1, 1]} : vector<2x192xf32> to vector<2x64xf32>
    %751 = vector.extract_strided_slice %733 {offsets = [0, 128], sizes = [2, 64], strides = [1, 1]} : vector<2x192xf32> to vector<2x64xf32>
    %752 = arith.mulf %741, %751 : vector<2x64xf32>
    %753 = arith.addf %750, %752 : vector<2x64xf32>
    %754 = math.tanh %753 : vector<2x64xf32>
    %cst_115 = arith.constant 1.000000e+00 : f32
    %755 = vector.broadcast %cst_115 : f32 to vector<2x64xf32>
    %756 = arith.subf %755, %749 : vector<2x64xf32>
    %757 = arith.mulf %756, %754 : vector<2x64xf32>
    %758 = arith.mulf %749, %692 : vector<2x64xf32>
    %759 = arith.addf %757, %758 : vector<2x64xf32>
    %cst_116 = arith.constant dense<0.000000e+00> : vector<2x192xf32>
    %760 = tpu.matmul %759, %11, %cst_116 {dimension_numbers = #tpu.dot_dimension_numbers<[1], [0], [0], [1], [0, 0, 1, 1], [], []>} : vector<2x64xf32>, vector<64x192xf32>, vector<2x192xf32> -> vector<2x192xf32>
    %761 = vector.broadcast %16 : vector<1x192xf32> to vector<2x192xf32>
    %762 = arith.addf %760, %761 : vector<2x192xf32>
    %cst_117 = arith.constant dense<0.000000e+00> : vector<2x192xf32>
    %763 = tpu.matmul %724, %12, %cst_117 {dimension_numbers = #tpu.dot_dimension_numbers<[1], [0], [0], [1], [0, 0, 1, 1], [], []>} : vector<2x64xf32>, vector<64x192xf32>, vector<2x192xf32> -> vector<2x192xf32>
    %764 = vector.broadcast %17 : vector<1x192xf32> to vector<2x192xf32>
    %765 = arith.addf %763, %764 : vector<2x192xf32>
    %766 = vector.extract_strided_slice %762 {offsets = [0, 0], sizes = [2, 64], strides = [1, 1]} : vector<2x192xf32> to vector<2x64xf32>
    %767 = vector.extract_strided_slice %765 {offsets = [0, 0], sizes = [2, 64], strides = [1, 1]} : vector<2x192xf32> to vector<2x64xf32>
    %768 = arith.addf %766, %767 : vector<2x64xf32>
    %769 = arith.negf %768 : vector<2x64xf32>
    %770 = math.exp %769 : vector<2x64xf32>
    %cst_118 = arith.constant 1.000000e+00 : f32
    %771 = vector.broadcast %cst_118 : f32 to vector<2x64xf32>
    %772 = arith.addf %771, %770 : vector<2x64xf32>
    %773 = arith.divf %771, %772 : vector<2x64xf32>
    %774 = vector.extract_strided_slice %762 {offsets = [0, 64], sizes = [2, 64], strides = [1, 1]} : vector<2x192xf32> to vector<2x64xf32>
    %775 = vector.extract_strided_slice %765 {offsets = [0, 64], sizes = [2, 64], strides = [1, 1]} : vector<2x192xf32> to vector<2x64xf32>
    %776 = arith.addf %774, %775 : vector<2x64xf32>
    %777 = arith.negf %776 : vector<2x64xf32>
    %778 = math.exp %777 : vector<2x64xf32>
    %cst_119 = arith.constant 1.000000e+00 : f32
    %779 = vector.broadcast %cst_119 : f32 to vector<2x64xf32>
    %780 = arith.addf %779, %778 : vector<2x64xf32>
    %781 = arith.divf %779, %780 : vector<2x64xf32>
    %782 = vector.extract_strided_slice %762 {offsets = [0, 128], sizes = [2, 64], strides = [1, 1]} : vector<2x192xf32> to vector<2x64xf32>
    %783 = vector.extract_strided_slice %765 {offsets = [0, 128], sizes = [2, 64], strides = [1, 1]} : vector<2x192xf32> to vector<2x64xf32>
    %784 = arith.mulf %773, %783 : vector<2x64xf32>
    %785 = arith.addf %782, %784 : vector<2x64xf32>
    %786 = math.tanh %785 : vector<2x64xf32>
    %cst_120 = arith.constant 1.000000e+00 : f32
    %787 = vector.broadcast %cst_120 : f32 to vector<2x64xf32>
    %788 = arith.subf %787, %781 : vector<2x64xf32>
    %789 = arith.mulf %788, %786 : vector<2x64xf32>
    %790 = arith.mulf %781, %724 : vector<2x64xf32>
    %791 = arith.addf %789, %790 : vector<2x64xf32>
    %cst_121 = arith.constant dense<0.000000e+00> : vector<2x32xf32>
    %792 = tpu.matmul %791, %18, %cst_121 {dimension_numbers = #tpu.dot_dimension_numbers<[1], [0], [0], [1], [0, 0, 1, 1], [], []>} : vector<2x64xf32>, vector<64x32xf32>, vector<2x32xf32> -> vector<2x32xf32>
    %793 = vector.broadcast %19 : vector<1x32xf32> to vector<2x32xf32>
    %794 = arith.addf %792, %793 : vector<2x32xf32>
    %cst_122 = arith.constant dense<0.000000e+00> : vector<2x192xf32>
    %795 = tpu.matmul %794, %9, %cst_122 {dimension_numbers = #tpu.dot_dimension_numbers<[1], [0], [0], [1], [0, 0, 1, 1], [], []>} : vector<2x32xf32>, vector<32x192xf32>, vector<2x192xf32> -> vector<2x192xf32>
    %796 = vector.broadcast %14 : vector<1x192xf32> to vector<2x192xf32>
    %797 = arith.addf %795, %796 : vector<2x192xf32>
    %cst_123 = arith.constant dense<0.000000e+00> : vector<2x192xf32>
    %798 = tpu.matmul %759, %10, %cst_123 {dimension_numbers = #tpu.dot_dimension_numbers<[1], [0], [0], [1], [0, 0, 1, 1], [], []>} : vector<2x64xf32>, vector<64x192xf32>, vector<2x192xf32> -> vector<2x192xf32>
    %799 = vector.broadcast %15 : vector<1x192xf32> to vector<2x192xf32>
    %800 = arith.addf %798, %799 : vector<2x192xf32>
    %801 = vector.extract_strided_slice %797 {offsets = [0, 0], sizes = [2, 64], strides = [1, 1]} : vector<2x192xf32> to vector<2x64xf32>
    %802 = vector.extract_strided_slice %800 {offsets = [0, 0], sizes = [2, 64], strides = [1, 1]} : vector<2x192xf32> to vector<2x64xf32>
    %803 = arith.addf %801, %802 : vector<2x64xf32>
    %804 = arith.negf %803 : vector<2x64xf32>
    %805 = math.exp %804 : vector<2x64xf32>
    %cst_124 = arith.constant 1.000000e+00 : f32
    %806 = vector.broadcast %cst_124 : f32 to vector<2x64xf32>
    %807 = arith.addf %806, %805 : vector<2x64xf32>
    %808 = arith.divf %806, %807 : vector<2x64xf32>
    %809 = vector.extract_strided_slice %797 {offsets = [0, 64], sizes = [2, 64], strides = [1, 1]} : vector<2x192xf32> to vector<2x64xf32>
    %810 = vector.extract_strided_slice %800 {offsets = [0, 64], sizes = [2, 64], strides = [1, 1]} : vector<2x192xf32> to vector<2x64xf32>
    %811 = arith.addf %809, %810 : vector<2x64xf32>
    %812 = arith.negf %811 : vector<2x64xf32>
    %813 = math.exp %812 : vector<2x64xf32>
    %cst_125 = arith.constant 1.000000e+00 : f32
    %814 = vector.broadcast %cst_125 : f32 to vector<2x64xf32>
    %815 = arith.addf %814, %813 : vector<2x64xf32>
    %816 = arith.divf %814, %815 : vector<2x64xf32>
    %817 = vector.extract_strided_slice %797 {offsets = [0, 128], sizes = [2, 64], strides = [1, 1]} : vector<2x192xf32> to vector<2x64xf32>
    %818 = vector.extract_strided_slice %800 {offsets = [0, 128], sizes = [2, 64], strides = [1, 1]} : vector<2x192xf32> to vector<2x64xf32>
    %819 = arith.mulf %808, %818 : vector<2x64xf32>
    %820 = arith.addf %817, %819 : vector<2x64xf32>
    %821 = math.tanh %820 : vector<2x64xf32>
    %cst_126 = arith.constant 1.000000e+00 : f32
    %822 = vector.broadcast %cst_126 : f32 to vector<2x64xf32>
    %823 = arith.subf %822, %816 : vector<2x64xf32>
    %824 = arith.mulf %823, %821 : vector<2x64xf32>
    %825 = arith.mulf %816, %759 : vector<2x64xf32>
    %826 = arith.addf %824, %825 : vector<2x64xf32>
    %cst_127 = arith.constant dense<0.000000e+00> : vector<2x192xf32>
    %827 = tpu.matmul %826, %11, %cst_127 {dimension_numbers = #tpu.dot_dimension_numbers<[1], [0], [0], [1], [0, 0, 1, 1], [], []>} : vector<2x64xf32>, vector<64x192xf32>, vector<2x192xf32> -> vector<2x192xf32>
    %828 = vector.broadcast %16 : vector<1x192xf32> to vector<2x192xf32>
    %829 = arith.addf %827, %828 : vector<2x192xf32>
    %cst_128 = arith.constant dense<0.000000e+00> : vector<2x192xf32>
    %830 = tpu.matmul %791, %12, %cst_128 {dimension_numbers = #tpu.dot_dimension_numbers<[1], [0], [0], [1], [0, 0, 1, 1], [], []>} : vector<2x64xf32>, vector<64x192xf32>, vector<2x192xf32> -> vector<2x192xf32>
    %831 = vector.broadcast %17 : vector<1x192xf32> to vector<2x192xf32>
    %832 = arith.addf %830, %831 : vector<2x192xf32>
    %833 = vector.extract_strided_slice %829 {offsets = [0, 0], sizes = [2, 64], strides = [1, 1]} : vector<2x192xf32> to vector<2x64xf32>
    %834 = vector.extract_strided_slice %832 {offsets = [0, 0], sizes = [2, 64], strides = [1, 1]} : vector<2x192xf32> to vector<2x64xf32>
    %835 = arith.addf %833, %834 : vector<2x64xf32>
    %836 = arith.negf %835 : vector<2x64xf32>
    %837 = math.exp %836 : vector<2x64xf32>
    %cst_129 = arith.constant 1.000000e+00 : f32
    %838 = vector.broadcast %cst_129 : f32 to vector<2x64xf32>
    %839 = arith.addf %838, %837 : vector<2x64xf32>
    %840 = arith.divf %838, %839 : vector<2x64xf32>
    %841 = vector.extract_strided_slice %829 {offsets = [0, 64], sizes = [2, 64], strides = [1, 1]} : vector<2x192xf32> to vector<2x64xf32>
    %842 = vector.extract_strided_slice %832 {offsets = [0, 64], sizes = [2, 64], strides = [1, 1]} : vector<2x192xf32> to vector<2x64xf32>
    %843 = arith.addf %841, %842 : vector<2x64xf32>
    %844 = arith.negf %843 : vector<2x64xf32>
    %845 = math.exp %844 : vector<2x64xf32>
    %cst_130 = arith.constant 1.000000e+00 : f32
    %846 = vector.broadcast %cst_130 : f32 to vector<2x64xf32>
    %847 = arith.addf %846, %845 : vector<2x64xf32>
    %848 = arith.divf %846, %847 : vector<2x64xf32>
    %849 = vector.extract_strided_slice %829 {offsets = [0, 128], sizes = [2, 64], strides = [1, 1]} : vector<2x192xf32> to vector<2x64xf32>
    %850 = vector.extract_strided_slice %832 {offsets = [0, 128], sizes = [2, 64], strides = [1, 1]} : vector<2x192xf32> to vector<2x64xf32>
    %851 = arith.mulf %840, %850 : vector<2x64xf32>
    %852 = arith.addf %849, %851 : vector<2x64xf32>
    %853 = math.tanh %852 : vector<2x64xf32>
    %cst_131 = arith.constant 1.000000e+00 : f32
    %854 = vector.broadcast %cst_131 : f32 to vector<2x64xf32>
    %855 = arith.subf %854, %848 : vector<2x64xf32>
    %856 = arith.mulf %855, %853 : vector<2x64xf32>
    %857 = arith.mulf %848, %791 : vector<2x64xf32>
    %858 = arith.addf %856, %857 : vector<2x64xf32>
    %cst_132 = arith.constant dense<0.000000e+00> : vector<2x32xf32>
    %859 = tpu.matmul %858, %18, %cst_132 {dimension_numbers = #tpu.dot_dimension_numbers<[1], [0], [0], [1], [0, 0, 1, 1], [], []>} : vector<2x64xf32>, vector<64x32xf32>, vector<2x32xf32> -> vector<2x32xf32>
    %860 = vector.broadcast %19 : vector<1x32xf32> to vector<2x32xf32>
    %861 = arith.addf %859, %860 : vector<2x32xf32>
    %862 = tpu.concatenate %660, %727, %794, %861 in 1 : vector<2x32xf32>, vector<2x32xf32>, vector<2x32xf32>, vector<2x32xf32> -> vector<2x128xf32>
    %c0_133 = arith.constant 0 : index
    %c0_134 = arith.constant 0 : index
    %863 = vector.load %arg8[%c0_133, %c0_134] : memref<2x128xf32, #tpu.memory_space<vmem>>, vector<2x128xf32>
    tpu.vector_store %arg8[%c0_133, %c0_134], %862 {strides = array<i32>} : memref<2x128xf32, #tpu.memory_space<vmem>>, vector<2x128xf32>,
    return
  }
  func.func @transform_0(%arg0: i32) -> (i32, i32, i32) {
    %c0_i32 = arith.constant 0 : i32
    %c0_i32_0 = arith.constant 0 : i32
    %c0_i32_1 = arith.constant 0 : i32
    %c0_i32_2 = arith.constant 0 : i32
    return %c0_i32, %c0_i32_0, %c0_i32_1 : i32, i32, i32
  }
  func.func @transform_1(%arg0: i32) -> (i32, i32, i32) {
    %c0_i32 = arith.constant 0 : i32
    %c0_i32_0 = arith.constant 0 : i32
    %c0_i32_1 = arith.constant 0 : i32
    %c0_i32_2 = arith.constant 0 : i32
    return %c0_i32, %c0_i32_0, %c0_i32_1 : i32, i32, i32
  }
  func.func @transform_2(%arg0: i32) -> (i32, i32) {
    %c0_i32 = arith.constant 0 : i32
    %c0_i32_0 = arith.constant 0 : i32
    %c0_i32_1 = arith.constant 0 : i32
    return %c0_i32, %c0_i32_0 : i32, i32
  }
  func.func @transform_3(%arg0: i32) -> (i32, i32) {
    %c0_i32 = arith.constant 0 : i32
    %c0_i32_0 = arith.constant 0 : i32
    %c0_i32_1 = arith.constant 0 : i32
    return %c0_i32, %c0_i32_0 : i32, i32
  }
  func.func @transform_4(%arg0: i32) -> (i32, i32) {
    %c0_i32 = arith.constant 0 : i32
    %c0_i32_0 = arith.constant 0 : i32
    %c0_i32_1 = arith.constant 0 : i32
    return %c0_i32, %c0_i32_0 : i32, i32
  }
  func.func @transform_5(%arg0: i32) -> (i32, i32) {
    %c0_i32 = arith.constant 0 : i32
    %c0_i32_0 = arith.constant 0 : i32
    %c0_i32_1 = arith.constant 0 : i32
    return %c0_i32, %c0_i32_0 : i32, i32
  }
  func.func @transform_6(%arg0: i32) -> (i32, i32) {
    %c0_i32 = arith.constant 0 : i32
    %c0_i32_0 = arith.constant 0 : i32
    %c0_i32_1 = arith.constant 0 : i32
    return %c0_i32, %c0_i32_0 : i32, i32
  }
  func.func @transform_7(%arg0: i32) -> (i32, i32) {
    %c0_i32 = arith.constant 0 : i32
    %c0_i32_0 = arith.constant 0 : i32
    %c0_i32_1 = arith.constant 0 : i32
    return %c0_i32, %c0_i32_0 : i32, i32
  }
}

</mosaic_0001>

<llo_original>
// kernel: _forward_core.1
$region0: #{_forward_core.1}
  #allocation0 [shape = 'u32[]', space=smem, size = 0x4, offset = 0x4, fixed_abs, tag = 'smem constant byte address 0x4 - core index']
  #allocation1 [shape = 'u32[144,128]{1,0:T(1,128)}', space=vmem, size = 0x12000, scoped, tag = 'internal scratch']
  %s0 = inlined_call_operand.vmem [shape: f32[2,8,32], index: 0, kind: input, shape index: {}]
  %s1 = inlined_call_operand.vmem [shape: f32[2,8,32], index: 1, kind: input, shape index: {}]
  %s2 = inlined_call_operand.vmem [shape: f32[384,192], index: 2, kind: input, shape index: {}]
  %s3 = inlined_call_operand.vmem [shape: f32[4,192], index: 3, kind: input, shape index: {}]
  %s4 = inlined_call_operand.vmem [shape: f32[224,192], index: 4, kind: input, shape index: {}]
  %s5 = inlined_call_operand.vmem [shape: f32[4,192], index: 5, kind: input, shape index: {}]
  %s6 = inlined_call_operand.vmem [shape: f32[65,32], index: 6, kind: input, shape index: {}]
  %s7 = inlined_call_operand.vmem [shape: f32[2,128], index: 7, kind: output, shape index: {}]
  %s8 = sld [smem:[#allocation0]]
  $region38: #{_forward_core.1} parent=0
    _
  %s10 = ssub.s32 1, %s8
  %s11 = scalar_select 0, %s10, %s8
  // Predicated region
  $region2: #{_forward_core.1} parent=0 // pred_check
    _
  $region3: #{_forward_core.1} parent=0 // pred_check_branch
    %13 = sbr.rel (0) target = $region5
  $region4: #{_forward_core.1} parent=0 // pred_region
    _
  $region5: #{_forward_core.1} parent=0 // pred_fallthru
    _
  // Predicated region
  $region6: #{_forward_core.1} parent=0 // pred_check
    _
  $region7: #{_forward_core.1} parent=0 // pred_check_branch
    %15 = sbr.rel (0) target = $region9
  $region8: #{_forward_core.1} parent=0 // pred_region
    _
  $region9: #{_forward_core.1} parent=0 // pred_fallthru
    _
  // Predicated region
  $region10: #{_forward_core.1} parent=0 // pred_check
    _
  $region11: #{_forward_core.1} parent=0 // pred_check_branch
    %17 = sbr.rel (0) target = $region13
  $region12: #{_forward_core.1} parent=0 // pred_region
    _
  $region13: #{_forward_core.1} parent=0 // pred_fallthru
    _
  // Predicated region
  $region14: #{_forward_core.1} parent=0 // pred_check
    _
  $region15: #{_forward_core.1} parent=0 // pred_check_branch
    %19 = sbr.rel (0) target = $region17
  $region16: #{_forward_core.1} parent=0 // pred_region
    _
  $region17: #{_forward_core.1} parent=0 // pred_fallthru
    _
  // Predicated region
  $region18: #{_forward_core.1} parent=0 // pred_check
    _
  $region19: #{_forward_core.1} parent=0 // pred_check_branch
    %21 = sbr.rel (0) target = $region21
  $region20: #{_forward_core.1} parent=0 // pred_region
    _
  $region21: #{_forward_core.1} parent=0 // pred_fallthru
    _
  // Predicated region
  $region22: #{_forward_core.1} parent=0 // pred_check
    _
  $region23: #{_forward_core.1} parent=0 // pred_check_branch
    %23 = sbr.rel (0) target = $region25
  $region24: #{_forward_core.1} parent=0 // pred_region
    _
  $region25: #{_forward_core.1} parent=0 // pred_fallthru
    _
  // Predicated region
  $region26: #{_forward_core.1} parent=0 // pred_check
    _
  $region27: #{_forward_core.1} parent=0 // pred_check_branch
    %25 = sbr.rel (0) target = $region29
  $region28: #{_forward_core.1} parent=0 // pred_region
    _
  $region29: #{_forward_core.1} parent=0 // pred_fallthru
    _
  %v26 = vld [vmem:[%s2] sm:$0xff]
  %v27 = vld [vmem:[%s2 + $0x8] sm:$0xff]
  %v28 = vld [vmem:[%s2 + $0x10] sm:$0xff]
  %v29 = vld [vmem:[%s2 + $0x18] sm:$0xff]
  %v30 = vld [vmem:[%s2 + $0x20] sm:$0xff]
  %v31 = vld [vmem:[%s2 + $0x28] sm:$0xff]
  %v32 = vld [vmem:[%s2 + $0x30] sm:$0xff]
  %v33 = vld [vmem:[%s2 + $0x38] sm:$0xff]
  %v34 = vld [vmem:[%s2 + $0x40] sm:$0xff]
  %v35 = vld [vmem:[%s2 + $0x48] sm:$0xff]
  %v36 = vld [vmem:[%s2 + $0x50] sm:$0xff]
  %v37 = vld [vmem:[%s2 + $0x58] sm:$0xff]
  %v38 = vld [vmem:[%s2 + $0x60] sm:$0xff]
  %v39 = vld [vmem:[%s2 + $0x68] sm:$0xff]
  %v40 = vld [vmem:[%s2 + $0x70] sm:$0xff]
  %v41 = vld [vmem:[%s2 + $0x78] sm:$0xff]
  %v42 = vld [vmem:[%s2 + $0x80] sm:$0xff]
  %v43 = vld [vmem:[%s2 + $0x88] sm:$0xff]
  %v44 = vld [vmem:[%s2 + $0x90] sm:$0xff]
  %v45 = vld [vmem:[%s2 + $0x98] sm:$0xff]
  %v46 = vld [vmem:[%s2 + $0xa0] sm:$0xff]
  %v47 = vld [vmem:[%s2 + $0xa8] sm:$0xff]
  %v48 = vld [vmem:[%s2 + $0xb0] sm:$0xff]
  %v49 = vld [vmem:[%s2 + $0xb8] sm:$0xff]
  %v50 = vld [vmem:[%s2 + $0xc0] sm:$0xff]
  %v51 = vld [vmem:[%s2 + $0xc8] sm:$0xff]
  %v52 = vld [vmem:[%s2 + $0xd0] sm:$0xff]
  %v53 = vld [vmem:[%s2 + $0xd8] sm:$0xff]
  %v54 = vld [vmem:[%s2 + $0xe0] sm:$0xff]
  %v55 = vld [vmem:[%s2 + $0xe8] sm:$0xff]
  %v56 = vld [vmem:[%s2 + $0xf0] sm:$0xff]
  %v57 = vld [vmem:[%s2 + $0xf8] sm:$0xff]
  %v58 = vld [vmem:[%s2 + $0x100] sm:$0xff]
  %v59 = vld [vmem:[%s2 + $0x108] sm:$0xff]
  %v60 = vld [vmem:[%s2 + $0x110] sm:$0xff]
  %v61 = vld [vmem:[%s2 + $0x118] sm:$0xff]
  %v62 = vld [vmem:[%s2 + $0x120] sm:$0xff]
  %v63 = vld [vmem:[%s2 + $0x128] sm:$0xff]
  %v64 = vld [vmem:[%s2 + $0x130] sm:$0xff]
  %v65 = vld [vmem:[%s2 + $0x138] sm:$0xff]
  %v66 = vld [vmem:[%s2 + $0x140] sm:$0xff]
  %v67 = vld [vmem:[%s2 + $0x148] sm:$0xff]
  %v68 = vld [vmem:[%s2 + $0x150] sm:$0xff]
  %v69 = vld [vmem:[%s2 + $0x158] sm:$0xff]
  %v70 = vld [vmem:[%s2 + $0x160] sm:$0xff]
  %v71 = vld [vmem:[%s2 + $0x168] sm:$0xff]
  %v72 = vld [vmem:[%s2 + $0x170] sm:$0xff]
  %v73 = vld [vmem:[%s2 + $0x178] sm:$0xff]
  %v74 = vld [vmem:[%s2 + $0x180] sm:$0xff]
  %v75 = vld [vmem:[%s2 + $0x188] sm:$0xff]
  %v76 = vld [vmem:[%s2 + $0x190] sm:$0xff]
  %v77 = vld [vmem:[%s2 + $0x198] sm:$0xff]
  %v78 = vld [vmem:[%s2 + $0x1a0] sm:$0xff]
  %v79 = vld [vmem:[%s2 + $0x1a8] sm:$0xff]
  %v80 = vld [vmem:[%s2 + $0x1b0] sm:$0xff]
  %v81 = vld [vmem:[%s2 + $0x1b8] sm:$0xff]
  %v82 = vld [vmem:[%s2 + $0x1c0] sm:$0xff]
  %v83 = vld [vmem:[%s2 + $0x1c8] sm:$0xff]
  %v84 = vld [vmem:[%s2 + $0x1d0] sm:$0xff]
  %v85 = vld [vmem:[%s2 + $0x1d8] sm:$0xff]
  %v86 = vld [vmem:[%s2 + $0x1e0] sm:$0xff]
  %v87 = vld [vmem:[%s2 + $0x1e8] sm:$0xff]
  %v88 = vld [vmem:[%s2 + $0x1f0] sm:$0xff]
  %v89 = vld [vmem:[%s2 + $0x1f8] sm:$0xff]
  %v90 = vld [vmem:[%s2 + $0x200] sm:$0xff]
  %v91 = vld [vmem:[%s2 + $0x208] sm:$0xff]
  %v92 = vld [vmem:[%s2 + $0x210] sm:$0xff]
  %v93 = vld [vmem:[%s2 + $0x218] sm:$0xff]
  %v94 = vld [vmem:[%s2 + $0x220] sm:$0xff]
  %v95 = vld [vmem:[%s2 + $0x228] sm:$0xff]
  %v96 = vld [vmem:[%s2 + $0x230] sm:$0xff]
  %v97 = vld [vmem:[%s2 + $0x238] sm:$0xff]
  %v98 = vld [vmem:[%s2 + $0x240] sm:$0xff]
  %v99 = vld [vmem:[%s2 + $0x248] sm:$0xff]
  %v100 = vld [vmem:[%s2 + $0x250] sm:$0xff]
  %v101 = vld [vmem:[%s2 + $0x258] sm:$0xff]
  %v102 = vld [vmem:[%s2 + $0x260] sm:$0xff]
  %v103 = vld [vmem:[%s2 + $0x268] sm:$0xff]
  %v104 = vld [vmem:[%s2 + $0x270] sm:$0xff]
  %v105 = vld [vmem:[%s2 + $0x278] sm:$0xff]
  %v106 = vld [vmem:[%s2 + $0x280] sm:$0xff]
  %v107 = vld [vmem:[%s2 + $0x288] sm:$0xff]
  %v108 = vld [vmem:[%s2 + $0x290] sm:$0xff]
  %v109 = vld [vmem:[%s2 + $0x298] sm:$0xff]
  %v110 = vld [vmem:[%s2 + $0x2a0] sm:$0xff]
  %v111 = vld [vmem:[%s2 + $0x2a8] sm:$0xff]
  %v112 = vld [vmem:[%s2 + $0x2b0] sm:$0xff]
  %v113 = vld [vmem:[%s2 + $0x2b8] sm:$0xff]
  %v114 = vld [vmem:[%s2 + $0x2c0] sm:$0xff]
  %v115 = vld [vmem:[%s2 + $0x2c8] sm:$0xff]
  %v116 = vld [vmem:[%s2 + $0x2d0] sm:$0xff]
  %v117 = vld [vmem:[%s2 + $0x2d8] sm:$0xff]
  %v118 = vld [vmem:[%s2 + $0x2e0] sm:$0xff]
  %v119 = vld [vmem:[%s2 + $0x2e8] sm:$0xff]
  %v120 = vld [vmem:[%s2 + $0x2f0] sm:$0xff]
  %v121 = vld [vmem:[%s2 + $0x2f8] sm:$0xff]
  %v122 = vld [vmem:[%s3] sm:$0xff]
  %v123 = vld [vmem:[%s4] sm:$0xff]
  %v124 = vld [vmem:[%s4 + $0x8] sm:$0xff]
  %v125 = vld [vmem:[%s4 + $0x10] sm:$0xff]
  %v126 = vld [vmem:[%s4 + $0x18] sm:$0xff]
  %v127 = vld [vmem:[%s4 + $0x20] sm:$0xff]
  %v128 = vld [vmem:[%s4 + $0x28] sm:$0xff]
  %v129 = vld [vmem:[%s4 + $0x30] sm:$0xff]
  %v130 = vld [vmem:[%s4 + $0x38] sm:$0xff]
  %v131 = vld [vmem:[%s4 + $0x40] sm:$0xff]
  %v132 = vld [vmem:[%s4 + $0x48] sm:$0xff]
  %v133 = vld [vmem:[%s4 + $0x50] sm:$0xff]
  %v134 = vld [vmem:[%s4 + $0x58] sm:$0xff]
  %v135 = vld [vmem:[%s4 + $0x60] sm:$0xff]
  %v136 = vld [vmem:[%s4 + $0x68] sm:$0xff]
  %v137 = vld [vmem:[%s4 + $0x70] sm:$0xff]
  %v138 = vld [vmem:[%s4 + $0x78] sm:$0xff]
  %v139 = vld [vmem:[%s4 + $0x80] sm:$0xff]
  %v140 = vld [vmem:[%s4 + $0x88] sm:$0xff]
  %v141 = vld [vmem:[%s4 + $0x90] sm:$0xff]
  %v142 = vld [vmem:[%s4 + $0x98] sm:$0xff]
  %v143 = vld [vmem:[%s4 + $0xa0] sm:$0xff]
  %v144 = vld [vmem:[%s4 + $0xa8] sm:$0xff]
  %v145 = vld [vmem:[%s4 + $0xb0] sm:$0xff]
  %v146 = vld [vmem:[%s4 + $0xb8] sm:$0xff]
  %v147 = vld [vmem:[%s4 + $0xc0] sm:$0xff]
  %v148 = vld [vmem:[%s4 + $0xc8] sm:$0xff]
  %v149 = vld [vmem:[%s4 + $0xd0] sm:$0xff]
  %v150 = vld [vmem:[%s4 + $0xd8] sm:$0xff]
  %v151 = vld [vmem:[%s4 + $0xe0] sm:$0xff]
  %v152 = vld [vmem:[%s4 + $0xe8] sm:$0xff]
  %v153 = vld [vmem:[%s4 + $0xf0] sm:$0xff]
  %v154 = vld [vmem:[%s4 + $0xf8] sm:$0xff]
  %v155 = vld [vmem:[%s4 + $0x100] sm:$0xff]
  %v156 = vld [vmem:[%s4 + $0x108] sm:$0xff]
  %v157 = vld [vmem:[%s4 + $0x110] sm:$0xff]
  %v158 = vld [vmem:[%s4 + $0x118] sm:$0xff]
  %v159 = vld [vmem:[%s4 + $0x120] sm:$0xff]
  %v160 = vld [vmem:[%s4 + $0x128] sm:$0xff]
  %v161 = vld [vmem:[%s4 + $0x130] sm:$0xff]
  %v162 = vld [vmem:[%s4 + $0x138] sm:$0xff]
  %v163 = vld [vmem:[%s4 + $0x140] sm:$0xff]
  %v164 = vld [vmem:[%s4 + $0x148] sm:$0xff]
  %v165 = vld [vmem:[%s4 + $0x150] sm:$0xff]
  %v166 = vld [vmem:[%s4 + $0x158] sm:$0xff]
  %v167 = vld [vmem:[%s4 + $0x160] sm:$0xff]
  %v168 = vld [vmem:[%s4 + $0x168] sm:$0xff]
  %v169 = vld [vmem:[%s4 + $0x170] sm:$0xff]
  %v170 = vld [vmem:[%s4 + $0x178] sm:$0xff]
  %v171 = vld [vmem:[%s4 + $0x180] sm:$0xff]
  %v172 = vld [vmem:[%s4 + $0x188] sm:$0xff]
  %v173 = vld [vmem:[%s4 + $0x190] sm:$0xff]
  %v174 = vld [vmem:[%s4 + $0x198] sm:$0xff]
  %v175 = vld [vmem:[%s4 + $0x1a0] sm:$0xff]
  %v176 = vld [vmem:[%s4 + $0x1a8] sm:$0xff]
  %v177 = vld [vmem:[%s4 + $0x1b0] sm:$0xff]
  %v178 = vld [vmem:[%s4 + $0x1b8] sm:$0xff]
  %v179 = vld [vmem:[%s5] sm:$0xff]
  %v180 = vld [vmem:[%s6] sm:$0xff]
  %v181 = vld [vmem:[%s6 + $0x8] sm:$0xff]
  %v182 = vld [vmem:[%s6 + $0x10] sm:$0xff]
  %v183 = vld [vmem:[%s6 + $0x18] sm:$0xff]
  %v184 = vld [vmem:[%s6 + $0x20] sm:$0xff]
  %v185 = vld [vmem:[%s6 + $0x28] sm:$0xff]
  %v186 = vld [vmem:[%s6 + $0x30] sm:$0xff]
  %v187 = vld [vmem:[%s6 + $0x38] sm:$0xff]
  %v188 = vld [vmem:[%s6 + $0x40] sm:$0x1]
  %v189 = vld [vmem:[%s0] sm:$0xff]
  %v190 = vld [vmem:[%s0 + $0x8] sm:$0xff]
  %v191 = vld [vmem:[%s1] sm:$0xff]
  %v192 = vld [vmem:[%s1 + $0x8] sm:$0xff]
  %v195 = vrot.slane %v190, 7
  %vm196 = vcmask 1041409
  %v197 = vsel %vm196, %v195, %v189
  %v201 = vrot.slane %v192, 7
  %v202 = vsel %vm196, %v201, %v191
  %203 = vrot.lane.b32.xlu0 %v202, 32
  %v204 = vpop.permute.xlu0 %203
  %v206 = vrot.slane %v189, 7
  %v207 = vrot.slane %v190, 6
  %v208 = vsel %vm196, %v207, %v206
  %209 = vrot.lane.b32.xlu0 %v208, 64
  %v210 = vpop.permute.xlu0 %209
  %v212 = vrot.slane %v191, 7
  %v213 = vrot.slane %v192, 6
  %v214 = vsel %vm196, %v213, %v212
  %215 = vrot.lane.b32.xlu0 %v214, 96
  %v216 = vpop.permute.xlu0 %215
  %vm218 = vcmask 261120
  %v219 = vsel %vm218, %v197, %v204
  %vm220 = vcmask 523264
  %v221 = vsel %vm220, %v219, %v210
  %vm222 = vcmask 785408
  %v223 = vsel %vm222, %v221, %v216
  %vm224 = vcmask 1042434
  %v225 = vsel %vm224, %v195, %v189
  %v227 = vsel %vm224, %v201, %v191
  %228 = vrot.lane.b32.xlu0 %v227, 32
  %v229 = vpop.permute.xlu0 %228
  %v231 = vrot.slane %v189, 5
  %v232 = vrot.slane %v190, 4
  %v233 = vsel %vm224, %v232, %v231
  %234 = vrot.lane.b32.xlu0 %v233, 64
  %v235 = vpop.permute.xlu0 %234
  %v237 = vrot.slane %v191, 5
  %v238 = vrot.slane %v192, 4
  %v239 = vsel %vm224, %v238, %v237
  %240 = vrot.lane.b32.xlu0 %v239, 96
  %v241 = vpop.permute.xlu0 %240
  %v243 = vsel %vm218, %v225, %v229
  %v244 = vsel %vm220, %v243, %v235
  %v245 = vsel %vm222, %v244, %v241
  %vm246 = vcmask 1043459
  %v247 = vsel %vm246, %v195, %v189
  %v249 = vsel %vm246, %v201, %v191
  %250 = vrot.lane.b32.xlu0 %v249, 32
  %v251 = vpop.permute.xlu0 %250
  %v253 = vrot.slane %v189, 3
  %v254 = vrot.slane %v190, 2
  %v255 = vsel %vm246, %v254, %v253
  %256 = vrot.lane.b32.xlu0 %v255, 64
  %v257 = vpop.permute.xlu0 %256
  %v259 = vrot.slane %v191, 3
  %v260 = vrot.slane %v192, 2
  %v261 = vsel %vm246, %v260, %v259
  %262 = vrot.lane.b32.xlu0 %v261, 96
  %v263 = vpop.permute.xlu0 %262
  %v265 = vsel %vm218, %v247, %v251
  %v266 = vsel %vm220, %v265, %v257
  %v267 = vsel %vm222, %v266, %v263
  %vm268 = vcmask 1044484
  %v269 = vsel %vm268, %v195, %v189
  %v271 = vsel %vm268, %v201, %v191
  %272 = vrot.lane.b32.xlu0 %v271, 32
  %v273 = vpop.permute.xlu0 %272
  %v275 = vrot.slane %v189, 1
  %v276 = vsel %vm268, %v190, %v275
  %277 = vrot.lane.b32.xlu0 %v276, 64
  %v278 = vpop.permute.xlu0 %277
  %v280 = vrot.slane %v191, 1
  %v281 = vsel %vm268, %v192, %v280
  %282 = vrot.lane.b32.xlu0 %v281, 96
  %v283 = vpop.permute.xlu0 %282
  %v285 = vsel %vm218, %v269, %v273
  %v286 = vsel %vm220, %v285, %v278
  %v287 = vsel %vm222, %v286, %v283
  %vm288 = vcmask 1045509
  %v289 = vsel %vm288, %v195, %v189
  %v291 = vsel %vm288, %v201, %v191
  %292 = vrot.lane.b32.xlu0 %v291, 32
  %v293 = vpop.permute.xlu0 %292
  %v295 = vsel %vm288, %v207, %v206
  %296 = vrot.lane.b32.xlu0 %v295, 64
  %v297 = vpop.permute.xlu0 %296
  %v299 = vsel %vm288, %v213, %v212
  %300 = vrot.lane.b32.xlu0 %v299, 96
  %v301 = vpop.permute.xlu0 %300
  %v303 = vsel %vm218, %v289, %v293
  %v304 = vsel %vm220, %v303, %v297
  %v305 = vsel %vm222, %v304, %v301
  %vm306 = vcmask 1046534
  %v307 = vsel %vm306, %v195, %v189
  %v309 = vsel %vm306, %v201, %v191
  %310 = vrot.lane.b32.xlu0 %v309, 32
  %v311 = vpop.permute.xlu0 %310
  %v313 = vsel %vm306, %v232, %v231
  %314 = vrot.lane.b32.xlu0 %v313, 64
  %v315 = vpop.permute.xlu0 %314
  %v317 = vsel %vm306, %v238, %v237
  %318 = vrot.lane.b32.xlu0 %v317, 96
  %v319 = vpop.permute.xlu0 %318
  %v321 = vsel %vm218, %v307, %v311
  %v322 = vsel %vm220, %v321, %v315
  %v323 = vsel %vm222, %v322, %v319
  %vm324 = vcmask 1047559
  %v325 = vsel %vm324, %v195, %v189
  %v327 = vsel %vm324, %v201, %v191
  %328 = vrot.lane.b32.xlu0 %v327, 32
  %v329 = vpop.permute.xlu0 %328
  %v331 = vsel %vm324, %v254, %v253
  %332 = vrot.lane.b32.xlu0 %v331, 64
  %v333 = vpop.permute.xlu0 %332
  %v335 = vsel %vm324, %v260, %v259
  %336 = vrot.lane.b32.xlu0 %v335, 96
  %v337 = vpop.permute.xlu0 %336
  %v339 = vsel %vm218, %v325, %v329
  %v340 = vsel %vm220, %v339, %v333
  %v341 = vsel %vm222, %v340, %v337
  %344 = vrot.lane.b32.xlu0 %v191, 32
  %v345 = vpop.permute.xlu0 %344
  %346 = vrot.lane.b32.xlu0 %v201, 32
  %v347 = vpop.permute.xlu0 %346
  %350 = vrot.lane.b32.xlu0 %v275, 64
  %v351 = vpop.permute.xlu0 %350
  %352 = vrot.lane.b32.xlu0 %v190, 64
  %v353 = vpop.permute.xlu0 %352
  %356 = vrot.lane.b32.xlu0 %v280, 96
  %v357 = vpop.permute.xlu0 %356
  %358 = vrot.lane.b32.xlu0 %v192, 96
  %v359 = vpop.permute.xlu0 %358
  %v362 = vsel %vm218, %v189, %v345
  %v363 = vsel %vm218, %v195, %v347
  %v364 = vsel %vm220, %v362, %v351
  %v365 = vsel %vm220, %v363, %v353
  %v366 = vsel %vm222, %v364, %v357
  %v367 = vsel %vm222, %v365, %v359
  %v369 = vrot.slane %v245, 7
  %v372 = vrot.slane %v267, 6
  %v375 = vrot.slane %v287, 5
  %v378 = vrot.slane %v305, 4
  %v381 = vrot.slane %v323, 3
  %v384 = vrot.slane %v341, 2
  %vm388 = vcmask 1046528
  %v389 = vrot.slane %v366, 1
  %v390 = vrot.slane %v367, 1
  %v391 = vsel %vm388, %v389, %v390
  %vm393 = vcmask 1041408
  %v394 = vsel %vm393, %v223, %v369
  %vm395 = vcmask 1043456
  %v396 = vsel %vm395, %v394, %v372
  %vm397 = vcmask 1045504
  %v398 = vsel %vm397, %v396, %v375
  %v399 = vsel %vm393, %v378, %v381
  %v400 = vsel %vm395, %v399, %v384
  %v401 = vsel %vm397, %v400, %v391
  %v403 = vlaneseq
  %v404 = vshrl.u32 %v403, 7
  %v405 = vsub.s32 0, %v404
  %v406 = vrot.slane %v122, %v405
  %v407 = vlaneseq
  %v408 = vshrl.u32 %v407, 7
  %v409 = vsub.s32 4, %v408
  %v410 = vrot.slane %v122, %v409
  %v413 = vlaneseq
  %v414 = vshrl.u32 %v413, 7
  %v415 = vsub.s32 0, %v414
  %v416 = vrot.slane %v406, %v415
  %v417 = vlaneseq
  %v418 = vshrl.u32 %v417, 7
  %v419 = vsub.s32 0, %v418
  %v420 = vrot.slane %v410, %v419
  %421 = vmatprep.subr.mxu0 %v57
  %422 = vmatpush1.msra.mxu0 %v56
  %423 = vmatprep.subr.mxu0 %v55
  %424 = vmatpush1.msra.mxu0 %v54
  %425 = vmatprep.subr.mxu0 %v53
  %426 = vmatpush1.msra.mxu0 %v52
  %427 = vmatprep.subr.mxu0 %v51
  %428 = vmatpush1.msra.mxu0 %v50
  %429 = vmatprep.subr.mxu0 %v49
  %430 = vmatpush1.msra.mxu0 %v48
  %431 = vmatprep.subr.mxu0 %v47
  %432 = vmatpush1.msra.mxu0 %v46
  %433 = vmatprep.subr.mxu0 %v45
  %434 = vmatpush1.msra.mxu0 %v44
  %435 = vmatprep.subr.mxu0 %v43
  %436 = vmatpush1.msra.mxu0 %v42
  %437 = vmatprep.subr.mxu0 %v41
  %438 = vmatpush1.msra.mxu0 %v40
  %439 = vmatprep.subr.mxu0 %v39
  %440 = vmatpush1.msra.mxu0 %v38
  %441 = vmatprep.subr.mxu0 %v37
  %442 = vmatpush1.msra.mxu0 %v36
  %443 = vmatprep.subr.mxu0 %v35
  %444 = vmatpush1.msra.mxu0 %v34
  %445 = vmatprep.subr.mxu0 %v33
  %446 = vmatpush1.msra.mxu0 %v32
  %447 = vmatprep.subr.mxu0 %v31
  %448 = vmatpush1.msra.mxu0 %v30
  %449 = vmatprep.subr.mxu0 %v29
  %450 = vmatpush1.msra.mxu0 %v28
  %451 = vmatprep.subr.mxu0 %v27
  %452 = vmatpush1.msra.mxu0 %v26
  %453 = vmatprep.subr.mxu0 0.0
  %454 = vmatpush2.msra.mxu0 0.0
  %455 = vmatprep.subr.mxu0 0.0
  %456 = vmatpush2.msra.mxu0 0.0
  %457 = vmatprep.subr.mxu0 0.0
  %458 = vmatpush2.msra.mxu0 0.0
  %459 = vmatprep.subr.mxu0 0.0
  %460 = vmatpush2.msra.mxu0 0.0
  %461 = vmatprep.subr.mxu0 0.0
  %462 = vmatpush2.msra.mxu0 0.0
  %463 = vmatprep.subr.mxu0 0.0
  %464 = vmatpush2.msra.mxu0 0.0
  %465 = vmatprep.subr.mxu0 0.0
  %466 = vmatpush2.msra.mxu0 0.0
  %467 = vmatprep.subr.mxu0 0.0
  %468 = vmatpush2.msra.mxu0 0.0
  %469 = vmatprep.subr.mxu0 0.0
  %470 = vmatpush2.msra.mxu0 0.0
  %471 = vmatprep.subr.mxu0 0.0
  %472 = vmatpush2.msra.mxu0 0.0
  %473 = vmatprep.subr.mxu0 0.0
  %474 = vmatpush2.msra.mxu0 0.0
  %475 = vmatprep.subr.mxu0 0.0
  %476 = vmatpush2.msra.mxu0 0.0
  %477 = vmatprep.subr.mxu0 0.0
  %478 = vmatpush2.msra.mxu0 0.0
  %479 = vmatprep.subr.mxu0 0.0
  %480 = vmatpush2.msra.mxu0 0.0
  %481 = vmatprep.subr.mxu0 0.0
  %482 = vmatpush2.msra.mxu0 0.0
  %483 = vmatprep.subr.mxu0 0.0
  %484 = vmatpush2.msra.mxu0 0.0
  %485 = vmatprep.mubr.f32.mxu0 0.0
  %486 = vmatmul.mubr.f32.gmra.mxu0 %v398
  %v487 = vpop.f32.mrf.mxu0
  %v488 = vadd.f32 %v416, %v487
  %v489 = vpop.f32.mrf.mxu0
  %v490 = vadd.f32 %v420, %v489
  %491 = vmatprep.mubr.f32.mxu0 0.0
  %492 = vmatmul.mubr.f32.gmra.mxu0 %v401
  %v493 = vpop.f32.mrf.mxu0
  %v494 = vadd.f32 %v416, %v493
  %v495 = vpop.f32.mrf.mxu0
  %v496 = vadd.f32 %v420, %v495
  %497 = vdwg.mxu0
  %v498 = vlaneseq
  %v499 = vshrl.u32 %v498, 7
  %v500 = vsub.s32 1, %v499
  %v501 = vrot.slane %v122, %v500
  %v502 = vlaneseq
  %v503 = vshrl.u32 %v502, 7
  %v504 = vsub.s32 5, %v503
  %v505 = vrot.slane %v122, %v504
  %v508 = vlaneseq
  %v509 = vshrl.u32 %v508, 7
  %v510 = vsub.s32 1, %v509
  %v511 = vrot.slane %v501, %v510
  %v512 = vlaneseq
  %v513 = vshrl.u32 %v512, 7
  %v514 = vsub.s32 1, %v513
  %v515 = vrot.slane %v505, %v514
  %v517 = vsel %vm220, 0.0, 0
  %519 = vmatprep.subr.mxu0 0.0
  %520 = vmatpush1.msra.mxu0 0.0
  %521 = vmatprep.subr.mxu0 0.0
  %522 = vmatpush1.msra.mxu0 0.0
  %523 = vmatprep.subr.mxu0 0.0
  %524 = vmatpush1.msra.mxu0 0.0
  %525 = vmatprep.subr.mxu0 0.0
  %526 = vmatpush1.msra.mxu0 0.0
  %527 = vmatprep.subr.mxu0 0.0
  %528 = vmatpush1.msra.mxu0 0.0
  %529 = vmatprep.subr.mxu0 0.0
  %530 = vmatpush1.msra.mxu0 0.0
  %531 = vmatprep.subr.mxu0 0.0
  %532 = vmatpush1.msra.mxu0 0.0
  %533 = vmatprep.subr.mxu0 0.0
  %534 = vmatpush1.msra.mxu0 0.0
  %535 = vmatprep.subr.mxu0 %v73
  %536 = vmatpush1.msra.mxu0 %v72
  %537 = vmatprep.subr.mxu0 %v71
  %538 = vmatpush1.msra.mxu0 %v70
  %539 = vmatprep.subr.mxu0 %v69
  %540 = vmatpush1.msra.mxu0 %v68
  %541 = vmatprep.subr.mxu0 %v67
  %542 = vmatpush1.msra.mxu0 %v66
  %543 = vmatprep.subr.mxu0 %v65
  %544 = vmatpush1.msra.mxu0 %v64
  %545 = vmatprep.subr.mxu0 %v63
  %546 = vmatpush1.msra.mxu0 %v62
  %547 = vmatprep.subr.mxu0 %v61
  %548 = vmatpush1.msra.mxu0 %v60
  %549 = vmatprep.subr.mxu0 %v59
  %550 = vmatpush1.msra.mxu0 %v58
  %551 = vmatprep.subr.mxu0 0.0
  %552 = vmatpush2.msra.mxu0 0.0
  %553 = vmatprep.subr.mxu0 0.0
  %554 = vmatpush2.msra.mxu0 0.0
  %555 = vmatprep.subr.mxu0 0.0
  %556 = vmatpush2.msra.mxu0 0.0
  %557 = vmatprep.subr.mxu0 0.0
  %558 = vmatpush2.msra.mxu0 0.0
  %559 = vmatprep.subr.mxu0 0.0
  %560 = vmatpush2.msra.mxu0 0.0
  %561 = vmatprep.subr.mxu0 0.0
  %562 = vmatpush2.msra.mxu0 0.0
  %563 = vmatprep.subr.mxu0 0.0
  %564 = vmatpush2.msra.mxu0 0.0
  %565 = vmatprep.subr.mxu0 0.0
  %566 = vmatpush2.msra.mxu0 0.0
  %567 = vmatprep.subr.mxu0 0.0
  %568 = vmatpush2.msra.mxu0 0.0
  %569 = vmatprep.subr.mxu0 0.0
  %570 = vmatpush2.msra.mxu0 0.0
  %571 = vmatprep.subr.mxu0 0.0
  %572 = vmatpush2.msra.mxu0 0.0
  %573 = vmatprep.subr.mxu0 0.0
  %574 = vmatpush2.msra.mxu0 0.0
  %575 = vmatprep.subr.mxu0 0.0
  %576 = vmatpush2.msra.mxu0 0.0
  %577 = vmatprep.subr.mxu0 0.0
  %578 = vmatpush2.msra.mxu0 0.0
  %579 = vmatprep.subr.mxu0 0.0
  %580 = vmatpush2.msra.mxu0 0.0
  %581 = vmatprep.subr.mxu0 0.0
  %582 = vmatpush2.msra.mxu0 0.0
  %583 = vmatprep.mubr.f32.mxu0 0.0
  %584 = vmatmul.mubr.f32.gmra.mxu0 %v517
  %v585 = vpop.f32.mrf.mxu0
  %v586 = vadd.f32 %v511, %v585
  %v587 = vpop.f32.mrf.mxu0
  %v588 = vadd.f32 %v515, %v587
  %589 = vdwg.mxu0
  %v590 = vadd.f32 %v488, %v586
  %v591 = vxor.u32 %v590, 2147483648
  %v592 = vmul.f32 %v591, 1.442695
  %v593 = vpow.pop %v592
  %v594 = vadd.f32 %v593, 1.0
  %v595 = vrcp.pop %v594
  %v596 = vmul.f32 1.0, %v595
  %v597 = vmul.f32 %v596, %v588
  %v598 = vadd.f32 %v490, %v597
  %v599 = vtanh.pop %v598
  %v600 = vsub.f32 1.0, %v596
  %602 = vrot.lane.b32.xlu0 %v599, 64
  %v603 = vpop.permute.xlu0 %602
  %v605 = vmul.f32 %v600, %v603
  %v606 = vmul.f32 %v596, 0.0
  %v607 = vadd.f32 %v605, %v606
  %609 = vrot.lane.b32.xlu0 %v607, 64
  %v610 = vpop.permute.xlu0 %609
  %v611 = vsel %vm220, %v610, 0
  %613 = vmatprep.subr.mxu0 0.0
  %614 = vmatpush1.msra.mxu0 0.0
  %615 = vmatprep.subr.mxu0 0.0
  %616 = vmatpush1.msra.mxu0 0.0
  %617 = vmatprep.subr.mxu0 0.0
  %618 = vmatpush1.msra.mxu0 0.0
  %619 = vmatprep.subr.mxu0 0.0
  %620 = vmatpush1.msra.mxu0 0.0
  %621 = vmatprep.subr.mxu0 0.0
  %622 = vmatpush1.msra.mxu0 0.0
  %623 = vmatprep.subr.mxu0 0.0
  %624 = vmatpush1.msra.mxu0 0.0
  %625 = vmatprep.subr.mxu0 0.0
  %626 = vmatpush1.msra.mxu0 0.0
  %627 = vmatprep.subr.mxu0 0.0
  %628 = vmatpush1.msra.mxu0 0.0
  %629 = vmatprep.subr.mxu0 %v73
  %630 = vmatpush1.msra.mxu0 %v72
  %631 = vmatprep.subr.mxu0 %v71
  %632 = vmatpush1.msra.mxu0 %v70
  %633 = vmatprep.subr.mxu0 %v69
  %634 = vmatpush1.msra.mxu0 %v68
  %635 = vmatprep.subr.mxu0 %v67
  %636 = vmatpush1.msra.mxu0 %v66
  %637 = vmatprep.subr.mxu0 %v65
  %638 = vmatpush1.msra.mxu0 %v64
  %639 = vmatprep.subr.mxu0 %v63
  %640 = vmatpush1.msra.mxu0 %v62
  %641 = vmatprep.subr.mxu0 %v61
  %642 = vmatpush1.msra.mxu0 %v60
  %643 = vmatprep.subr.mxu0 %v59
  %644 = vmatpush1.msra.mxu0 %v58
  %645 = vmatprep.subr.mxu0 0.0
  %646 = vmatpush2.msra.mxu0 0.0
  %647 = vmatprep.subr.mxu0 0.0
  %648 = vmatpush2.msra.mxu0 0.0
  %649 = vmatprep.subr.mxu0 0.0
  %650 = vmatpush2.msra.mxu0 0.0
  %651 = vmatprep.subr.mxu0 0.0
  %652 = vmatpush2.msra.mxu0 0.0
  %653 = vmatprep.subr.mxu0 0.0
  %654 = vmatpush2.msra.mxu0 0.0
  %655 = vmatprep.subr.mxu0 0.0
  %656 = vmatpush2.msra.mxu0 0.0
  %657 = vmatprep.subr.mxu0 0.0
  %658 = vmatpush2.msra.mxu0 0.0
  %659 = vmatprep.subr.mxu0 0.0
  %660 = vmatpush2.msra.mxu0 0.0
  %661 = vmatprep.subr.mxu0 0.0
  %662 = vmatpush2.msra.mxu0 0.0
  %663 = vmatprep.subr.mxu0 0.0
  %664 = vmatpush2.msra.mxu0 0.0
  %665 = vmatprep.subr.mxu0 0.0
  %666 = vmatpush2.msra.mxu0 0.0
  %667 = vmatprep.subr.mxu0 0.0
  %668 = vmatpush2.msra.mxu0 0.0
  %669 = vmatprep.subr.mxu0 0.0
  %670 = vmatpush2.msra.mxu0 0.0
  %671 = vmatprep.subr.mxu0 0.0
  %672 = vmatpush2.msra.mxu0 0.0
  %673 = vmatprep.subr.mxu0 0.0
  %674 = vmatpush2.msra.mxu0 0.0
  %675 = vmatprep.subr.mxu0 0.0
  %676 = vmatpush2.msra.mxu0 0.0
  %677 = vmatprep.mubr.f32.mxu0 0.0
  %678 = vmatmul.mubr.f32.gmra.mxu0 %v611
  %v679 = vpop.f32.mrf.mxu0
  %v680 = vadd.f32 %v511, %v679
  %v681 = vpop.f32.mrf.mxu0
  %v682 = vadd.f32 %v515, %v681
  %683 = vdwg.mxu0
  %v685 = vrot.slane %v680, 6
  %v687 = vadd.f32 %v488, %v685
  %v688 = vxor.u32 %v687, 2147483648
  %v689 = vmul.f32 %v688, 1.442695
  %v690 = vpow.pop %v689
  %v691 = vadd.f32 %v690, 1.0
  %v692 = vrcp.pop %v691
  %v693 = vmul.f32 1.0, %v692
  %v695 = vrot.slane %v682, 6
  %v697 = vmul.f32 %v693, %v695
  %v698 = vadd.f32 %v490, %v697
  %v699 = vtanh.pop %v698
  %v700 = vsub.f32 1.0, %v693
  %702 = vrot.lane.b32.xlu0 %v699, 64
  %v703 = vpop.permute.xlu0 %702
  %v705 = vmul.f32 %v700, %v703
  %v706 = vrot.slane %v607, 6
  %v708 = vmul.f32 %v693, %v706
  %v709 = vadd.f32 %v705, %v708
  %v711 = vrot.slane %v709, 2
  %712 = vrot.lane.b32.xlu0 %v711, 64
  %v713 = vpop.permute.xlu0 %712
  %v714 = vsel %vm220, %v713, 0
  %716 = vmatprep.subr.mxu0 0.0
  %717 = vmatpush1.msra.mxu0 0.0
  %718 = vmatprep.subr.mxu0 0.0
  %719 = vmatpush1.msra.mxu0 0.0
  %720 = vmatprep.subr.mxu0 0.0
  %721 = vmatpush1.msra.mxu0 0.0
  %722 = vmatprep.subr.mxu0 0.0
  %723 = vmatpush1.msra.mxu0 0.0
  %724 = vmatprep.subr.mxu0 0.0
  %725 = vmatpush1.msra.mxu0 0.0
  %726 = vmatprep.subr.mxu0 0.0
  %727 = vmatpush1.msra.mxu0 0.0
  %728 = vmatprep.subr.mxu0 0.0
  %729 = vmatpush1.msra.mxu0 0.0
  %730 = vmatprep.subr.mxu0 0.0
  %731 = vmatpush1.msra.mxu0 0.0
  %732 = vmatprep.subr.mxu0 %v73
  %733 = vmatpush1.msra.mxu0 %v72
  %734 = vmatprep.subr.mxu0 %v71
  %735 = vmatpush1.msra.mxu0 %v70
  %736 = vmatprep.subr.mxu0 %v69
  %737 = vmatpush1.msra.mxu0 %v68
  %738 = vmatprep.subr.mxu0 %v67
  %739 = vmatpush1.msra.mxu0 %v66
  %740 = vmatprep.subr.mxu0 %v65
  %741 = vmatpush1.msra.mxu0 %v64
  %742 = vmatprep.subr.mxu0 %v63
  %743 = vmatpush1.msra.mxu0 %v62
  %744 = vmatprep.subr.mxu0 %v61
  %745 = vmatpush1.msra.mxu0 %v60
  %746 = vmatprep.subr.mxu0 %v59
  %747 = vmatpush1.msra.mxu0 %v58
  %748 = vmatprep.subr.mxu0 0.0
  %749 = vmatpush2.msra.mxu0 0.0
  %750 = vmatprep.subr.mxu0 0.0
  %751 = vmatpush2.msra.mxu0 0.0
  %752 = vmatprep.subr.mxu0 0.0
  %753 = vmatpush2.msra.mxu0 0.0
  %754 = vmatprep.subr.mxu0 0.0
  %755 = vmatpush2.msra.mxu0 0.0
  %756 = vmatprep.subr.mxu0 0.0
  %757 = vmatpush2.msra.mxu0 0.0
  %758 = vmatprep.subr.mxu0 0.0
  %759 = vmatpush2.msra.mxu0 0.0
  %760 = vmatprep.subr.mxu0 0.0
  %761 = vmatpush2.msra.mxu0 0.0
  %762 = vmatprep.subr.mxu0 0.0
  %763 = vmatpush2.msra.mxu0 0.0
  %764 = vmatprep.subr.mxu0 0.0
  %765 = vmatpush2.msra.mxu0 0.0
  %766 = vmatprep.subr.mxu0 0.0
  %767 = vmatpush2.msra.mxu0 0.0
  %768 = vmatprep.subr.mxu0 0.0
  %769 = vmatpush2.msra.mxu0 0.0
  %770 = vmatprep.subr.mxu0 0.0
  %771 = vmatpush2.msra.mxu0 0.0
  %772 = vmatprep.subr.mxu0 0.0
  %773 = vmatpush2.msra.mxu0 0.0
  %774 = vmatprep.subr.mxu0 0.0
  %775 = vmatpush2.msra.mxu0 0.0
  %776 = vmatprep.subr.mxu0 0.0
  %777 = vmatpush2.msra.mxu0 0.0
  %778 = vmatprep.subr.mxu0 0.0
  %779 = vmatpush2.msra.mxu0 0.0
  %780 = vmatprep.mubr.f32.mxu0 0.0
  %781 = vmatmul.mubr.f32.gmra.mxu0 %v714
  %v782 = vpop.f32.mrf.mxu0
  %v783 = vadd.f32 %v511, %v782
  %v784 = vpop.f32.mrf.mxu0
  %v785 = vadd.f32 %v515, %v784
  %786 = vdwg.mxu0
  %v788 = vrot.slane %v783, 4
  %v790 = vadd.f32 %v488, %v788
  %v791 = vxor.u32 %v790, 2147483648
  %v792 = vmul.f32 %v791, 1.442695
  %v793 = vpow.pop %v792
  %v794 = vadd.f32 %v793, 1.0
  %v795 = vrcp.pop %v794
  %v796 = vmul.f32 1.0, %v795
  %v798 = vrot.slane %v785, 4
  %v800 = vmul.f32 %v796, %v798
  %v801 = vadd.f32 %v490, %v800
  %v802 = vtanh.pop %v801
  %v803 = vsub.f32 1.0, %v796
  %805 = vrot.lane.b32.xlu0 %v802, 64
  %v806 = vpop.permute.xlu0 %805
  %v808 = vmul.f32 %v803, %v806
  %v809 = vrot.slane %v709, 6
  %v811 = vmul.f32 %v796, %v809
  %v812 = vadd.f32 %v808, %v811
  %v814 = vrot.slane %v812, 4
  %815 = vrot.lane.b32.xlu0 %v814, 64
  %v816 = vpop.permute.xlu0 %815
  %v817 = vsel %vm220, %v816, 0
  %819 = vmatprep.subr.mxu0 0.0
  %820 = vmatpush1.msra.mxu0 0.0
  %821 = vmatprep.subr.mxu0 0.0
  %822 = vmatpush1.msra.mxu0 0.0
  %823 = vmatprep.subr.mxu0 0.0
  %824 = vmatpush1.msra.mxu0 0.0
  %825 = vmatprep.subr.mxu0 0.0
  %826 = vmatpush1.msra.mxu0 0.0
  %827 = vmatprep.subr.mxu0 0.0
  %828 = vmatpush1.msra.mxu0 0.0
  %829 = vmatprep.subr.mxu0 0.0
  %830 = vmatpush1.msra.mxu0 0.0
  %831 = vmatprep.subr.mxu0 0.0
  %832 = vmatpush1.msra.mxu0 0.0
  %833 = vmatprep.subr.mxu0 0.0
  %834 = vmatpush1.msra.mxu0 0.0
  %835 = vmatprep.subr.mxu0 %v73
  %836 = vmatpush1.msra.mxu0 %v72
  %837 = vmatprep.subr.mxu0 %v71
  %838 = vmatpush1.msra.mxu0 %v70
  %839 = vmatprep.subr.mxu0 %v69
  %840 = vmatpush1.msra.mxu0 %v68
  %841 = vmatprep.subr.mxu0 %v67
  %842 = vmatpush1.msra.mxu0 %v66
  %843 = vmatprep.subr.mxu0 %v65
  %844 = vmatpush1.msra.mxu0 %v64
  %845 = vmatprep.subr.mxu0 %v63
  %846 = vmatpush1.msra.mxu0 %v62
  %847 = vmatprep.subr.mxu0 %v61
  %848 = vmatpush1.msra.mxu0 %v60
  %849 = vmatprep.subr.mxu0 %v59
  %850 = vmatpush1.msra.mxu0 %v58
  %851 = vmatprep.subr.mxu0 0.0
  %852 = vmatpush2.msra.mxu0 0.0
  %853 = vmatprep.subr.mxu0 0.0
  %854 = vmatpush2.msra.mxu0 0.0
  %855 = vmatprep.subr.mxu0 0.0
  %856 = vmatpush2.msra.mxu0 0.0
  %857 = vmatprep.subr.mxu0 0.0
  %858 = vmatpush2.msra.mxu0 0.0
  %859 = vmatprep.subr.mxu0 0.0
  %860 = vmatpush2.msra.mxu0 0.0
  %861 = vmatprep.subr.mxu0 0.0
  %862 = vmatpush2.msra.mxu0 0.0
  %863 = vmatprep.subr.mxu0 0.0
  %864 = vmatpush2.msra.mxu0 0.0
  %865 = vmatprep.subr.mxu0 0.0
  %866 = vmatpush2.msra.mxu0 0.0
  %867 = vmatprep.subr.mxu0 0.0
  %868 = vmatpush2.msra.mxu0 0.0
  %869 = vmatprep.subr.mxu0 0.0
  %870 = vmatpush2.msra.mxu0 0.0
  %871 = vmatprep.subr.mxu0 0.0
  %872 = vmatpush2.msra.mxu0 0.0
  %873 = vmatprep.subr.mxu0 0.0
  %874 = vmatpush2.msra.mxu0 0.0
  %875 = vmatprep.subr.mxu0 0.0
  %876 = vmatpush2.msra.mxu0 0.0
  %877 = vmatprep.subr.mxu0 0.0
  %878 = vmatpush2.msra.mxu0 0.0
  %879 = vmatprep.subr.mxu0 0.0
  %880 = vmatpush2.msra.mxu0 0.0
  %881 = vmatprep.subr.mxu0 0.0
  %882 = vmatpush2.msra.mxu0 0.0
  %883 = vmatprep.mubr.f32.mxu0 0.0
  %884 = vmatmul.mubr.f32.gmra.mxu0 %v817
  %v885 = vpop.f32.mrf.mxu0
  %v886 = vadd.f32 %v511, %v885
  %v887 = vpop.f32.mrf.mxu0
  %v888 = vadd.f32 %v515, %v887
  %889 = vdwg.mxu0
  %v891 = vrot.slane %v886, 2
  %v893 = vadd.f32 %v488, %v891
  %v894 = vxor.u32 %v893, 2147483648
  %v895 = vmul.f32 %v894, 1.442695
  %v896 = vpow.pop %v895
  %v897 = vadd.f32 %v896, 1.0
  %v898 = vrcp.pop %v897
  %v899 = vmul.f32 1.0, %v898
  %v901 = vrot.slane %v888, 2
  %v903 = vmul.f32 %v899, %v901
  %v904 = vadd.f32 %v490, %v903
  %v905 = vtanh.pop %v904
  %v906 = vsub.f32 1.0, %v899
  %908 = vrot.lane.b32.xlu0 %v905, 64
  %v909 = vpop.permute.xlu0 %908
  %v911 = vmul.f32 %v906, %v909
  %v912 = vrot.slane %v812, 6
  %v914 = vmul.f32 %v899, %v912
  %v915 = vadd.f32 %v911, %v914
  %v917 = vrot.slane %v915, 6
  %918 = vrot.lane.b32.xlu0 %v917, 64
  %v919 = vpop.permute.xlu0 %918
  %v920 = vsel %vm220, %v919, 0
  %922 = vmatprep.subr.mxu0 0.0
  %923 = vmatpush1.msra.mxu0 0.0
  %924 = vmatprep.subr.mxu0 0.0
  %925 = vmatpush1.msra.mxu0 0.0
  %926 = vmatprep.subr.mxu0 0.0
  %927 = vmatpush1.msra.mxu0 0.0
  %928 = vmatprep.subr.mxu0 0.0
  %929 = vmatpush1.msra.mxu0 0.0
  %930 = vmatprep.subr.mxu0 0.0
  %931 = vmatpush1.msra.mxu0 0.0
  %932 = vmatprep.subr.mxu0 0.0
  %933 = vmatpush1.msra.mxu0 0.0
  %934 = vmatprep.subr.mxu0 0.0
  %935 = vmatpush1.msra.mxu0 0.0
  %936 = vmatprep.subr.mxu0 0.0
  %937 = vmatpush1.msra.mxu0 0.0
  %938 = vmatprep.subr.mxu0 %v73
  %939 = vmatpush1.msra.mxu0 %v72
  %940 = vmatprep.subr.mxu0 %v71
  %941 = vmatpush1.msra.mxu0 %v70
  %942 = vmatprep.subr.mxu0 %v69
  %943 = vmatpush1.msra.mxu0 %v68
  %944 = vmatprep.subr.mxu0 %v67
  %945 = vmatpush1.msra.mxu0 %v66
  %946 = vmatprep.subr.mxu0 %v65
  %947 = vmatpush1.msra.mxu0 %v64
  %948 = vmatprep.subr.mxu0 %v63
  %949 = vmatpush1.msra.mxu0 %v62
  %950 = vmatprep.subr.mxu0 %v61
  %951 = vmatpush1.msra.mxu0 %v60
  %952 = vmatprep.subr.mxu0 %v59
  %953 = vmatpush1.msra.mxu0 %v58
  %954 = vmatprep.subr.mxu0 0.0
  %955 = vmatpush2.msra.mxu0 0.0
  %956 = vmatprep.subr.mxu0 0.0
  %957 = vmatpush2.msra.mxu0 0.0
  %958 = vmatprep.subr.mxu0 0.0
  %959 = vmatpush2.msra.mxu0 0.0
  %960 = vmatprep.subr.mxu0 0.0
  %961 = vmatpush2.msra.mxu0 0.0
  %962 = vmatprep.subr.mxu0 0.0
  %963 = vmatpush2.msra.mxu0 0.0
  %964 = vmatprep.subr.mxu0 0.0
  %965 = vmatpush2.msra.mxu0 0.0
  %966 = vmatprep.subr.mxu0 0.0
  %967 = vmatpush2.msra.mxu0 0.0
  %968 = vmatprep.subr.mxu0 0.0
  %969 = vmatpush2.msra.mxu0 0.0
  %970 = vmatprep.subr.mxu0 0.0
  %971 = vmatpush2.msra.mxu0 0.0
  %972 = vmatprep.subr.mxu0 0.0
  %973 = vmatpush2.msra.mxu0 0.0
  %974 = vmatprep.subr.mxu0 0.0
  %975 = vmatpush2.msra.mxu0 0.0
  %976 = vmatprep.subr.mxu0 0.0
  %977 = vmatpush2.msra.mxu0 0.0
  %978 = vmatprep.subr.mxu0 0.0
  %979 = vmatpush2.msra.mxu0 0.0
  %980 = vmatprep.subr.mxu0 0.0
  %981 = vmatpush2.msra.mxu0 0.0
  %982 = vmatprep.subr.mxu0 0.0
  %983 = vmatpush2.msra.mxu0 0.0
  %984 = vmatprep.subr.mxu0 0.0
  %985 = vmatpush2.msra.mxu0 0.0
  %986 = vmatprep.mubr.f32.mxu0 0.0
  %987 = vmatmul.mubr.f32.gmra.mxu0 %v920
  %v988 = vpop.f32.mrf.mxu0
  %v989 = vadd.f32 %v511, %v988
  %v990 = vpop.f32.mrf.mxu0
  %v991 = vadd.f32 %v515, %v990
  %992 = vdwg.mxu0
  %v993 = vadd.f32 %v494, %v989
  %v994 = vxor.u32 %v993, 2147483648
  %v995 = vmul.f32 %v994, 1.442695
  %v996 = vpow.pop %v995
  %v997 = vadd.f32 %v996, 1.0
  %v998 = vrcp.pop %v997
  %v999 = vmul.f32 1.0, %v998
  %v1000 = vmul.f32 %v999, %v991
  %v1001 = vadd.f32 %v496, %v1000
  %v1002 = vtanh.pop %v1001
  %v1003 = vsub.f32 1.0, %v999
  %1005 = vrot.lane.b32.xlu0 %v1002, 64
  %v1006 = vpop.permute.xlu0 %1005
  %v1008 = vmul.f32 %v1003, %v1006
  %v1010 = vmul.f32 %v999, %v917
  %v1011 = vadd.f32 %v1008, %v1010
  %1013 = vrot.lane.b32.xlu0 %v1011, 64
  %v1014 = vpop.permute.xlu0 %1013
  %v1015 = vsel %vm220, %v1014, 0
  %1017 = vmatprep.subr.mxu0 0.0
  %1018 = vmatpush1.msra.mxu0 0.0
  %1019 = vmatprep.subr.mxu0 0.0
  %1020 = vmatpush1.msra.mxu0 0.0
  %1021 = vmatprep.subr.mxu0 0.0
  %1022 = vmatpush1.msra.mxu0 0.0
  %1023 = vmatprep.subr.mxu0 0.0
  %1024 = vmatpush1.msra.mxu0 0.0
  %1025 = vmatprep.subr.mxu0 0.0
  %1026 = vmatpush1.msra.mxu0 0.0
  %1027 = vmatprep.subr.mxu0 0.0
  %1028 = vmatpush1.msra.mxu0 0.0
  %1029 = vmatprep.subr.mxu0 0.0
  %1030 = vmatpush1.msra.mxu0 0.0
  %1031 = vmatprep.subr.mxu0 0.0
  %1032 = vmatpush1.msra.mxu0 0.0
  %1033 = vmatprep.subr.mxu0 %v73
  %1034 = vmatpush1.msra.mxu0 %v72
  %1035 = vmatprep.subr.mxu0 %v71
  %1036 = vmatpush1.msra.mxu0 %v70
  %1037 = vmatprep.subr.mxu0 %v69
  %1038 = vmatpush1.msra.mxu0 %v68
  %1039 = vmatprep.subr.mxu0 %v67
  %1040 = vmatpush1.msra.mxu0 %v66
  %1041 = vmatprep.subr.mxu0 %v65
  %1042 = vmatpush1.msra.mxu0 %v64
  %1043 = vmatprep.subr.mxu0 %v63
  %1044 = vmatpush1.msra.mxu0 %v62
  %1045 = vmatprep.subr.mxu0 %v61
  %1046 = vmatpush1.msra.mxu0 %v60
  %1047 = vmatprep.subr.mxu0 %v59
  %1048 = vmatpush1.msra.mxu0 %v58
  %1049 = vmatprep.subr.mxu0 0.0
  %1050 = vmatpush2.msra.mxu0 0.0
  %1051 = vmatprep.subr.mxu0 0.0
  %1052 = vmatpush2.msra.mxu0 0.0
  %1053 = vmatprep.subr.mxu0 0.0
  %1054 = vmatpush2.msra.mxu0 0.0
  %1055 = vmatprep.subr.mxu0 0.0
  %1056 = vmatpush2.msra.mxu0 0.0
  %1057 = vmatprep.subr.mxu0 0.0
  %1058 = vmatpush2.msra.mxu0 0.0
  %1059 = vmatprep.subr.mxu0 0.0
  %1060 = vmatpush2.msra.mxu0 0.0
  %1061 = vmatprep.subr.mxu0 0.0
  %1062 = vmatpush2.msra.mxu0 0.0
  %1063 = vmatprep.subr.mxu0 0.0
  %1064 = vmatpush2.msra.mxu0 0.0
  %1065 = vmatprep.subr.mxu0 0.0
  %1066 = vmatpush2.msra.mxu0 0.0
  %1067 = vmatprep.subr.mxu0 0.0
  %1068 = vmatpush2.msra.mxu0 0.0
  %1069 = vmatprep.subr.mxu0 0.0
  %1070 = vmatpush2.msra.mxu0 0.0
  %1071 = vmatprep.subr.mxu0 0.0
  %1072 = vmatpush2.msra.mxu0 0.0
  %1073 = vmatprep.subr.mxu0 0.0
  %1074 = vmatpush2.msra.mxu0 0.0
  %1075 = vmatprep.subr.mxu0 0.0
  %1076 = vmatpush2.msra.mxu0 0.0
  %1077 = vmatprep.subr.mxu0 0.0
  %1078 = vmatpush2.msra.mxu0 0.0
  %1079 = vmatprep.subr.mxu0 0.0
  %1080 = vmatpush2.msra.mxu0 0.0
  %1081 = vmatprep.mubr.f32.mxu0 0.0
  %1082 = vmatmul.mubr.f32.gmra.mxu0 %v1015
  %v1083 = vpop.f32.mrf.mxu0
  %v1084 = vadd.f32 %v511, %v1083
  %v1085 = vpop.f32.mrf.mxu0
  %v1086 = vadd.f32 %v515, %v1085
  %1087 = vdwg.mxu0
  %v1089 = vrot.slane %v1084, 6
  %v1091 = vadd.f32 %v494, %v1089
  %v1092 = vxor.u32 %v1091, 2147483648
  %v1093 = vmul.f32 %v1092, 1.442695
  %v1094 = vpow.pop %v1093
  %v1095 = vadd.f32 %v1094, 1.0
  %v1096 = vrcp.pop %v1095
  %v1097 = vmul.f32 1.0, %v1096
  %v1099 = vrot.slane %v1086, 6
  %v1101 = vmul.f32 %v1097, %v1099
  %v1102 = vadd.f32 %v496, %v1101
  %v1103 = vtanh.pop %v1102
  %v1104 = vsub.f32 1.0, %v1097
  %1106 = vrot.lane.b32.xlu0 %v1103, 64
  %v1107 = vpop.permute.xlu0 %1106
  %v1109 = vmul.f32 %v1104, %v1107
  %v1110 = vrot.slane %v1011, 6
  %v1112 = vmul.f32 %v1097, %v1110
  %v1113 = vadd.f32 %v1109, %v1112
  %v1115 = vrot.slane %v1113, 2
  %1116 = vrot.lane.b32.xlu0 %v1115, 64
  %v1117 = vpop.permute.xlu0 %1116
  %v1118 = vsel %vm220, %v1117, 0
  %1120 = vmatprep.subr.mxu0 0.0
  %1121 = vmatpush1.msra.mxu0 0.0
  %1122 = vmatprep.subr.mxu0 0.0
  %1123 = vmatpush1.msra.mxu0 0.0
  %1124 = vmatprep.subr.mxu0 0.0
  %1125 = vmatpush1.msra.mxu0 0.0
  %1126 = vmatprep.subr.mxu0 0.0
  %1127 = vmatpush1.msra.mxu0 0.0
  %1128 = vmatprep.subr.mxu0 0.0
  %1129 = vmatpush1.msra.mxu0 0.0
  %1130 = vmatprep.subr.mxu0 0.0
  %1131 = vmatpush1.msra.mxu0 0.0
  %1132 = vmatprep.subr.mxu0 0.0
  %1133 = vmatpush1.msra.mxu0 0.0
  %1134 = vmatprep.subr.mxu0 0.0
  %1135 = vmatpush1.msra.mxu0 0.0
  %1136 = vmatprep.subr.mxu0 %v73
  %1137 = vmatpush1.msra.mxu0 %v72
  %1138 = vmatprep.subr.mxu0 %v71
  %1139 = vmatpush1.msra.mxu0 %v70
  %1140 = vmatprep.subr.mxu0 %v69
  %1141 = vmatpush1.msra.mxu0 %v68
  %1142 = vmatprep.subr.mxu0 %v67
  %1143 = vmatpush1.msra.mxu0 %v66
  %1144 = vmatprep.subr.mxu0 %v65
  %1145 = vmatpush1.msra.mxu0 %v64
  %1146 = vmatprep.subr.mxu0 %v63
  %1147 = vmatpush1.msra.mxu0 %v62
  %1148 = vmatprep.subr.mxu0 %v61
  %1149 = vmatpush1.msra.mxu0 %v60
  %1150 = vmatprep.subr.mxu0 %v59
  %1151 = vmatpush1.msra.mxu0 %v58
  %1152 = vmatprep.subr.mxu0 0.0
  %1153 = vmatpush2.msra.mxu0 0.0
  %1154 = vmatprep.subr.mxu0 0.0
  %1155 = vmatpush2.msra.mxu0 0.0
  %1156 = vmatprep.subr.mxu0 0.0
  %1157 = vmatpush2.msra.mxu0 0.0
  %1158 = vmatprep.subr.mxu0 0.0
  %1159 = vmatpush2.msra.mxu0 0.0
  %1160 = vmatprep.subr.mxu0 0.0
  %1161 = vmatpush2.msra.mxu0 0.0
  %1162 = vmatprep.subr.mxu0 0.0
  %1163 = vmatpush2.msra.mxu0 0.0
  %1164 = vmatprep.subr.mxu0 0.0
  %1165 = vmatpush2.msra.mxu0 0.0
  %1166 = vmatprep.subr.mxu0 0.0
  %1167 = vmatpush2.msra.mxu0 0.0
  %1168 = vmatprep.subr.mxu0 0.0
  %1169 = vmatpush2.msra.mxu0 0.0
  %1170 = vmatprep.subr.mxu0 0.0
  %1171 = vmatpush2.msra.mxu0 0.0
  %1172 = vmatprep.subr.mxu0 0.0
  %1173 = vmatpush2.msra.mxu0 0.0
  %1174 = vmatprep.subr.mxu0 0.0
  %1175 = vmatpush2.msra.mxu0 0.0
  %1176 = vmatprep.subr.mxu0 0.0
  %1177 = vmatpush2.msra.mxu0 0.0
  %1178 = vmatprep.subr.mxu0 0.0
  %1179 = vmatpush2.msra.mxu0 0.0
  %1180 = vmatprep.subr.mxu0 0.0
  %1181 = vmatpush2.msra.mxu0 0.0
  %1182 = vmatprep.subr.mxu0 0.0
  %1183 = vmatpush2.msra.mxu0 0.0
  %1184 = vmatprep.mubr.f32.mxu0 0.0
  %1185 = vmatmul.mubr.f32.gmra.mxu0 %v1118
  %v1186 = vpop.f32.mrf.mxu0
  %v1187 = vadd.f32 %v511, %v1186
  %v1188 = vpop.f32.mrf.mxu0
  %v1189 = vadd.f32 %v515, %v1188
  %1190 = vdwg.mxu0
  %v1192 = vrot.slane %v1187, 4
  %v1194 = vadd.f32 %v494, %v1192
  %v1195 = vxor.u32 %v1194, 2147483648
  %v1196 = vmul.f32 %v1195, 1.442695
  %v1197 = vpow.pop %v1196
  %v1198 = vadd.f32 %v1197, 1.0
  %v1199 = vrcp.pop %v1198
  %v1200 = vmul.f32 1.0, %v1199
  %v1202 = vrot.slane %v1189, 4
  %v1204 = vmul.f32 %v1200, %v1202
  %v1205 = vadd.f32 %v496, %v1204
  %v1206 = vtanh.pop %v1205
  %v1207 = vsub.f32 1.0, %v1200
  %1209 = vrot.lane.b32.xlu0 %v1206, 64
  %v1210 = vpop.permute.xlu0 %1209
  %v1212 = vmul.f32 %v1207, %v1210
  %v1213 = vrot.slane %v1113, 6
  %v1215 = vmul.f32 %v1200, %v1213
  %v1216 = vadd.f32 %v1212, %v1215
  %v1218 = vrot.slane %v1216, 4
  %1219 = vrot.lane.b32.xlu0 %v1218, 64
  %v1220 = vpop.permute.xlu0 %1219
  %v1221 = vsel %vm220, %v1220, 0
  %1223 = vmatprep.subr.mxu0 0.0
  %1224 = vmatpush1.msra.mxu0 0.0
  %1225 = vmatprep.subr.mxu0 0.0
  %1226 = vmatpush1.msra.mxu0 0.0
  %1227 = vmatprep.subr.mxu0 0.0
  %1228 = vmatpush1.msra.mxu0 0.0
  %1229 = vmatprep.subr.mxu0 0.0
  %1230 = vmatpush1.msra.mxu0 0.0
  %1231 = vmatprep.subr.mxu0 0.0
  %1232 = vmatpush1.msra.mxu0 0.0
  %1233 = vmatprep.subr.mxu0 0.0
  %1234 = vmatpush1.msra.mxu0 0.0
  %1235 = vmatprep.subr.mxu0 0.0
  %1236 = vmatpush1.msra.mxu0 0.0
  %1237 = vmatprep.subr.mxu0 0.0
  %1238 = vmatpush1.msra.mxu0 0.0
  %1239 = vmatprep.subr.mxu0 %v73
  %1240 = vmatpush1.msra.mxu0 %v72
  %1241 = vmatprep.subr.mxu0 %v71
  %1242 = vmatpush1.msra.mxu0 %v70
  %1243 = vmatprep.subr.mxu0 %v69
  %1244 = vmatpush1.msra.mxu0 %v68
  %1245 = vmatprep.subr.mxu0 %v67
  %1246 = vmatpush1.msra.mxu0 %v66
  %1247 = vmatprep.subr.mxu0 %v65
  %1248 = vmatpush1.msra.mxu0 %v64
  %1249 = vmatprep.subr.mxu0 %v63
  %1250 = vmatpush1.msra.mxu0 %v62
  %1251 = vmatprep.subr.mxu0 %v61
  %1252 = vmatpush1.msra.mxu0 %v60
  %1253 = vmatprep.subr.mxu0 %v59
  %1254 = vmatpush1.msra.mxu0 %v58
  %1255 = vmatprep.subr.mxu0 0.0
  %1256 = vmatpush2.msra.mxu0 0.0
  %1257 = vmatprep.subr.mxu0 0.0
  %1258 = vmatpush2.msra.mxu0 0.0
  %1259 = vmatprep.subr.mxu0 0.0
  %1260 = vmatpush2.msra.mxu0 0.0
  %1261 = vmatprep.subr.mxu0 0.0
  %1262 = vmatpush2.msra.mxu0 0.0
  %1263 = vmatprep.subr.mxu0 0.0
  %1264 = vmatpush2.msra.mxu0 0.0
  %1265 = vmatprep.subr.mxu0 0.0
  %1266 = vmatpush2.msra.mxu0 0.0
  %1267 = vmatprep.subr.mxu0 0.0
  %1268 = vmatpush2.msra.mxu0 0.0
  %1269 = vmatprep.subr.mxu0 0.0
  %1270 = vmatpush2.msra.mxu0 0.0
  %1271 = vmatprep.subr.mxu0 0.0
  %1272 = vmatpush2.msra.mxu0 0.0
  %1273 = vmatprep.subr.mxu0 0.0
  %1274 = vmatpush2.msra.mxu0 0.0
  %1275 = vmatprep.subr.mxu0 0.0
  %1276 = vmatpush2.msra.mxu0 0.0
  %1277 = vmatprep.subr.mxu0 0.0
  %1278 = vmatpush2.msra.mxu0 0.0
  %1279 = vmatprep.subr.mxu0 0.0
  %1280 = vmatpush2.msra.mxu0 0.0
  %1281 = vmatprep.subr.mxu0 0.0
  %1282 = vmatpush2.msra.mxu0 0.0
  %1283 = vmatprep.subr.mxu0 0.0
  %1284 = vmatpush2.msra.mxu0 0.0
  %1285 = vmatprep.subr.mxu0 0.0
  %1286 = vmatpush2.msra.mxu0 0.0
  %1287 = vmatprep.mubr.f32.mxu0 0.0
  %1288 = vmatmul.mubr.f32.gmra.mxu0 %v1221
  %v1289 = vpop.f32.mrf.mxu0
  %v1290 = vadd.f32 %v511, %v1289
  %v1291 = vpop.f32.mrf.mxu0
  %v1292 = vadd.f32 %v515, %v1291
  %1293 = vdwg.mxu0
  %v1295 = vrot.slane %v1290, 2
  %v1297 = vadd.f32 %v494, %v1295
  %v1298 = vxor.u32 %v1297, 2147483648
  %v1299 = vmul.f32 %v1298, 1.442695
  %v1300 = vpow.pop %v1299
  %v1301 = vadd.f32 %v1300, 1.0
  %v1302 = vrcp.pop %v1301
  %v1303 = vmul.f32 1.0, %v1302
  %v1305 = vrot.slane %v1292, 2
  %v1307 = vmul.f32 %v1303, %v1305
  %v1308 = vadd.f32 %v496, %v1307
  %v1309 = vtanh.pop %v1308
  %v1310 = vsub.f32 1.0, %v1303
  %1312 = vrot.lane.b32.xlu0 %v1309, 64
  %v1313 = vpop.permute.xlu0 %1312
  %v1315 = vmul.f32 %v1310, %v1313
  %v1316 = vrot.slane %v1216, 6
  %v1318 = vmul.f32 %v1303, %v1316
  %v1319 = vadd.f32 %v1315, %v1318
  %v1322 = vrot.slane %v1319, 6
  %v1324 = vsel %vm220, %v610, %v1322
  %1325 = vrot.lane.b32.xlu0 %v709, 64
  %v1326 = vpop.permute.xlu0 %1325
  %v1328 = vrot.slane %v1216, 2
  %v1330 = vsel %vm220, %v1326, %v1328
  %1331 = vrot.lane.b32.xlu0 %v812, 64
  %v1332 = vpop.permute.xlu0 %1331
  %v1334 = vsel %vm220, %v1332, %v1213
  %1335 = vrot.lane.b32.xlu0 %v915, 64
  %v1336 = vpop.permute.xlu0 %1335
  %v1338 = vrot.slane %v1011, 2
  %v1340 = vsel %vm220, %v1336, %v1338
  %v1342 = vsel %vm220, %v1014, %v917
  %1343 = vrot.lane.b32.xlu0 %v1113, 64
  %v1344 = vpop.permute.xlu0 %1343
  %v1346 = vrot.slane %v812, 2
  %v1348 = vsel %vm220, %v1344, %v1346
  %1349 = vrot.lane.b32.xlu0 %v1216, 64
  %v1350 = vpop.permute.xlu0 %1349
  %v1352 = vsel %vm220, %v1350, %v809
  %1353 = vrot.lane.b32.xlu0 %v1319, 64
  %v1354 = vpop.permute.xlu0 %1353
  %v1356 = vrot.slane %v607, 2
  %v1358 = vsel %vm220, %v1354, %v1356
  %v1359 = vsel %vm393, %v1324, %v1330
  %v1360 = vsel %vm395, %v1359, %v1334
  %v1361 = vsel %vm397, %v1360, %v1340
  %v1362 = vsel %vm393, %v1342, %v1348
  %v1363 = vsel %vm395, %v1362, %v1352
  %v1364 = vsel %vm397, %v1363, %v1358
  %v1365 = vlaneseq
  %v1366 = vshrl.u32 %v1365, 7
  %v1367 = vsub.s32 2, %v1366
  %v1368 = vrot.slane %v122, %v1367
  %v1369 = vlaneseq
  %v1370 = vshrl.u32 %v1369, 7
  %v1371 = vsub.s32 6, %v1370
  %v1372 = vrot.slane %v122, %v1371
  %v1375 = vlaneseq
  %v1376 = vshrl.u32 %v1375, 7
  %v1377 = vsub.s32 2, %v1376
  %v1378 = vrot.slane %v1368, %v1377
  %v1379 = vlaneseq
  %v1380 = vshrl.u32 %v1379, 7
  %v1381 = vsub.s32 2, %v1380
  %v1382 = vrot.slane %v1372, %v1381
  %1383 = vmatprep.subr.mxu0 %v105
  %1384 = vmatpush1.msra.mxu0 %v104
  %1385 = vmatprep.subr.mxu0 %v103
  %1386 = vmatpush1.msra.mxu0 %v102
  %1387 = vmatprep.subr.mxu0 %v101
  %1388 = vmatpush1.msra.mxu0 %v100
  %1389 = vmatprep.subr.mxu0 %v99
  %1390 = vmatpush1.msra.mxu0 %v98
  %1391 = vmatprep.subr.mxu0 %v97
  %1392 = vmatpush1.msra.mxu0 %v96
  %1393 = vmatprep.subr.mxu0 %v95
  %1394 = vmatpush1.msra.mxu0 %v94
  %1395 = vmatprep.subr.mxu0 %v93
  %1396 = vmatpush1.msra.mxu0 %v92
  %1397 = vmatprep.subr.mxu0 %v91
  %1398 = vmatpush1.msra.mxu0 %v90
  %1399 = vmatprep.subr.mxu0 %v89
  %1400 = vmatpush1.msra.mxu0 %v88
  %1401 = vmatprep.subr.mxu0 %v87
  %1402 = vmatpush1.msra.mxu0 %v86
  %1403 = vmatprep.subr.mxu0 %v85
  %1404 = vmatpush1.msra.mxu0 %v84
  %1405 = vmatprep.subr.mxu0 %v83
  %1406 = vmatpush1.msra.mxu0 %v82
  %1407 = vmatprep.subr.mxu0 %v81
  %1408 = vmatpush1.msra.mxu0 %v80
  %1409 = vmatprep.subr.mxu0 %v79
  %1410 = vmatpush1.msra.mxu0 %v78
  %1411 = vmatprep.subr.mxu0 %v77
  %1412 = vmatpush1.msra.mxu0 %v76
  %1413 = vmatprep.subr.mxu0 %v75
  %1414 = vmatpush1.msra.mxu0 %v74
  %1415 = vmatprep.subr.mxu0 0.0
  %1416 = vmatpush2.msra.mxu0 0.0
  %1417 = vmatprep.subr.mxu0 0.0
  %1418 = vmatpush2.msra.mxu0 0.0
  %1419 = vmatprep.subr.mxu0 0.0
  %1420 = vmatpush2.msra.mxu0 0.0
  %1421 = vmatprep.subr.mxu0 0.0
  %1422 = vmatpush2.msra.mxu0 0.0
  %1423 = vmatprep.subr.mxu0 0.0
  %1424 = vmatpush2.msra.mxu0 0.0
  %1425 = vmatprep.subr.mxu0 0.0
  %1426 = vmatpush2.msra.mxu0 0.0
  %1427 = vmatprep.subr.mxu0 0.0
  %1428 = vmatpush2.msra.mxu0 0.0
  %1429 = vmatprep.subr.mxu0 0.0
  %1430 = vmatpush2.msra.mxu0 0.0
  %1431 = vmatprep.subr.mxu0 0.0
  %1432 = vmatpush2.msra.mxu0 0.0
  %1433 = vmatprep.subr.mxu0 0.0
  %1434 = vmatpush2.msra.mxu0 0.0
  %1435 = vmatprep.subr.mxu0 0.0
  %1436 = vmatpush2.msra.mxu0 0.0
  %1437 = vmatprep.subr.mxu0 0.0
  %1438 = vmatpush2.msra.mxu0 0.0
  %1439 = vmatprep.subr.mxu0 0.0
  %1440 = vmatpush2.msra.mxu0 0.0
  %1441 = vmatprep.subr.mxu0 0.0
  %1442 = vmatpush2.msra.mxu0 0.0
  %1443 = vmatprep.subr.mxu0 0.0
  %1444 = vmatpush2.msra.mxu0 0.0
  %1445 = vmatprep.subr.mxu0 0.0
  %1446 = vmatpush2.msra.mxu0 0.0
  %1447 = vmatprep.mubr.f32.mxu0 0.0
  %1448 = vmatmul.mubr.f32.gmra.mxu0 %v1361
  %v1449 = vpop.f32.mrf.mxu0
  %v1450 = vadd.f32 %v1378, %v1449
  %v1451 = vpop.f32.mrf.mxu0
  %v1452 = vadd.f32 %v1382, %v1451
  %1453 = vmatprep.mubr.f32.mxu0 0.0
  %1454 = vmatmul.mubr.f32.gmra.mxu0 %v1364
  %v1455 = vpop.f32.mrf.mxu0
  %v1456 = vadd.f32 %v1378, %v1455
  %v1457 = vpop.f32.mrf.mxu0
  %v1458 = vadd.f32 %v1382, %v1457
  %1459 = vdwg.mxu0
  %v1460 = vlaneseq
  %v1461 = vshrl.u32 %v1460, 7
  %v1462 = vsub.s32 3, %v1461
  %v1463 = vrot.slane %v122, %v1462
  %v1464 = vlaneseq
  %v1465 = vshrl.u32 %v1464, 7
  %v1466 = vsub.s32 7, %v1465
  %v1467 = vrot.slane %v122, %v1466
  %v1470 = vlaneseq
  %v1471 = vshrl.u32 %v1470, 7
  %v1472 = vsub.s32 3, %v1471
  %v1473 = vrot.slane %v1463, %v1472
  %v1474 = vlaneseq
  %v1475 = vshrl.u32 %v1474, 7
  %v1476 = vsub.s32 3, %v1475
  %v1477 = vrot.slane %v1467, %v1476
  %1478 = vmatprep.subr.mxu0 0.0
  %1479 = vmatpush1.msra.mxu0 0.0
  %1480 = vmatprep.subr.mxu0 0.0
  %1481 = vmatpush1.msra.mxu0 0.0
  %1482 = vmatprep.subr.mxu0 0.0
  %1483 = vmatpush1.msra.mxu0 0.0
  %1484 = vmatprep.subr.mxu0 0.0
  %1485 = vmatpush1.msra.mxu0 0.0
  %1486 = vmatprep.subr.mxu0 0.0
  %1487 = vmatpush1.msra.mxu0 0.0
  %1488 = vmatprep.subr.mxu0 0.0
  %1489 = vmatpush1.msra.mxu0 0.0
  %1490 = vmatprep.subr.mxu0 0.0
  %1491 = vmatpush1.msra.mxu0 0.0
  %1492 = vmatprep.subr.mxu0 0.0
  %1493 = vmatpush1.msra.mxu0 0.0
  %1494 = vmatprep.subr.mxu0 %v121
  %1495 = vmatpush1.msra.mxu0 %v120
  %1496 = vmatprep.subr.mxu0 %v119
  %1497 = vmatpush1.msra.mxu0 %v118
  %1498 = vmatprep.subr.mxu0 %v117
  %1499 = vmatpush1.msra.mxu0 %v116
  %1500 = vmatprep.subr.mxu0 %v115
  %1501 = vmatpush1.msra.mxu0 %v114
  %1502 = vmatprep.subr.mxu0 %v113
  %1503 = vmatpush1.msra.mxu0 %v112
  %1504 = vmatprep.subr.mxu0 %v111
  %1505 = vmatpush1.msra.mxu0 %v110
  %1506 = vmatprep.subr.mxu0 %v109
  %1507 = vmatpush1.msra.mxu0 %v108
  %1508 = vmatprep.subr.mxu0 %v107
  %1509 = vmatpush1.msra.mxu0 %v106
  %1510 = vmatprep.subr.mxu0 0.0
  %1511 = vmatpush2.msra.mxu0 0.0
  %1512 = vmatprep.subr.mxu0 0.0
  %1513 = vmatpush2.msra.mxu0 0.0
  %1514 = vmatprep.subr.mxu0 0.0
  %1515 = vmatpush2.msra.mxu0 0.0
  %1516 = vmatprep.subr.mxu0 0.0
  %1517 = vmatpush2.msra.mxu0 0.0
  %1518 = vmatprep.subr.mxu0 0.0
  %1519 = vmatpush2.msra.mxu0 0.0
  %1520 = vmatprep.subr.mxu0 0.0
  %1521 = vmatpush2.msra.mxu0 0.0
  %1522 = vmatprep.subr.mxu0 0.0
  %1523 = vmatpush2.msra.mxu0 0.0
  %1524 = vmatprep.subr.mxu0 0.0
  %1525 = vmatpush2.msra.mxu0 0.0
  %1526 = vmatprep.subr.mxu0 0.0
  %1527 = vmatpush2.msra.mxu0 0.0
  %1528 = vmatprep.subr.mxu0 0.0
  %1529 = vmatpush2.msra.mxu0 0.0
  %1530 = vmatprep.subr.mxu0 0.0
  %1531 = vmatpush2.msra.mxu0 0.0
  %1532 = vmatprep.subr.mxu0 0.0
  %1533 = vmatpush2.msra.mxu0 0.0
  %1534 = vmatprep.subr.mxu0 0.0
  %1535 = vmatpush2.msra.mxu0 0.0
  %1536 = vmatprep.subr.mxu0 0.0
  %1537 = vmatpush2.msra.mxu0 0.0
  %1538 = vmatprep.subr.mxu0 0.0
  %1539 = vmatpush2.msra.mxu0 0.0
  %1540 = vmatprep.subr.mxu0 0.0
  %1541 = vmatpush2.msra.mxu0 0.0
  %1542 = vmatprep.mubr.f32.mxu0 0.0
  %1543 = vmatmul.mubr.f32.gmra.mxu0 %v517
  %v1544 = vpop.f32.mrf.mxu0
  %v1545 = vadd.f32 %v1473, %v1544
  %v1546 = vpop.f32.mrf.mxu0
  %v1547 = vadd.f32 %v1477, %v1546
  %1548 = vdwg.mxu0
  %v1549 = vadd.f32 %v1450, %v1545
  %v1550 = vxor.u32 %v1549, 2147483648
  %v1551 = vmul.f32 %v1550, 1.442695
  %v1552 = vpow.pop %v1551
  %v1553 = vadd.f32 %v1552, 1.0
  %v1554 = vrcp.pop %v1553
  %v1555 = vmul.f32 1.0, %v1554
  %v1556 = vmul.f32 %v1555, %v1547
  %v1557 = vadd.f32 %v1452, %v1556
  %v1558 = vtanh.pop %v1557
  %v1559 = vsub.f32 1.0, %v1555
  %1561 = vrot.lane.b32.xlu0 %v1558, 64
  %v1562 = vpop.permute.xlu0 %1561
  %v1564 = vmul.f32 %v1559, %v1562
  %v1565 = vmul.f32 %v1555, 0.0
  %v1566 = vadd.f32 %v1564, %v1565
  %1568 = vrot.lane.b32.xlu0 %v1566, 64
  %v1569 = vpop.permute.xlu0 %1568
  %v1570 = vsel %vm220, %v1569, 0
  %1572 = vmatprep.subr.mxu0 0.0
  %1573 = vmatpush1.msra.mxu0 0.0
  %1574 = vmatprep.subr.mxu0 0.0
  %1575 = vmatpush1.msra.mxu0 0.0
  %1576 = vmatprep.subr.mxu0 0.0
  %1577 = vmatpush1.msra.mxu0 0.0
  %1578 = vmatprep.subr.mxu0 0.0
  %1579 = vmatpush1.msra.mxu0 0.0
  %1580 = vmatprep.subr.mxu0 0.0
  %1581 = vmatpush1.msra.mxu0 0.0
  %1582 = vmatprep.subr.mxu0 0.0
  %1583 = vmatpush1.msra.mxu0 0.0
  %1584 = vmatprep.subr.mxu0 0.0
  %1585 = vmatpush1.msra.mxu0 0.0
  %1586 = vmatprep.subr.mxu0 0.0
  %1587 = vmatpush1.msra.mxu0 0.0
  %1588 = vmatprep.subr.mxu0 %v121
  %1589 = vmatpush1.msra.mxu0 %v120
  %1590 = vmatprep.subr.mxu0 %v119
  %1591 = vmatpush1.msra.mxu0 %v118
  %1592 = vmatprep.subr.mxu0 %v117
  %1593 = vmatpush1.msra.mxu0 %v116
  %1594 = vmatprep.subr.mxu0 %v115
  %1595 = vmatpush1.msra.mxu0 %v114
  %1596 = vmatprep.subr.mxu0 %v113
  %1597 = vmatpush1.msra.mxu0 %v112
  %1598 = vmatprep.subr.mxu0 %v111
  %1599 = vmatpush1.msra.mxu0 %v110
  %1600 = vmatprep.subr.mxu0 %v109
  %1601 = vmatpush1.msra.mxu0 %v108
  %1602 = vmatprep.subr.mxu0 %v107
  %1603 = vmatpush1.msra.mxu0 %v106
  %1604 = vmatprep.subr.mxu0 0.0
  %1605 = vmatpush2.msra.mxu0 0.0
  %1606 = vmatprep.subr.mxu0 0.0
  %1607 = vmatpush2.msra.mxu0 0.0
  %1608 = vmatprep.subr.mxu0 0.0
  %1609 = vmatpush2.msra.mxu0 0.0
  %1610 = vmatprep.subr.mxu0 0.0
  %1611 = vmatpush2.msra.mxu0 0.0
  %1612 = vmatprep.subr.mxu0 0.0
  %1613 = vmatpush2.msra.mxu0 0.0
  %1614 = vmatprep.subr.mxu0 0.0
  %1615 = vmatpush2.msra.mxu0 0.0
  %1616 = vmatprep.subr.mxu0 0.0
  %1617 = vmatpush2.msra.mxu0 0.0
  %1618 = vmatprep.subr.mxu0 0.0
  %1619 = vmatpush2.msra.mxu0 0.0
  %1620 = vmatprep.subr.mxu0 0.0
  %1621 = vmatpush2.msra.mxu0 0.0
  %1622 = vmatprep.subr.mxu0 0.0
  %1623 = vmatpush2.msra.mxu0 0.0
  %1624 = vmatprep.subr.mxu0 0.0
  %1625 = vmatpush2.msra.mxu0 0.0
  %1626 = vmatprep.subr.mxu0 0.0
  %1627 = vmatpush2.msra.mxu0 0.0
  %1628 = vmatprep.subr.mxu0 0.0
  %1629 = vmatpush2.msra.mxu0 0.0
  %1630 = vmatprep.subr.mxu0 0.0
  %1631 = vmatpush2.msra.mxu0 0.0
  %1632 = vmatprep.subr.mxu0 0.0
  %1633 = vmatpush2.msra.mxu0 0.0
  %1634 = vmatprep.subr.mxu0 0.0
  %1635 = vmatpush2.msra.mxu0 0.0
  %1636 = vmatprep.mubr.f32.mxu0 0.0
  %1637 = vmatmul.mubr.f32.gmra.mxu0 %v1570
  %v1638 = vpop.f32.mrf.mxu0
  %v1639 = vadd.f32 %v1473, %v1638
  %v1640 = vpop.f32.mrf.mxu0
  %v1641 = vadd.f32 %v1477, %v1640
  %1642 = vdwg.mxu0
  %v1644 = vrot.slane %v1639, 6
  %v1646 = vadd.f32 %v1450, %v1644
  %v1647 = vxor.u32 %v1646, 2147483648
  %v1648 = vmul.f32 %v1647, 1.442695
  %v1649 = vpow.pop %v1648
  %v1650 = vadd.f32 %v1649, 1.0
  %v1651 = vrcp.pop %v1650
  %v1652 = vmul.f32 1.0, %v1651
  %v1654 = vrot.slane %v1641, 6
  %v1656 = vmul.f32 %v1652, %v1654
  %v1657 = vadd.f32 %v1452, %v1656
  %v1658 = vtanh.pop %v1657
  %v1659 = vsub.f32 1.0, %v1652
  %1661 = vrot.lane.b32.xlu0 %v1658, 64
  %v1662 = vpop.permute.xlu0 %1661
  %v1664 = vmul.f32 %v1659, %v1662
  %v1665 = vrot.slane %v1566, 6
  %v1667 = vmul.f32 %v1652, %v1665
  %v1668 = vadd.f32 %v1664, %v1667
  %v1670 = vrot.slane %v1668, 2
  %1671 = vrot.lane.b32.xlu0 %v1670, 64
  %v1672 = vpop.permute.xlu0 %1671
  %v1673 = vsel %vm220, %v1672, 0
  %1675 = vmatprep.subr.mxu0 0.0
  %1676 = vmatpush1.msra.mxu0 0.0
  %1677 = vmatprep.subr.mxu0 0.0
  %1678 = vmatpush1.msra.mxu0 0.0
  %1679 = vmatprep.subr.mxu0 0.0
  %1680 = vmatpush1.msra.mxu0 0.0
  %1681 = vmatprep.subr.mxu0 0.0
  %1682 = vmatpush1.msra.mxu0 0.0
  %1683 = vmatprep.subr.mxu0 0.0
  %1684 = vmatpush1.msra.mxu0 0.0
  %1685 = vmatprep.subr.mxu0 0.0
  %1686 = vmatpush1.msra.mxu0 0.0
  %1687 = vmatprep.subr.mxu0 0.0
  %1688 = vmatpush1.msra.mxu0 0.0
  %1689 = vmatprep.subr.mxu0 0.0
  %1690 = vmatpush1.msra.mxu0 0.0
  %1691 = vmatprep.subr.mxu0 %v121
  %1692 = vmatpush1.msra.mxu0 %v120
  %1693 = vmatprep.subr.mxu0 %v119
  %1694 = vmatpush1.msra.mxu0 %v118
  %1695 = vmatprep.subr.mxu0 %v117
  %1696 = vmatpush1.msra.mxu0 %v116
  %1697 = vmatprep.subr.mxu0 %v115
  %1698 = vmatpush1.msra.mxu0 %v114
  %1699 = vmatprep.subr.mxu0 %v113
  %1700 = vmatpush1.msra.mxu0 %v112
  %1701 = vmatprep.subr.mxu0 %v111
  %1702 = vmatpush1.msra.mxu0 %v110
  %1703 = vmatprep.subr.mxu0 %v109
  %1704 = vmatpush1.msra.mxu0 %v108
  %1705 = vmatprep.subr.mxu0 %v107
  %1706 = vmatpush1.msra.mxu0 %v106
  %1707 = vmatprep.subr.mxu0 0.0
  %1708 = vmatpush2.msra.mxu0 0.0
  %1709 = vmatprep.subr.mxu0 0.0
  %1710 = vmatpush2.msra.mxu0 0.0
  %1711 = vmatprep.subr.mxu0 0.0
  %1712 = vmatpush2.msra.mxu0 0.0
  %1713 = vmatprep.subr.mxu0 0.0
  %1714 = vmatpush2.msra.mxu0 0.0
  %1715 = vmatprep.subr.mxu0 0.0
  %1716 = vmatpush2.msra.mxu0 0.0
  %1717 = vmatprep.subr.mxu0 0.0
  %1718 = vmatpush2.msra.mxu0 0.0
  %1719 = vmatprep.subr.mxu0 0.0
  %1720 = vmatpush2.msra.mxu0 0.0
  %1721 = vmatprep.subr.mxu0 0.0
  %1722 = vmatpush2.msra.mxu0 0.0
  %1723 = vmatprep.subr.mxu0 0.0
  %1724 = vmatpush2.msra.mxu0 0.0
  %1725 = vmatprep.subr.mxu0 0.0
  %1726 = vmatpush2.msra.mxu0 0.0
  %1727 = vmatprep.subr.mxu0 0.0
  %1728 = vmatpush2.msra.mxu0 0.0
  %1729 = vmatprep.subr.mxu0 0.0
  %1730 = vmatpush2.msra.mxu0 0.0
  %1731 = vmatprep.subr.mxu0 0.0
  %1732 = vmatpush2.msra.mxu0 0.0
  %1733 = vmatprep.subr.mxu0 0.0
  %1734 = vmatpush2.msra.mxu0 0.0
  %1735 = vmatprep.subr.mxu0 0.0
  %1736 = vmatpush2.msra.mxu0 0.0
  %1737 = vmatprep.subr.mxu0 0.0
  %1738 = vmatpush2.msra.mxu0 0.0
  %1739 = vmatprep.mubr.f32.mxu0 0.0
  %1740 = vmatmul.mubr.f32.gmra.mxu0 %v1673
  %v1741 = vpop.f32.mrf.mxu0
  %v1742 = vadd.f32 %v1473, %v1741
  %v1743 = vpop.f32.mrf.mxu0
  %v1744 = vadd.f32 %v1477, %v1743
  %1745 = vdwg.mxu0
  %v1747 = vrot.slane %v1742, 4
  %v1749 = vadd.f32 %v1450, %v1747
  %v1750 = vxor.u32 %v1749, 2147483648
  %v1751 = vmul.f32 %v1750, 1.442695
  %v1752 = vpow.pop %v1751
  %v1753 = vadd.f32 %v1752, 1.0
  %v1754 = vrcp.pop %v1753
  %v1755 = vmul.f32 1.0, %v1754
  %v1757 = vrot.slane %v1744, 4
  %v1759 = vmul.f32 %v1755, %v1757
  %v1760 = vadd.f32 %v1452, %v1759
  %v1761 = vtanh.pop %v1760
  %v1762 = vsub.f32 1.0, %v1755
  %1764 = vrot.lane.b32.xlu0 %v1761, 64
  %v1765 = vpop.permute.xlu0 %1764
  %v1767 = vmul.f32 %v1762, %v1765
  %v1768 = vrot.slane %v1668, 6
  %v1770 = vmul.f32 %v1755, %v1768
  %v1771 = vadd.f32 %v1767, %v1770
  %v1773 = vrot.slane %v1771, 4
  %1774 = vrot.lane.b32.xlu0 %v1773, 64
  %v1775 = vpop.permute.xlu0 %1774
  %v1776 = vsel %vm220, %v1775, 0
  %1778 = vmatprep.subr.mxu0 0.0
  %1779 = vmatpush1.msra.mxu0 0.0
  %1780 = vmatprep.subr.mxu0 0.0
  %1781 = vmatpush1.msra.mxu0 0.0
  %1782 = vmatprep.subr.mxu0 0.0
  %1783 = vmatpush1.msra.mxu0 0.0
  %1784 = vmatprep.subr.mxu0 0.0
  %1785 = vmatpush1.msra.mxu0 0.0
  %1786 = vmatprep.subr.mxu0 0.0
  %1787 = vmatpush1.msra.mxu0 0.0
  %1788 = vmatprep.subr.mxu0 0.0
  %1789 = vmatpush1.msra.mxu0 0.0
  %1790 = vmatprep.subr.mxu0 0.0
  %1791 = vmatpush1.msra.mxu0 0.0
  %1792 = vmatprep.subr.mxu0 0.0
  %1793 = vmatpush1.msra.mxu0 0.0
  %1794 = vmatprep.subr.mxu0 %v121
  %1795 = vmatpush1.msra.mxu0 %v120
  %1796 = vmatprep.subr.mxu0 %v119
  %1797 = vmatpush1.msra.mxu0 %v118
  %1798 = vmatprep.subr.mxu0 %v117
  %1799 = vmatpush1.msra.mxu0 %v116
  %1800 = vmatprep.subr.mxu0 %v115
  %1801 = vmatpush1.msra.mxu0 %v114
  %1802 = vmatprep.subr.mxu0 %v113
  %1803 = vmatpush1.msra.mxu0 %v112
  %1804 = vmatprep.subr.mxu0 %v111
  %1805 = vmatpush1.msra.mxu0 %v110
  %1806 = vmatprep.subr.mxu0 %v109
  %1807 = vmatpush1.msra.mxu0 %v108
  %1808 = vmatprep.subr.mxu0 %v107
  %1809 = vmatpush1.msra.mxu0 %v106
  %1810 = vmatprep.subr.mxu0 0.0
  %1811 = vmatpush2.msra.mxu0 0.0
  %1812 = vmatprep.subr.mxu0 0.0
  %1813 = vmatpush2.msra.mxu0 0.0
  %1814 = vmatprep.subr.mxu0 0.0
  %1815 = vmatpush2.msra.mxu0 0.0
  %1816 = vmatprep.subr.mxu0 0.0
  %1817 = vmatpush2.msra.mxu0 0.0
  %1818 = vmatprep.subr.mxu0 0.0
  %1819 = vmatpush2.msra.mxu0 0.0
  %1820 = vmatprep.subr.mxu0 0.0
  %1821 = vmatpush2.msra.mxu0 0.0
  %1822 = vmatprep.subr.mxu0 0.0
  %1823 = vmatpush2.msra.mxu0 0.0
  %1824 = vmatprep.subr.mxu0 0.0
  %1825 = vmatpush2.msra.mxu0 0.0
  %1826 = vmatprep.subr.mxu0 0.0
  %1827 = vmatpush2.msra.mxu0 0.0
  %1828 = vmatprep.subr.mxu0 0.0
  %1829 = vmatpush2.msra.mxu0 0.0
  %1830 = vmatprep.subr.mxu0 0.0
  %1831 = vmatpush2.msra.mxu0 0.0
  %1832 = vmatprep.subr.mxu0 0.0
  %1833 = vmatpush2.msra.mxu0 0.0
  %1834 = vmatprep.subr.mxu0 0.0
  %1835 = vmatpush2.msra.mxu0 0.0
  %1836 = vmatprep.subr.mxu0 0.0
  %1837 = vmatpush2.msra.mxu0 0.0
  %1838 = vmatprep.subr.mxu0 0.0
  %1839 = vmatpush2.msra.mxu0 0.0
  %1840 = vmatprep.subr.mxu0 0.0
  %1841 = vmatpush2.msra.mxu0 0.0
  %1842 = vmatprep.mubr.f32.mxu0 0.0
  %1843 = vmatmul.mubr.f32.gmra.mxu0 %v1776
  %v1844 = vpop.f32.mrf.mxu0
  %v1845 = vadd.f32 %v1473, %v1844
  %v1846 = vpop.f32.mrf.mxu0
  %v1847 = vadd.f32 %v1477, %v1846
  %1848 = vdwg.mxu0
  %v1850 = vrot.slane %v1845, 2
  %v1852 = vadd.f32 %v1450, %v1850
  %v1853 = vxor.u32 %v1852, 2147483648
  %v1854 = vmul.f32 %v1853, 1.442695
  %v1855 = vpow.pop %v1854
  %v1856 = vadd.f32 %v1855, 1.0
  %v1857 = vrcp.pop %v1856
  %v1858 = vmul.f32 1.0, %v1857
  %v1860 = vrot.slane %v1847, 2
  %v1862 = vmul.f32 %v1858, %v1860
  %v1863 = vadd.f32 %v1452, %v1862
  %v1864 = vtanh.pop %v1863
  %v1865 = vsub.f32 1.0, %v1858
  %1867 = vrot.lane.b32.xlu0 %v1864, 64
  %v1868 = vpop.permute.xlu0 %1867
  %v1870 = vmul.f32 %v1865, %v1868
  %v1871 = vrot.slane %v1771, 6
  %v1873 = vmul.f32 %v1858, %v1871
  %v1874 = vadd.f32 %v1870, %v1873
  %v1876 = vrot.slane %v1874, 6
  %1877 = vrot.lane.b32.xlu0 %v1876, 64
  %v1878 = vpop.permute.xlu0 %1877
  %v1879 = vsel %vm220, %v1878, 0
  %1881 = vmatprep.subr.mxu0 0.0
  %1882 = vmatpush1.msra.mxu0 0.0
  %1883 = vmatprep.subr.mxu0 0.0
  %1884 = vmatpush1.msra.mxu0 0.0
  %1885 = vmatprep.subr.mxu0 0.0
  %1886 = vmatpush1.msra.mxu0 0.0
  %1887 = vmatprep.subr.mxu0 0.0
  %1888 = vmatpush1.msra.mxu0 0.0
  %1889 = vmatprep.subr.mxu0 0.0
  %1890 = vmatpush1.msra.mxu0 0.0
  %1891 = vmatprep.subr.mxu0 0.0
  %1892 = vmatpush1.msra.mxu0 0.0
  %1893 = vmatprep.subr.mxu0 0.0
  %1894 = vmatpush1.msra.mxu0 0.0
  %1895 = vmatprep.subr.mxu0 0.0
  %1896 = vmatpush1.msra.mxu0 0.0
  %1897 = vmatprep.subr.mxu0 %v121
  %1898 = vmatpush1.msra.mxu0 %v120
  %1899 = vmatprep.subr.mxu0 %v119
  %1900 = vmatpush1.msra.mxu0 %v118
  %1901 = vmatprep.subr.mxu0 %v117
  %1902 = vmatpush1.msra.mxu0 %v116
  %1903 = vmatprep.subr.mxu0 %v115
  %1904 = vmatpush1.msra.mxu0 %v114
  %1905 = vmatprep.subr.mxu0 %v113
  %1906 = vmatpush1.msra.mxu0 %v112
  %1907 = vmatprep.subr.mxu0 %v111
  %1908 = vmatpush1.msra.mxu0 %v110
  %1909 = vmatprep.subr.mxu0 %v109
  %1910 = vmatpush1.msra.mxu0 %v108
  %1911 = vmatprep.subr.mxu0 %v107
  %1912 = vmatpush1.msra.mxu0 %v106
  %1913 = vmatprep.subr.mxu0 0.0
  %1914 = vmatpush2.msra.mxu0 0.0
  %1915 = vmatprep.subr.mxu0 0.0
  %1916 = vmatpush2.msra.mxu0 0.0
  %1917 = vmatprep.subr.mxu0 0.0
  %1918 = vmatpush2.msra.mxu0 0.0
  %1919 = vmatprep.subr.mxu0 0.0
  %1920 = vmatpush2.msra.mxu0 0.0
  %1921 = vmatprep.subr.mxu0 0.0
  %1922 = vmatpush2.msra.mxu0 0.0
  %1923 = vmatprep.subr.mxu0 0.0
  %1924 = vmatpush2.msra.mxu0 0.0
  %1925 = vmatprep.subr.mxu0 0.0
  %1926 = vmatpush2.msra.mxu0 0.0
  %1927 = vmatprep.subr.mxu0 0.0
  %1928 = vmatpush2.msra.mxu0 0.0
  %1929 = vmatprep.subr.mxu0 0.0
  %1930 = vmatpush2.msra.mxu0 0.0
  %1931 = vmatprep.subr.mxu0 0.0
  %1932 = vmatpush2.msra.mxu0 0.0
  %1933 = vmatprep.subr.mxu0 0.0
  %1934 = vmatpush2.msra.mxu0 0.0
  %1935 = vmatprep.subr.mxu0 0.0
  %1936 = vmatpush2.msra.mxu0 0.0
  %1937 = vmatprep.subr.mxu0 0.0
  %1938 = vmatpush2.msra.mxu0 0.0
  %1939 = vmatprep.subr.mxu0 0.0
  %1940 = vmatpush2.msra.mxu0 0.0
  %1941 = vmatprep.subr.mxu0 0.0
  %1942 = vmatpush2.msra.mxu0 0.0
  %1943 = vmatprep.subr.mxu0 0.0
  %1944 = vmatpush2.msra.mxu0 0.0
  %1945 = vmatprep.mubr.f32.mxu0 0.0
  %1946 = vmatmul.mubr.f32.gmra.mxu0 %v1879
  %v1947 = vpop.f32.mrf.mxu0
  %v1948 = vadd.f32 %v1473, %v1947
  %v1949 = vpop.f32.mrf.mxu0
  %v1950 = vadd.f32 %v1477, %v1949
  %1951 = vdwg.mxu0
  %v1952 = vadd.f32 %v1456, %v1948
  %v1953 = vxor.u32 %v1952, 2147483648
  %v1954 = vmul.f32 %v1953, 1.442695
  %v1955 = vpow.pop %v1954
  %v1956 = vadd.f32 %v1955, 1.0
  %v1957 = vrcp.pop %v1956
  %v1958 = vmul.f32 1.0, %v1957
  %v1959 = vmul.f32 %v1958, %v1950
  %v1960 = vadd.f32 %v1458, %v1959
  %v1961 = vtanh.pop %v1960
  %v1962 = vsub.f32 1.0, %v1958
  %1964 = vrot.lane.b32.xlu0 %v1961, 64
  %v1965 = vpop.permute.xlu0 %1964
  %v1967 = vmul.f32 %v1962, %v1965
  %v1969 = vmul.f32 %v1958, %v1876
  %v1970 = vadd.f32 %v1967, %v1969
  %1972 = vrot.lane.b32.xlu0 %v1970, 64
  %v1973 = vpop.permute.xlu0 %1972
  %v1974 = vsel %vm220, %v1973, 0
  %1976 = vmatprep.subr.mxu0 0.0
  %1977 = vmatpush1.msra.mxu0 0.0
  %1978 = vmatprep.subr.mxu0 0.0
  %1979 = vmatpush1.msra.mxu0 0.0
  %1980 = vmatprep.subr.mxu0 0.0
  %1981 = vmatpush1.msra.mxu0 0.0
  %1982 = vmatprep.subr.mxu0 0.0
  %1983 = vmatpush1.msra.mxu0 0.0
  %1984 = vmatprep.subr.mxu0 0.0
  %1985 = vmatpush1.msra.mxu0 0.0
  %1986 = vmatprep.subr.mxu0 0.0
  %1987 = vmatpush1.msra.mxu0 0.0
  %1988 = vmatprep.subr.mxu0 0.0
  %1989 = vmatpush1.msra.mxu0 0.0
  %1990 = vmatprep.subr.mxu0 0.0
  %1991 = vmatpush1.msra.mxu0 0.0
  %1992 = vmatprep.subr.mxu0 %v121
  %1993 = vmatpush1.msra.mxu0 %v120
  %1994 = vmatprep.subr.mxu0 %v119
  %1995 = vmatpush1.msra.mxu0 %v118
  %1996 = vmatprep.subr.mxu0 %v117
  %1997 = vmatpush1.msra.mxu0 %v116
  %1998 = vmatprep.subr.mxu0 %v115
  %1999 = vmatpush1.msra.mxu0 %v114
  %2000 = vmatprep.subr.mxu0 %v113
  %2001 = vmatpush1.msra.mxu0 %v112
  %2002 = vmatprep.subr.mxu0 %v111
  %2003 = vmatpush1.msra.mxu0 %v110
  %2004 = vmatprep.subr.mxu0 %v109
  %2005 = vmatpush1.msra.mxu0 %v108
  %2006 = vmatprep.subr.mxu0 %v107
  %2007 = vmatpush1.msra.mxu0 %v106
  %2008 = vmatprep.subr.mxu0 0.0
  %2009 = vmatpush2.msra.mxu0 0.0
  %2010 = vmatprep.subr.mxu0 0.0
  %2011 = vmatpush2.msra.mxu0 0.0
  %2012 = vmatprep.subr.mxu0 0.0
  %2013 = vmatpush2.msra.mxu0 0.0
  %2014 = vmatprep.subr.mxu0 0.0
  %2015 = vmatpush2.msra.mxu0 0.0
  %2016 = vmatprep.subr.mxu0 0.0
  %2017 = vmatpush2.msra.mxu0 0.0
  %2018 = vmatprep.subr.mxu0 0.0
  %2019 = vmatpush2.msra.mxu0 0.0
  %2020 = vmatprep.subr.mxu0 0.0
  %2021 = vmatpush2.msra.mxu0 0.0
  %2022 = vmatprep.subr.mxu0 0.0
  %2023 = vmatpush2.msra.mxu0 0.0
  %2024 = vmatprep.subr.mxu0 0.0
  %2025 = vmatpush2.msra.mxu0 0.0
  %2026 = vmatprep.subr.mxu0 0.0
  %2027 = vmatpush2.msra.mxu0 0.0
  %2028 = vmatprep.subr.mxu0 0.0
  %2029 = vmatpush2.msra.mxu0 0.0
  %2030 = vmatprep.subr.mxu0 0.0
  %2031 = vmatpush2.msra.mxu0 0.0
  %2032 = vmatprep.subr.mxu0 0.0
  %2033 = vmatpush2.msra.mxu0 0.0
  %2034 = vmatprep.subr.mxu0 0.0
  %2035 = vmatpush2.msra.mxu0 0.0
  %2036 = vmatprep.subr.mxu0 0.0
  %2037 = vmatpush2.msra.mxu0 0.0
  %2038 = vmatprep.subr.mxu0 0.0
  %2039 = vmatpush2.msra.mxu0 0.0
  %2040 = vmatprep.mubr.f32.mxu0 0.0
  %2041 = vmatmul.mubr.f32.gmra.mxu0 %v1974
  %v2042 = vpop.f32.mrf.mxu0
  %v2043 = vadd.f32 %v1473, %v2042
  %v2044 = vpop.f32.mrf.mxu0
  %v2045 = vadd.f32 %v1477, %v2044
  %2046 = vdwg.mxu0
  %v2048 = vrot.slane %v2043, 6
  %v2050 = vadd.f32 %v1456, %v2048
  %v2051 = vxor.u32 %v2050, 2147483648
  %v2052 = vmul.f32 %v2051, 1.442695
  %v2053 = vpow.pop %v2052
  %v2054 = vadd.f32 %v2053, 1.0
  %v2055 = vrcp.pop %v2054
  %v2056 = vmul.f32 1.0, %v2055
  %v2058 = vrot.slane %v2045, 6
  %v2060 = vmul.f32 %v2056, %v2058
  %v2061 = vadd.f32 %v1458, %v2060
  %v2062 = vtanh.pop %v2061
  %v2063 = vsub.f32 1.0, %v2056
  %2065 = vrot.lane.b32.xlu0 %v2062, 64
  %v2066 = vpop.permute.xlu0 %2065
  %v2068 = vmul.f32 %v2063, %v2066
  %v2069 = vrot.slane %v1970, 6
  %v2071 = vmul.f32 %v2056, %v2069
  %v2072 = vadd.f32 %v2068, %v2071
  %v2074 = vrot.slane %v2072, 2
  %2075 = vrot.lane.b32.xlu0 %v2074, 64
  %v2076 = vpop.permute.xlu0 %2075
  %v2077 = vsel %vm220, %v2076, 0
  %2079 = vmatprep.subr.mxu0 0.0
  %2080 = vmatpush1.msra.mxu0 0.0
  %2081 = vmatprep.subr.mxu0 0.0
  %2082 = vmatpush1.msra.mxu0 0.0
  %2083 = vmatprep.subr.mxu0 0.0
  %2084 = vmatpush1.msra.mxu0 0.0
  %2085 = vmatprep.subr.mxu0 0.0
  %2086 = vmatpush1.msra.mxu0 0.0
  %2087 = vmatprep.subr.mxu0 0.0
  %2088 = vmatpush1.msra.mxu0 0.0
  %2089 = vmatprep.subr.mxu0 0.0
  %2090 = vmatpush1.msra.mxu0 0.0
  %2091 = vmatprep.subr.mxu0 0.0
  %2092 = vmatpush1.msra.mxu0 0.0
  %2093 = vmatprep.subr.mxu0 0.0
  %2094 = vmatpush1.msra.mxu0 0.0
  %2095 = vmatprep.subr.mxu0 %v121
  %2096 = vmatpush1.msra.mxu0 %v120
  %2097 = vmatprep.subr.mxu0 %v119
  %2098 = vmatpush1.msra.mxu0 %v118
  %2099 = vmatprep.subr.mxu0 %v117
  %2100 = vmatpush1.msra.mxu0 %v116
  %2101 = vmatprep.subr.mxu0 %v115
  %2102 = vmatpush1.msra.mxu0 %v114
  %2103 = vmatprep.subr.mxu0 %v113
  %2104 = vmatpush1.msra.mxu0 %v112
  %2105 = vmatprep.subr.mxu0 %v111
  %2106 = vmatpush1.msra.mxu0 %v110
  %2107 = vmatprep.subr.mxu0 %v109
  %2108 = vmatpush1.msra.mxu0 %v108
  %2109 = vmatprep.subr.mxu0 %v107
  %2110 = vmatpush1.msra.mxu0 %v106
  %2111 = vmatprep.subr.mxu0 0.0
  %2112 = vmatpush2.msra.mxu0 0.0
  %2113 = vmatprep.subr.mxu0 0.0
  %2114 = vmatpush2.msra.mxu0 0.0
  %2115 = vmatprep.subr.mxu0 0.0
  %2116 = vmatpush2.msra.mxu0 0.0
  %2117 = vmatprep.subr.mxu0 0.0
  %2118 = vmatpush2.msra.mxu0 0.0
  %2119 = vmatprep.subr.mxu0 0.0
  %2120 = vmatpush2.msra.mxu0 0.0
  %2121 = vmatprep.subr.mxu0 0.0
  %2122 = vmatpush2.msra.mxu0 0.0
  %2123 = vmatprep.subr.mxu0 0.0
  %2124 = vmatpush2.msra.mxu0 0.0
  %2125 = vmatprep.subr.mxu0 0.0
  %2126 = vmatpush2.msra.mxu0 0.0
  %2127 = vmatprep.subr.mxu0 0.0
  %2128 = vmatpush2.msra.mxu0 0.0
  %2129 = vmatprep.subr.mxu0 0.0
  %2130 = vmatpush2.msra.mxu0 0.0
  %2131 = vmatprep.subr.mxu0 0.0
  %2132 = vmatpush2.msra.mxu0 0.0
  %2133 = vmatprep.subr.mxu0 0.0
  %2134 = vmatpush2.msra.mxu0 0.0
  %2135 = vmatprep.subr.mxu0 0.0
  %2136 = vmatpush2.msra.mxu0 0.0
  %2137 = vmatprep.subr.mxu0 0.0
  %2138 = vmatpush2.msra.mxu0 0.0
  %2139 = vmatprep.subr.mxu0 0.0
  %2140 = vmatpush2.msra.mxu0 0.0
  %2141 = vmatprep.subr.mxu0 0.0
  %2142 = vmatpush2.msra.mxu0 0.0
  %2143 = vmatprep.mubr.f32.mxu0 0.0
  %2144 = vmatmul.mubr.f32.gmra.mxu0 %v2077
  %v2145 = vpop.f32.mrf.mxu0
  %v2146 = vadd.f32 %v1473, %v2145
  %v2147 = vpop.f32.mrf.mxu0
  %v2148 = vadd.f32 %v1477, %v2147
  %2149 = vdwg.mxu0
  %v2151 = vrot.slane %v2146, 4
  %v2153 = vadd.f32 %v1456, %v2151
  %v2154 = vxor.u32 %v2153, 2147483648
  %v2155 = vmul.f32 %v2154, 1.442695
  %v2156 = vpow.pop %v2155
  %v2157 = vadd.f32 %v2156, 1.0
  %v2158 = vrcp.pop %v2157
  %v2159 = vmul.f32 1.0, %v2158
  %v2161 = vrot.slane %v2148, 4
  %v2163 = vmul.f32 %v2159, %v2161
  %v2164 = vadd.f32 %v1458, %v2163
  %v2165 = vtanh.pop %v2164
  %v2166 = vsub.f32 1.0, %v2159
  %2168 = vrot.lane.b32.xlu0 %v2165, 64
  %v2169 = vpop.permute.xlu0 %2168
  %v2171 = vmul.f32 %v2166, %v2169
  %v2172 = vrot.slane %v2072, 6
  %v2174 = vmul.f32 %v2159, %v2172
  %v2175 = vadd.f32 %v2171, %v2174
  %v2177 = vrot.slane %v2175, 4
  %2178 = vrot.lane.b32.xlu0 %v2177, 64
  %v2179 = vpop.permute.xlu0 %2178
  %v2180 = vsel %vm220, %v2179, 0
  %2182 = vmatprep.subr.mxu0 0.0
  %2183 = vmatpush1.msra.mxu0 0.0
  %2184 = vmatprep.subr.mxu0 0.0
  %2185 = vmatpush1.msra.mxu0 0.0
  %2186 = vmatprep.subr.mxu0 0.0
  %2187 = vmatpush1.msra.mxu0 0.0
  %2188 = vmatprep.subr.mxu0 0.0
  %2189 = vmatpush1.msra.mxu0 0.0
  %2190 = vmatprep.subr.mxu0 0.0
  %2191 = vmatpush1.msra.mxu0 0.0
  %2192 = vmatprep.subr.mxu0 0.0
  %2193 = vmatpush1.msra.mxu0 0.0
  %2194 = vmatprep.subr.mxu0 0.0
  %2195 = vmatpush1.msra.mxu0 0.0
  %2196 = vmatprep.subr.mxu0 0.0
  %2197 = vmatpush1.msra.mxu0 0.0
  %2198 = vmatprep.subr.mxu0 %v121
  %2199 = vmatpush1.msra.mxu0 %v120
  %2200 = vmatprep.subr.mxu0 %v119
  %2201 = vmatpush1.msra.mxu0 %v118
  %2202 = vmatprep.subr.mxu0 %v117
  %2203 = vmatpush1.msra.mxu0 %v116
  %2204 = vmatprep.subr.mxu0 %v115
  %2205 = vmatpush1.msra.mxu0 %v114
  %2206 = vmatprep.subr.mxu0 %v113
  %2207 = vmatpush1.msra.mxu0 %v112
  %2208 = vmatprep.subr.mxu0 %v111
  %2209 = vmatpush1.msra.mxu0 %v110
  %2210 = vmatprep.subr.mxu0 %v109
  %2211 = vmatpush1.msra.mxu0 %v108
  %2212 = vmatprep.subr.mxu0 %v107
  %2213 = vmatpush1.msra.mxu0 %v106
  %2214 = vmatprep.subr.mxu0 0.0
  %2215 = vmatpush2.msra.mxu0 0.0
  %2216 = vmatprep.subr.mxu0 0.0
  %2217 = vmatpush2.msra.mxu0 0.0
  %2218 = vmatprep.subr.mxu0 0.0
  %2219 = vmatpush2.msra.mxu0 0.0
  %2220 = vmatprep.subr.mxu0 0.0
  %2221 = vmatpush2.msra.mxu0 0.0
  %2222 = vmatprep.subr.mxu0 0.0
  %2223 = vmatpush2.msra.mxu0 0.0
  %2224 = vmatprep.subr.mxu0 0.0
  %2225 = vmatpush2.msra.mxu0 0.0
  %2226 = vmatprep.subr.mxu0 0.0
  %2227 = vmatpush2.msra.mxu0 0.0
  %2228 = vmatprep.subr.mxu0 0.0
  %2229 = vmatpush2.msra.mxu0 0.0
  %2230 = vmatprep.subr.mxu0 0.0
  %2231 = vmatpush2.msra.mxu0 0.0
  %2232 = vmatprep.subr.mxu0 0.0
  %2233 = vmatpush2.msra.mxu0 0.0
  %2234 = vmatprep.subr.mxu0 0.0
  %2235 = vmatpush2.msra.mxu0 0.0
  %2236 = vmatprep.subr.mxu0 0.0
  %2237 = vmatpush2.msra.mxu0 0.0
  %2238 = vmatprep.subr.mxu0 0.0
  %2239 = vmatpush2.msra.mxu0 0.0
  %2240 = vmatprep.subr.mxu0 0.0
  %2241 = vmatpush2.msra.mxu0 0.0
  %2242 = vmatprep.subr.mxu0 0.0
  %2243 = vmatpush2.msra.mxu0 0.0
  %2244 = vmatprep.subr.mxu0 0.0
  %2245 = vmatpush2.msra.mxu0 0.0
  %2246 = vmatprep.mubr.f32.mxu0 0.0
  %2247 = vmatmul.mubr.f32.gmra.mxu0 %v2180
  %v2248 = vpop.f32.mrf.mxu0
  %v2249 = vadd.f32 %v1473, %v2248
  %v2250 = vpop.f32.mrf.mxu0
  %v2251 = vadd.f32 %v1477, %v2250
  %2252 = vdwg.mxu0
  %v2254 = vrot.slane %v2249, 2
  %v2256 = vadd.f32 %v1456, %v2254
  %v2257 = vxor.u32 %v2256, 2147483648
  %v2258 = vmul.f32 %v2257, 1.442695
  %v2259 = vpow.pop %v2258
  %v2260 = vadd.f32 %v2259, 1.0
  %v2261 = vrcp.pop %v2260
  %v2262 = vmul.f32 1.0, %v2261
  %v2264 = vrot.slane %v2251, 2
  %v2266 = vmul.f32 %v2262, %v2264
  %v2267 = vadd.f32 %v1458, %v2266
  %v2268 = vtanh.pop %v2267
  %v2269 = vsub.f32 1.0, %v2262
  %2271 = vrot.lane.b32.xlu0 %v2268, 64
  %v2272 = vpop.permute.xlu0 %2271
  %v2274 = vmul.f32 %v2269, %v2272
  %v2275 = vrot.slane %v2175, 6
  %v2277 = vmul.f32 %v2262, %v2275
  %v2278 = vadd.f32 %v2274, %v2277
  %v2280 = vlaneseq
  %v2281 = vshrl.u32 %v2280, 7
  %v2282 = vsub.s32 0, %v2281
  %v2283 = vrot.slane %v179, %v2282
  %v2284 = vlaneseq
  %v2285 = vshrl.u32 %v2284, 7
  %v2286 = vsub.s32 4, %v2285
  %v2287 = vrot.slane %v179, %v2286
  %v2290 = vlaneseq
  %v2291 = vshrl.u32 %v2290, 7
  %v2292 = vsub.s32 0, %v2291
  %v2293 = vrot.slane %v2283, %v2292
  %v2294 = vlaneseq
  %v2295 = vshrl.u32 %v2294, 7
  %v2296 = vsub.s32 0, %v2295
  %v2297 = vrot.slane %v2287, %v2296
  %v2298 = vsel %vm218, %v208, 0
  %2300 = vmatprep.subr.mxu0 0.0
  %2301 = vmatpush1.msra.mxu0 0.0
  %2302 = vmatprep.subr.mxu0 0.0
  %2303 = vmatpush1.msra.mxu0 0.0
  %2304 = vmatprep.subr.mxu0 0.0
  %2305 = vmatpush1.msra.mxu0 0.0
  %2306 = vmatprep.subr.mxu0 0.0
  %2307 = vmatpush1.msra.mxu0 0.0
  %2308 = vmatprep.subr.mxu0 0.0
  %2309 = vmatpush1.msra.mxu0 0.0
  %2310 = vmatprep.subr.mxu0 0.0
  %2311 = vmatpush1.msra.mxu0 0.0
  %2312 = vmatprep.subr.mxu0 0.0
  %2313 = vmatpush1.msra.mxu0 0.0
  %2314 = vmatprep.subr.mxu0 0.0
  %2315 = vmatpush1.msra.mxu0 0.0
  %2316 = vmatprep.subr.mxu0 0.0
  %2317 = vmatpush1.msra.mxu0 0.0
  %2318 = vmatprep.subr.mxu0 0.0
  %2319 = vmatpush1.msra.mxu0 0.0
  %2320 = vmatprep.subr.mxu0 0.0
  %2321 = vmatpush1.msra.mxu0 0.0
  %2322 = vmatprep.subr.mxu0 0.0
  %2323 = vmatpush1.msra.mxu0 0.0
  %2324 = vmatprep.subr.mxu0 %v130
  %2325 = vmatpush1.msra.mxu0 %v129
  %2326 = vmatprep.subr.mxu0 %v128
  %2327 = vmatpush1.msra.mxu0 %v127
  %2328 = vmatprep.subr.mxu0 %v126
  %2329 = vmatpush1.msra.mxu0 %v125
  %2330 = vmatprep.subr.mxu0 %v124
  %2331 = vmatpush1.msra.mxu0 %v123
  %2332 = vmatprep.subr.mxu0 0.0
  %2333 = vmatpush2.msra.mxu0 0.0
  %2334 = vmatprep.subr.mxu0 0.0
  %2335 = vmatpush2.msra.mxu0 0.0
  %2336 = vmatprep.subr.mxu0 0.0
  %2337 = vmatpush2.msra.mxu0 0.0
  %2338 = vmatprep.subr.mxu0 0.0
  %2339 = vmatpush2.msra.mxu0 0.0
  %2340 = vmatprep.subr.mxu0 0.0
  %2341 = vmatpush2.msra.mxu0 0.0
  %2342 = vmatprep.subr.mxu0 0.0
  %2343 = vmatpush2.msra.mxu0 0.0
  %2344 = vmatprep.subr.mxu0 0.0
  %2345 = vmatpush2.msra.mxu0 0.0
  %2346 = vmatprep.subr.mxu0 0.0
  %2347 = vmatpush2.msra.mxu0 0.0
  %2348 = vmatprep.subr.mxu0 0.0
  %2349 = vmatpush2.msra.mxu0 0.0
  %2350 = vmatprep.subr.mxu0 0.0
  %2351 = vmatpush2.msra.mxu0 0.0
  %2352 = vmatprep.subr.mxu0 0.0
  %2353 = vmatpush2.msra.mxu0 0.0
  %2354 = vmatprep.subr.mxu0 0.0
  %2355 = vmatpush2.msra.mxu0 0.0
  %2356 = vmatprep.subr.mxu0 0.0
  %2357 = vmatpush2.msra.mxu0 0.0
  %2358 = vmatprep.subr.mxu0 0.0
  %2359 = vmatpush2.msra.mxu0 0.0
  %2360 = vmatprep.subr.mxu0 0.0
  %2361 = vmatpush2.msra.mxu0 0.0
  %2362 = vmatprep.subr.mxu0 0.0
  %2363 = vmatpush2.msra.mxu0 0.0
  %2364 = vmatprep.mubr.f32.mxu0 0.0
  %2365 = vmatmul.mubr.f32.gmra.mxu0 %v2298
  %v2366 = vpop.f32.mrf.mxu0
  %v2367 = vadd.f32 %v2293, %v2366
  %v2368 = vpop.f32.mrf.mxu0
  %v2369 = vadd.f32 %v2297, %v2368
  %2370 = vdwg.mxu0
  %v2371 = vlaneseq
  %v2372 = vshrl.u32 %v2371, 7
  %v2373 = vsub.s32 1, %v2372
  %v2374 = vrot.slane %v179, %v2373
  %v2375 = vlaneseq
  %v2376 = vshrl.u32 %v2375, 7
  %v2377 = vsub.s32 5, %v2376
  %v2378 = vrot.slane %v179, %v2377
  %v2381 = vlaneseq
  %v2382 = vshrl.u32 %v2381, 7
  %v2383 = vsub.s32 1, %v2382
  %v2384 = vrot.slane %v2374, %v2383
  %v2385 = vlaneseq
  %v2386 = vshrl.u32 %v2385, 7
  %v2387 = vsub.s32 1, %v2386
  %v2388 = vrot.slane %v2378, %v2387
  %2389 = vrot.lane.b32.xlu0 %v1322, 64
  %v2390 = vpop.permute.xlu0 %2389
  %v2391 = vsel %vm220, %v2390, 0
  %2393 = vmatprep.subr.mxu0 0.0
  %2394 = vmatpush1.msra.mxu0 0.0
  %2395 = vmatprep.subr.mxu0 0.0
  %2396 = vmatpush1.msra.mxu0 0.0
  %2397 = vmatprep.subr.mxu0 0.0
  %2398 = vmatpush1.msra.mxu0 0.0
  %2399 = vmatprep.subr.mxu0 0.0
  %2400 = vmatpush1.msra.mxu0 0.0
  %2401 = vmatprep.subr.mxu0 0.0
  %2402 = vmatpush1.msra.mxu0 0.0
  %2403 = vmatprep.subr.mxu0 0.0
  %2404 = vmatpush1.msra.mxu0 0.0
  %2405 = vmatprep.subr.mxu0 0.0
  %2406 = vmatpush1.msra.mxu0 0.0
  %2407 = vmatprep.subr.mxu0 0.0
  %2408 = vmatpush1.msra.mxu0 0.0
  %2409 = vmatprep.subr.mxu0 %v146
  %2410 = vmatpush1.msra.mxu0 %v145
  %2411 = vmatprep.subr.mxu0 %v144
  %2412 = vmatpush1.msra.mxu0 %v143
  %2413 = vmatprep.subr.mxu0 %v142
  %2414 = vmatpush1.msra.mxu0 %v141
  %2415 = vmatprep.subr.mxu0 %v140
  %2416 = vmatpush1.msra.mxu0 %v139
  %2417 = vmatprep.subr.mxu0 %v138
  %2418 = vmatpush1.msra.mxu0 %v137
  %2419 = vmatprep.subr.mxu0 %v136
  %2420 = vmatpush1.msra.mxu0 %v135
  %2421 = vmatprep.subr.mxu0 %v134
  %2422 = vmatpush1.msra.mxu0 %v133
  %2423 = vmatprep.subr.mxu0 %v132
  %2424 = vmatpush1.msra.mxu0 %v131
  %2425 = vmatprep.subr.mxu0 0.0
  %2426 = vmatpush2.msra.mxu0 0.0
  %2427 = vmatprep.subr.mxu0 0.0
  %2428 = vmatpush2.msra.mxu0 0.0
  %2429 = vmatprep.subr.mxu0 0.0
  %2430 = vmatpush2.msra.mxu0 0.0
  %2431 = vmatprep.subr.mxu0 0.0
  %2432 = vmatpush2.msra.mxu0 0.0
  %2433 = vmatprep.subr.mxu0 0.0
  %2434 = vmatpush2.msra.mxu0 0.0
  %2435 = vmatprep.subr.mxu0 0.0
  %2436 = vmatpush2.msra.mxu0 0.0
  %2437 = vmatprep.subr.mxu0 0.0
  %2438 = vmatpush2.msra.mxu0 0.0
  %2439 = vmatprep.subr.mxu0 0.0
  %2440 = vmatpush2.msra.mxu0 0.0
  %2441 = vmatprep.subr.mxu0 0.0
  %2442 = vmatpush2.msra.mxu0 0.0
  %2443 = vmatprep.subr.mxu0 0.0
  %2444 = vmatpush2.msra.mxu0 0.0
  %2445 = vmatprep.subr.mxu0 0.0
  %2446 = vmatpush2.msra.mxu0 0.0
  %2447 = vmatprep.subr.mxu0 0.0
  %2448 = vmatpush2.msra.mxu0 0.0
  %2449 = vmatprep.subr.mxu0 0.0
  %2450 = vmatpush2.msra.mxu0 0.0
  %2451 = vmatprep.subr.mxu0 0.0
  %2452 = vmatpush2.msra.mxu0 0.0
  %2453 = vmatprep.subr.mxu0 0.0
  %2454 = vmatpush2.msra.mxu0 0.0
  %2455 = vmatprep.subr.mxu0 0.0
  %2456 = vmatpush2.msra.mxu0 0.0
  %2457 = vmatprep.mubr.f32.mxu0 0.0
  %2458 = vmatmul.mubr.f32.gmra.mxu0 %v2391
  %v2459 = vpop.f32.mrf.mxu0
  %v2460 = vadd.f32 %v2384, %v2459
  %v2461 = vpop.f32.mrf.mxu0
  %v2462 = vadd.f32 %v2388, %v2461
  %2463 = vdwg.mxu0
  %v2464 = vadd.f32 %v2367, %v2460
  %v2465 = vxor.u32 %v2464, 2147483648
  %v2466 = vmul.f32 %v2465, 1.442695
  %v2467 = vpow.pop %v2466
  %v2468 = vadd.f32 %v2467, 1.0
  %v2469 = vrcp.pop %v2468
  %v2470 = vmul.f32 1.0, %v2469
  %v2471 = vmul.f32 %v2470, %v2462
  %v2472 = vadd.f32 %v2369, %v2471
  %v2473 = vtanh.pop %v2472
  %v2474 = vsub.f32 1.0, %v2470
  %2476 = vrot.lane.b32.xlu0 %v2473, 64
  %v2477 = vpop.permute.xlu0 %2476
  %v2479 = vmul.f32 %v2474, %v2477
  %v2480 = vmul.f32 %v2470, %v1322
  %v2481 = vadd.f32 %v2479, %v2480
  %v2482 = vlaneseq
  %v2483 = vshrl.u32 %v2482, 7
  %v2484 = vsub.s32 2, %v2483
  %v2485 = vrot.slane %v179, %v2484
  %v2486 = vlaneseq
  %v2487 = vshrl.u32 %v2486, 7
  %v2488 = vsub.s32 6, %v2487
  %v2489 = vrot.slane %v179, %v2488
  %v2492 = vlaneseq
  %v2493 = vshrl.u32 %v2492, 7
  %v2494 = vsub.s32 2, %v2493
  %v2495 = vrot.slane %v2485, %v2494
  %v2496 = vlaneseq
  %v2497 = vshrl.u32 %v2496, 7
  %v2498 = vsub.s32 2, %v2497
  %v2499 = vrot.slane %v2489, %v2498
  %2501 = vrot.lane.b32.xlu0 %v2481, 64
  %v2502 = vpop.permute.xlu0 %2501
  %v2503 = vsel %vm220, %v2502, 0
  %2505 = vmatprep.subr.mxu0 0.0
  %2506 = vmatpush1.msra.mxu0 0.0
  %2507 = vmatprep.subr.mxu0 0.0
  %2508 = vmatpush1.msra.mxu0 0.0
  %2509 = vmatprep.subr.mxu0 0.0
  %2510 = vmatpush1.msra.mxu0 0.0
  %2511 = vmatprep.subr.mxu0 0.0
  %2512 = vmatpush1.msra.mxu0 0.0
  %2513 = vmatprep.subr.mxu0 0.0
  %2514 = vmatpush1.msra.mxu0 0.0
  %2515 = vmatprep.subr.mxu0 0.0
  %2516 = vmatpush1.msra.mxu0 0.0
  %2517 = vmatprep.subr.mxu0 0.0
  %2518 = vmatpush1.msra.mxu0 0.0
  %2519 = vmatprep.subr.mxu0 0.0
  %2520 = vmatpush1.msra.mxu0 0.0
  %2521 = vmatprep.subr.mxu0 %v162
  %2522 = vmatpush1.msra.mxu0 %v161
  %2523 = vmatprep.subr.mxu0 %v160
  %2524 = vmatpush1.msra.mxu0 %v159
  %2525 = vmatprep.subr.mxu0 %v158
  %2526 = vmatpush1.msra.mxu0 %v157
  %2527 = vmatprep.subr.mxu0 %v156
  %2528 = vmatpush1.msra.mxu0 %v155
  %2529 = vmatprep.subr.mxu0 %v154
  %2530 = vmatpush1.msra.mxu0 %v153
  %2531 = vmatprep.subr.mxu0 %v152
  %2532 = vmatpush1.msra.mxu0 %v151
  %2533 = vmatprep.subr.mxu0 %v150
  %2534 = vmatpush1.msra.mxu0 %v149
  %2535 = vmatprep.subr.mxu0 %v148
  %2536 = vmatpush1.msra.mxu0 %v147
  %2537 = vmatprep.subr.mxu0 0.0
  %2538 = vmatpush2.msra.mxu0 0.0
  %2539 = vmatprep.subr.mxu0 0.0
  %2540 = vmatpush2.msra.mxu0 0.0
  %2541 = vmatprep.subr.mxu0 0.0
  %2542 = vmatpush2.msra.mxu0 0.0
  %2543 = vmatprep.subr.mxu0 0.0
  %2544 = vmatpush2.msra.mxu0 0.0
  %2545 = vmatprep.subr.mxu0 0.0
  %2546 = vmatpush2.msra.mxu0 0.0
  %2547 = vmatprep.subr.mxu0 0.0
  %2548 = vmatpush2.msra.mxu0 0.0
  %2549 = vmatprep.subr.mxu0 0.0
  %2550 = vmatpush2.msra.mxu0 0.0
  %2551 = vmatprep.subr.mxu0 0.0
  %2552 = vmatpush2.msra.mxu0 0.0
  %2553 = vmatprep.subr.mxu0 0.0
  %2554 = vmatpush2.msra.mxu0 0.0
  %2555 = vmatprep.subr.mxu0 0.0
  %2556 = vmatpush2.msra.mxu0 0.0
  %2557 = vmatprep.subr.mxu0 0.0
  %2558 = vmatpush2.msra.mxu0 0.0
  %2559 = vmatprep.subr.mxu0 0.0
  %2560 = vmatpush2.msra.mxu0 0.0
  %2561 = vmatprep.subr.mxu0 0.0
  %2562 = vmatpush2.msra.mxu0 0.0
  %2563 = vmatprep.subr.mxu0 0.0
  %2564 = vmatpush2.msra.mxu0 0.0
  %2565 = vmatprep.subr.mxu0 0.0
  %2566 = vmatpush2.msra.mxu0 0.0
  %2567 = vmatprep.subr.mxu0 0.0
  %2568 = vmatpush2.msra.mxu0 0.0
  %2569 = vmatprep.mubr.f32.mxu0 0.0
  %2570 = vmatmul.mubr.f32.gmra.mxu0 %v2503
  %v2571 = vpop.f32.mrf.mxu0
  %v2572 = vadd.f32 %v2495, %v2571
  %v2573 = vpop.f32.mrf.mxu0
  %v2574 = vadd.f32 %v2499, %v2573
  %2575 = vdwg.mxu0
  %v2576 = vlaneseq
  %v2577 = vshrl.u32 %v2576, 7
  %v2578 = vsub.s32 3, %v2577
  %v2579 = vrot.slane %v179, %v2578
  %v2580 = vlaneseq
  %v2581 = vshrl.u32 %v2580, 7
  %v2582 = vsub.s32 7, %v2581
  %v2583 = vrot.slane %v179, %v2582
  %v2586 = vlaneseq
  %v2587 = vshrl.u32 %v2586, 7
  %v2588 = vsub.s32 3, %v2587
  %v2589 = vrot.slane %v2579, %v2588
  %v2590 = vlaneseq
  %v2591 = vshrl.u32 %v2590, 7
  %v2592 = vsub.s32 3, %v2591
  %v2593 = vrot.slane %v2583, %v2592
  %v2595 = vrot.slane %v2278, 6
  %2596 = vrot.lane.b32.xlu0 %v2595, 64
  %v2597 = vpop.permute.xlu0 %2596
  %v2598 = vsel %vm220, %v2597, 0
  %2600 = vmatprep.subr.mxu0 0.0
  %2601 = vmatpush1.msra.mxu0 0.0
  %2602 = vmatprep.subr.mxu0 0.0
  %2603 = vmatpush1.msra.mxu0 0.0
  %2604 = vmatprep.subr.mxu0 0.0
  %2605 = vmatpush1.msra.mxu0 0.0
  %2606 = vmatprep.subr.mxu0 0.0
  %2607 = vmatpush1.msra.mxu0 0.0
  %2608 = vmatprep.subr.mxu0 0.0
  %2609 = vmatpush1.msra.mxu0 0.0
  %2610 = vmatprep.subr.mxu0 0.0
  %2611 = vmatpush1.msra.mxu0 0.0
  %2612 = vmatprep.subr.mxu0 0.0
  %2613 = vmatpush1.msra.mxu0 0.0
  %2614 = vmatprep.subr.mxu0 0.0
  %2615 = vmatpush1.msra.mxu0 0.0
  %2616 = vmatprep.subr.mxu0 %v178
  %2617 = vmatpush1.msra.mxu0 %v177
  %2618 = vmatprep.subr.mxu0 %v176
  %2619 = vmatpush1.msra.mxu0 %v175
  %2620 = vmatprep.subr.mxu0 %v174
  %2621 = vmatpush1.msra.mxu0 %v173
  %2622 = vmatprep.subr.mxu0 %v172
  %2623 = vmatpush1.msra.mxu0 %v171
  %2624 = vmatprep.subr.mxu0 %v170
  %2625 = vmatpush1.msra.mxu0 %v169
  %2626 = vmatprep.subr.mxu0 %v168
  %2627 = vmatpush1.msra.mxu0 %v167
  %2628 = vmatprep.subr.mxu0 %v166
  %2629 = vmatpush1.msra.mxu0 %v165
  %2630 = vmatprep.subr.mxu0 %v164
  %2631 = vmatpush1.msra.mxu0 %v163
  %2632 = vmatprep.subr.mxu0 0.0
  %2633 = vmatpush2.msra.mxu0 0.0
  %2634 = vmatprep.subr.mxu0 0.0
  %2635 = vmatpush2.msra.mxu0 0.0
  %2636 = vmatprep.subr.mxu0 0.0
  %2637 = vmatpush2.msra.mxu0 0.0
  %2638 = vmatprep.subr.mxu0 0.0
  %2639 = vmatpush2.msra.mxu0 0.0
  %2640 = vmatprep.subr.mxu0 0.0
  %2641 = vmatpush2.msra.mxu0 0.0
  %2642 = vmatprep.subr.mxu0 0.0
  %2643 = vmatpush2.msra.mxu0 0.0
  %2644 = vmatprep.subr.mxu0 0.0
  %2645 = vmatpush2.msra.mxu0 0.0
  %2646 = vmatprep.subr.mxu0 0.0
  %2647 = vmatpush2.msra.mxu0 0.0
  %2648 = vmatprep.subr.mxu0 0.0
  %2649 = vmatpush2.msra.mxu0 0.0
  %2650 = vmatprep.subr.mxu0 0.0
  %2651 = vmatpush2.msra.mxu0 0.0
  %2652 = vmatprep.subr.mxu0 0.0
  %2653 = vmatpush2.msra.mxu0 0.0
  %2654 = vmatprep.subr.mxu0 0.0
  %2655 = vmatpush2.msra.mxu0 0.0
  %2656 = vmatprep.subr.mxu0 0.0
  %2657 = vmatpush2.msra.mxu0 0.0
  %2658 = vmatprep.subr.mxu0 0.0
  %2659 = vmatpush2.msra.mxu0 0.0
  %2660 = vmatprep.subr.mxu0 0.0
  %2661 = vmatpush2.msra.mxu0 0.0
  %2662 = vmatprep.subr.mxu0 0.0
  %2663 = vmatpush2.msra.mxu0 0.0
  %2664 = vmatprep.mubr.f32.mxu0 0.0
  %2665 = vmatmul.mubr.f32.gmra.mxu0 %v2598
  %v2666 = vpop.f32.mrf.mxu0
  %v2667 = vadd.f32 %v2589, %v2666
  %v2668 = vpop.f32.mrf.mxu0
  %v2669 = vadd.f32 %v2593, %v2668
  %2670 = vdwg.mxu0
  %v2671 = vadd.f32 %v2572, %v2667
  %v2672 = vxor.u32 %v2671, 2147483648
  %v2673 = vmul.f32 %v2672, 1.442695
  %v2674 = vpow.pop %v2673
  %v2675 = vadd.f32 %v2674, 1.0
  %v2676 = vrcp.pop %v2675
  %v2677 = vmul.f32 1.0, %v2676
  %v2678 = vmul.f32 %v2677, %v2669
  %v2679 = vadd.f32 %v2574, %v2678
  %v2680 = vtanh.pop %v2679
  %v2681 = vsub.f32 1.0, %v2677
  %2683 = vrot.lane.b32.xlu0 %v2680, 64
  %v2684 = vpop.permute.xlu0 %2683
  %v2686 = vmul.f32 %v2681, %v2684
  %v2688 = vmul.f32 %v2677, %v2595
  %v2689 = vadd.f32 %v2686, %v2688
  %v2690 = vlaneseq
  %v2691 = vshrl.u32 %v2690, 7
  %v2692 = vsub.s32 0, %v2691
  %v2693 = vrot.slane %v188, %v2692
  %2695 = vrot.lane.b32.xlu0 %v2689, 64
  %v2696 = vpop.permute.xlu0 %2695
  %v2697 = vsel %vm220, %v2696, 0
  %2699 = vmatprep.subr.mxu0 0.0
  %2700 = vmatpush1.msra.mxu0 0.0
  %2701 = vmatprep.subr.mxu0 0.0
  %2702 = vmatpush1.msra.mxu0 0.0
  %2703 = vmatprep.subr.mxu0 0.0
  %2704 = vmatpush1.msra.mxu0 0.0
  %2705 = vmatprep.subr.mxu0 0.0
  %2706 = vmatpush1.msra.mxu0 0.0
  %2707 = vmatprep.subr.mxu0 0.0
  %2708 = vmatpush1.msra.mxu0 0.0
  %2709 = vmatprep.subr.mxu0 0.0
  %2710 = vmatpush1.msra.mxu0 0.0
  %2711 = vmatprep.subr.mxu0 0.0
  %2712 = vmatpush1.msra.mxu0 0.0
  %2713 = vmatprep.subr.mxu0 0.0
  %2714 = vmatpush1.msra.mxu0 0.0
  %2715 = vmatprep.subr.mxu0 0.0
  %2716 = vmatpush1.msra.mxu0 %v187
  %2717 = vmatprep.subr.mxu0 0.0
  %2718 = vmatpush1.msra.mxu0 %v186
  %2719 = vmatprep.subr.mxu0 0.0
  %2720 = vmatpush1.msra.mxu0 %v185
  %2721 = vmatprep.subr.mxu0 0.0
  %2722 = vmatpush1.msra.mxu0 %v184
  %2723 = vmatprep.subr.mxu0 0.0
  %2724 = vmatpush1.msra.mxu0 %v183
  %2725 = vmatprep.subr.mxu0 0.0
  %2726 = vmatpush1.msra.mxu0 %v182
  %2727 = vmatprep.subr.mxu0 0.0
  %2728 = vmatpush1.msra.mxu0 %v181
  %2729 = vmatprep.subr.mxu0 0.0
  %2730 = vmatpush1.msra.mxu0 %v180
  %2731 = vmatprep.subr.mxu0 0.0
  %2732 = vmatpush2.msra.mxu0 0.0
  %2733 = vmatprep.subr.mxu0 0.0
  %2734 = vmatpush2.msra.mxu0 0.0
  %2735 = vmatprep.subr.mxu0 0.0
  %2736 = vmatpush2.msra.mxu0 0.0
  %2737 = vmatprep.subr.mxu0 0.0
  %2738 = vmatpush2.msra.mxu0 0.0
  %2739 = vmatprep.subr.mxu0 0.0
  %2740 = vmatpush2.msra.mxu0 0.0
  %2741 = vmatprep.subr.mxu0 0.0
  %2742 = vmatpush2.msra.mxu0 0.0
  %2743 = vmatprep.subr.mxu0 0.0
  %2744 = vmatpush2.msra.mxu0 0.0
  %2745 = vmatprep.subr.mxu0 0.0
  %2746 = vmatpush2.msra.mxu0 0.0
  %2747 = vmatprep.subr.mxu0 0.0
  %2748 = vmatpush2.msra.mxu0 0.0
  %2749 = vmatprep.subr.mxu0 0.0
  %2750 = vmatpush2.msra.mxu0 0.0
  %2751 = vmatprep.subr.mxu0 0.0
  %2752 = vmatpush2.msra.mxu0 0.0
  %2753 = vmatprep.subr.mxu0 0.0
  %2754 = vmatpush2.msra.mxu0 0.0
  %2755 = vmatprep.subr.mxu0 0.0
  %2756 = vmatpush2.msra.mxu0 0.0
  %2757 = vmatprep.subr.mxu0 0.0
  %2758 = vmatpush2.msra.mxu0 0.0
  %2759 = vmatprep.subr.mxu0 0.0
  %2760 = vmatpush2.msra.mxu0 0.0
  %2761 = vmatprep.subr.mxu0 0.0
  %2762 = vmatpush2.msra.mxu0 0.0
  %2763 = vmatprep.mubr.f32.mxu0 0.0
  %2764 = vmatmul.mubr.f32.gmra.mxu0 %v2697
  %v2765 = vpop.f32.mrf.mxu0
  %v2766 = vadd.f32 %v2693, %v2765
  %v2767 = vpop.f32.mrf.mxu0
  %2768 = vdwg.mxu0
  %v2770 = vsel %vm218, %v2766, 0
  %2772 = vmatprep.subr.mxu0 0.0
  %2773 = vmatpush1.msra.mxu0 0.0
  %2774 = vmatprep.subr.mxu0 0.0
  %2775 = vmatpush1.msra.mxu0 0.0
  %2776 = vmatprep.subr.mxu0 0.0
  %2777 = vmatpush1.msra.mxu0 0.0
  %2778 = vmatprep.subr.mxu0 0.0
  %2779 = vmatpush1.msra.mxu0 0.0
  %2780 = vmatprep.subr.mxu0 0.0
  %2781 = vmatpush1.msra.mxu0 0.0
  %2782 = vmatprep.subr.mxu0 0.0
  %2783 = vmatpush1.msra.mxu0 0.0
  %2784 = vmatprep.subr.mxu0 0.0
  %2785 = vmatpush1.msra.mxu0 0.0
  %2786 = vmatprep.subr.mxu0 0.0
  %2787 = vmatpush1.msra.mxu0 0.0
  %2788 = vmatprep.subr.mxu0 0.0
  %2789 = vmatpush1.msra.mxu0 0.0
  %2790 = vmatprep.subr.mxu0 0.0
  %2791 = vmatpush1.msra.mxu0 0.0
  %2792 = vmatprep.subr.mxu0 0.0
  %2793 = vmatpush1.msra.mxu0 0.0
  %2794 = vmatprep.subr.mxu0 0.0
  %2795 = vmatpush1.msra.mxu0 0.0
  %2796 = vmatprep.subr.mxu0 %v130
  %2797 = vmatpush1.msra.mxu0 %v129
  %2798 = vmatprep.subr.mxu0 %v128
  %2799 = vmatpush1.msra.mxu0 %v127
  %2800 = vmatprep.subr.mxu0 %v126
  %2801 = vmatpush1.msra.mxu0 %v125
  %2802 = vmatprep.subr.mxu0 %v124
  %2803 = vmatpush1.msra.mxu0 %v123
  %2804 = vmatprep.subr.mxu0 0.0
  %2805 = vmatpush2.msra.mxu0 0.0
  %2806 = vmatprep.subr.mxu0 0.0
  %2807 = vmatpush2.msra.mxu0 0.0
  %2808 = vmatprep.subr.mxu0 0.0
  %2809 = vmatpush2.msra.mxu0 0.0
  %2810 = vmatprep.subr.mxu0 0.0
  %2811 = vmatpush2.msra.mxu0 0.0
  %2812 = vmatprep.subr.mxu0 0.0
  %2813 = vmatpush2.msra.mxu0 0.0
  %2814 = vmatprep.subr.mxu0 0.0
  %2815 = vmatpush2.msra.mxu0 0.0
  %2816 = vmatprep.subr.mxu0 0.0
  %2817 = vmatpush2.msra.mxu0 0.0
  %2818 = vmatprep.subr.mxu0 0.0
  %2819 = vmatpush2.msra.mxu0 0.0
  %2820 = vmatprep.subr.mxu0 0.0
  %2821 = vmatpush2.msra.mxu0 0.0
  %2822 = vmatprep.subr.mxu0 0.0
  %2823 = vmatpush2.msra.mxu0 0.0
  %2824 = vmatprep.subr.mxu0 0.0
  %2825 = vmatpush2.msra.mxu0 0.0
  %2826 = vmatprep.subr.mxu0 0.0
  %2827 = vmatpush2.msra.mxu0 0.0
  %2828 = vmatprep.subr.mxu0 0.0
  %2829 = vmatpush2.msra.mxu0 0.0
  %2830 = vmatprep.subr.mxu0 0.0
  %2831 = vmatpush2.msra.mxu0 0.0
  %2832 = vmatprep.subr.mxu0 0.0
  %2833 = vmatpush2.msra.mxu0 0.0
  %2834 = vmatprep.subr.mxu0 0.0
  %2835 = vmatpush2.msra.mxu0 0.0
  %2836 = vmatprep.mubr.f32.mxu0 0.0
  %2837 = vmatmul.mubr.f32.gmra.mxu0 %v2770
  %v2838 = vpop.f32.mrf.mxu0
  %v2839 = vadd.f32 %v2293, %v2838
  %v2840 = vpop.f32.mrf.mxu0
  %v2841 = vadd.f32 %v2297, %v2840
  %2842 = vdwg.mxu0
  %2843 = vmatprep.subr.mxu0 0.0
  %2844 = vmatpush1.msra.mxu0 0.0
  %2845 = vmatprep.subr.mxu0 0.0
  %2846 = vmatpush1.msra.mxu0 0.0
  %2847 = vmatprep.subr.mxu0 0.0
  %2848 = vmatpush1.msra.mxu0 0.0
  %2849 = vmatprep.subr.mxu0 0.0
  %2850 = vmatpush1.msra.mxu0 0.0
  %2851 = vmatprep.subr.mxu0 0.0
  %2852 = vmatpush1.msra.mxu0 0.0
  %2853 = vmatprep.subr.mxu0 0.0
  %2854 = vmatpush1.msra.mxu0 0.0
  %2855 = vmatprep.subr.mxu0 0.0
  %2856 = vmatpush1.msra.mxu0 0.0
  %2857 = vmatprep.subr.mxu0 0.0
  %2858 = vmatpush1.msra.mxu0 0.0
  %2859 = vmatprep.subr.mxu0 %v146
  %2860 = vmatpush1.msra.mxu0 %v145
  %2861 = vmatprep.subr.mxu0 %v144
  %2862 = vmatpush1.msra.mxu0 %v143
  %2863 = vmatprep.subr.mxu0 %v142
  %2864 = vmatpush1.msra.mxu0 %v141
  %2865 = vmatprep.subr.mxu0 %v140
  %2866 = vmatpush1.msra.mxu0 %v139
  %2867 = vmatprep.subr.mxu0 %v138
  %2868 = vmatpush1.msra.mxu0 %v137
  %2869 = vmatprep.subr.mxu0 %v136
  %2870 = vmatpush1.msra.mxu0 %v135
  %2871 = vmatprep.subr.mxu0 %v134
  %2872 = vmatpush1.msra.mxu0 %v133
  %2873 = vmatprep.subr.mxu0 %v132
  %2874 = vmatpush1.msra.mxu0 %v131
  %2875 = vmatprep.subr.mxu0 0.0
  %2876 = vmatpush2.msra.mxu0 0.0
  %2877 = vmatprep.subr.mxu0 0.0
  %2878 = vmatpush2.msra.mxu0 0.0
  %2879 = vmatprep.subr.mxu0 0.0
  %2880 = vmatpush2.msra.mxu0 0.0
  %2881 = vmatprep.subr.mxu0 0.0
  %2882 = vmatpush2.msra.mxu0 0.0
  %2883 = vmatprep.subr.mxu0 0.0
  %2884 = vmatpush2.msra.mxu0 0.0
  %2885 = vmatprep.subr.mxu0 0.0
  %2886 = vmatpush2.msra.mxu0 0.0
  %2887 = vmatprep.subr.mxu0 0.0
  %2888 = vmatpush2.msra.mxu0 0.0
  %2889 = vmatprep.subr.mxu0 0.0
  %2890 = vmatpush2.msra.mxu0 0.0
  %2891 = vmatprep.subr.mxu0 0.0
  %2892 = vmatpush2.msra.mxu0 0.0
  %2893 = vmatprep.subr.mxu0 0.0
  %2894 = vmatpush2.msra.mxu0 0.0
  %2895 = vmatprep.subr.mxu0 0.0
  %2896 = vmatpush2.msra.mxu0 0.0
  %2897 = vmatprep.subr.mxu0 0.0
  %2898 = vmatpush2.msra.mxu0 0.0
  %2899 = vmatprep.subr.mxu0 0.0
  %2900 = vmatpush2.msra.mxu0 0.0
  %2901 = vmatprep.subr.mxu0 0.0
  %2902 = vmatpush2.msra.mxu0 0.0
  %2903 = vmatprep.subr.mxu0 0.0
  %2904 = vmatpush2.msra.mxu0 0.0
  %2905 = vmatprep.subr.mxu0 0.0
  %2906 = vmatpush2.msra.mxu0 0.0
  %2907 = vmatprep.mubr.f32.mxu0 0.0
  %2908 = vmatmul.mubr.f32.gmra.mxu0 %v2503
  %v2909 = vpop.f32.mrf.mxu0
  %v2910 = vadd.f32 %v2384, %v2909
  %v2911 = vpop.f32.mrf.mxu0
  %v2912 = vadd.f32 %v2388, %v2911
  %2913 = vdwg.mxu0
  %v2914 = vadd.f32 %v2839, %v2910
  %v2915 = vxor.u32 %v2914, 2147483648
  %v2916 = vmul.f32 %v2915, 1.442695
  %v2917 = vpow.pop %v2916
  %v2918 = vadd.f32 %v2917, 1.0
  %v2919 = vrcp.pop %v2918
  %v2920 = vmul.f32 1.0, %v2919
  %v2921 = vmul.f32 %v2920, %v2912
  %v2922 = vadd.f32 %v2841, %v2921
  %v2923 = vtanh.pop %v2922
  %v2924 = vsub.f32 1.0, %v2920
  %2926 = vrot.lane.b32.xlu0 %v2923, 64
  %v2927 = vpop.permute.xlu0 %2926
  %v2929 = vmul.f32 %v2924, %v2927
  %v2930 = vmul.f32 %v2920, %v2481
  %v2931 = vadd.f32 %v2929, %v2930
  %2933 = vrot.lane.b32.xlu0 %v2931, 64
  %v2934 = vpop.permute.xlu0 %2933
  %v2935 = vsel %vm220, %v2934, 0
  %2937 = vmatprep.subr.mxu0 0.0
  %2938 = vmatpush1.msra.mxu0 0.0
  %2939 = vmatprep.subr.mxu0 0.0
  %2940 = vmatpush1.msra.mxu0 0.0
  %2941 = vmatprep.subr.mxu0 0.0
  %2942 = vmatpush1.msra.mxu0 0.0
  %2943 = vmatprep.subr.mxu0 0.0
  %2944 = vmatpush1.msra.mxu0 0.0
  %2945 = vmatprep.subr.mxu0 0.0
  %2946 = vmatpush1.msra.mxu0 0.0
  %2947 = vmatprep.subr.mxu0 0.0
  %2948 = vmatpush1.msra.mxu0 0.0
  %2949 = vmatprep.subr.mxu0 0.0
  %2950 = vmatpush1.msra.mxu0 0.0
  %2951 = vmatprep.subr.mxu0 0.0
  %2952 = vmatpush1.msra.mxu0 0.0
  %2953 = vmatprep.subr.mxu0 %v162
  %2954 = vmatpush1.msra.mxu0 %v161
  %2955 = vmatprep.subr.mxu0 %v160
  %2956 = vmatpush1.msra.mxu0 %v159
  %2957 = vmatprep.subr.mxu0 %v158
  %2958 = vmatpush1.msra.mxu0 %v157
  %2959 = vmatprep.subr.mxu0 %v156
  %2960 = vmatpush1.msra.mxu0 %v155
  %2961 = vmatprep.subr.mxu0 %v154
  %2962 = vmatpush1.msra.mxu0 %v153
  %2963 = vmatprep.subr.mxu0 %v152
  %2964 = vmatpush1.msra.mxu0 %v151
  %2965 = vmatprep.subr.mxu0 %v150
  %2966 = vmatpush1.msra.mxu0 %v149
  %2967 = vmatprep.subr.mxu0 %v148
  %2968 = vmatpush1.msra.mxu0 %v147
  %2969 = vmatprep.subr.mxu0 0.0
  %2970 = vmatpush2.msra.mxu0 0.0
  %2971 = vmatprep.subr.mxu0 0.0
  %2972 = vmatpush2.msra.mxu0 0.0
  %2973 = vmatprep.subr.mxu0 0.0
  %2974 = vmatpush2.msra.mxu0 0.0
  %2975 = vmatprep.subr.mxu0 0.0
  %2976 = vmatpush2.msra.mxu0 0.0
  %2977 = vmatprep.subr.mxu0 0.0
  %2978 = vmatpush2.msra.mxu0 0.0
  %2979 = vmatprep.subr.mxu0 0.0
  %2980 = vmatpush2.msra.mxu0 0.0
  %2981 = vmatprep.subr.mxu0 0.0
  %2982 = vmatpush2.msra.mxu0 0.0
  %2983 = vmatprep.subr.mxu0 0.0
  %2984 = vmatpush2.msra.mxu0 0.0
  %2985 = vmatprep.subr.mxu0 0.0
  %2986 = vmatpush2.msra.mxu0 0.0
  %2987 = vmatprep.subr.mxu0 0.0
  %2988 = vmatpush2.msra.mxu0 0.0
  %2989 = vmatprep.subr.mxu0 0.0
  %2990 = vmatpush2.msra.mxu0 0.0
  %2991 = vmatprep.subr.mxu0 0.0
  %2992 = vmatpush2.msra.mxu0 0.0
  %2993 = vmatprep.subr.mxu0 0.0
  %2994 = vmatpush2.msra.mxu0 0.0
  %2995 = vmatprep.subr.mxu0 0.0
  %2996 = vmatpush2.msra.mxu0 0.0
  %2997 = vmatprep.subr.mxu0 0.0
  %2998 = vmatpush2.msra.mxu0 0.0
  %2999 = vmatprep.subr.mxu0 0.0
  %3000 = vmatpush2.msra.mxu0 0.0
  %3001 = vmatprep.mubr.f32.mxu0 0.0
  %3002 = vmatmul.mubr.f32.gmra.mxu0 %v2935
  %v3003 = vpop.f32.mrf.mxu0
  %v3004 = vadd.f32 %v2495, %v3003
  %v3005 = vpop.f32.mrf.mxu0
  %v3006 = vadd.f32 %v2499, %v3005
  %3007 = vdwg.mxu0
  %3008 = vmatprep.subr.mxu0 0.0
  %3009 = vmatpush1.msra.mxu0 0.0
  %3010 = vmatprep.subr.mxu0 0.0
  %3011 = vmatpush1.msra.mxu0 0.0
  %3012 = vmatprep.subr.mxu0 0.0
  %3013 = vmatpush1.msra.mxu0 0.0
  %3014 = vmatprep.subr.mxu0 0.0
  %3015 = vmatpush1.msra.mxu0 0.0
  %3016 = vmatprep.subr.mxu0 0.0
  %3017 = vmatpush1.msra.mxu0 0.0
  %3018 = vmatprep.subr.mxu0 0.0
  %3019 = vmatpush1.msra.mxu0 0.0
  %3020 = vmatprep.subr.mxu0 0.0
  %3021 = vmatpush1.msra.mxu0 0.0
  %3022 = vmatprep.subr.mxu0 0.0
  %3023 = vmatpush1.msra.mxu0 0.0
  %3024 = vmatprep.subr.mxu0 %v178
  %3025 = vmatpush1.msra.mxu0 %v177
  %3026 = vmatprep.subr.mxu0 %v176
  %3027 = vmatpush1.msra.mxu0 %v175
  %3028 = vmatprep.subr.mxu0 %v174
  %3029 = vmatpush1.msra.mxu0 %v173
  %3030 = vmatprep.subr.mxu0 %v172
  %3031 = vmatpush1.msra.mxu0 %v171
  %3032 = vmatprep.subr.mxu0 %v170
  %3033 = vmatpush1.msra.mxu0 %v169
  %3034 = vmatprep.subr.mxu0 %v168
  %3035 = vmatpush1.msra.mxu0 %v167
  %3036 = vmatprep.subr.mxu0 %v166
  %3037 = vmatpush1.msra.mxu0 %v165
  %3038 = vmatprep.subr.mxu0 %v164
  %3039 = vmatpush1.msra.mxu0 %v163
  %3040 = vmatprep.subr.mxu0 0.0
  %3041 = vmatpush2.msra.mxu0 0.0
  %3042 = vmatprep.subr.mxu0 0.0
  %3043 = vmatpush2.msra.mxu0 0.0
  %3044 = vmatprep.subr.mxu0 0.0
  %3045 = vmatpush2.msra.mxu0 0.0
  %3046 = vmatprep.subr.mxu0 0.0
  %3047 = vmatpush2.msra.mxu0 0.0
  %3048 = vmatprep.subr.mxu0 0.0
  %3049 = vmatpush2.msra.mxu0 0.0
  %3050 = vmatprep.subr.mxu0 0.0
  %3051 = vmatpush2.msra.mxu0 0.0
  %3052 = vmatprep.subr.mxu0 0.0
  %3053 = vmatpush2.msra.mxu0 0.0
  %3054 = vmatprep.subr.mxu0 0.0
  %3055 = vmatpush2.msra.mxu0 0.0
  %3056 = vmatprep.subr.mxu0 0.0
  %3057 = vmatpush2.msra.mxu0 0.0
  %3058 = vmatprep.subr.mxu0 0.0
  %3059 = vmatpush2.msra.mxu0 0.0
  %3060 = vmatprep.subr.mxu0 0.0
  %3061 = vmatpush2.msra.mxu0 0.0
  %3062 = vmatprep.subr.mxu0 0.0
  %3063 = vmatpush2.msra.mxu0 0.0
  %3064 = vmatprep.subr.mxu0 0.0
  %3065 = vmatpush2.msra.mxu0 0.0
  %3066 = vmatprep.subr.mxu0 0.0
  %3067 = vmatpush2.msra.mxu0 0.0
  %3068 = vmatprep.subr.mxu0 0.0
  %3069 = vmatpush2.msra.mxu0 0.0
  %3070 = vmatprep.subr.mxu0 0.0
  %3071 = vmatpush2.msra.mxu0 0.0
  %3072 = vmatprep.mubr.f32.mxu0 0.0
  %3073 = vmatmul.mubr.f32.gmra.mxu0 %v2697
  %v3074 = vpop.f32.mrf.mxu0
  %v3075 = vadd.f32 %v2589, %v3074
  %v3076 = vpop.f32.mrf.mxu0
  %v3077 = vadd.f32 %v2593, %v3076
  %3078 = vdwg.mxu0
  %v3079 = vadd.f32 %v3004, %v3075
  %v3080 = vxor.u32 %v3079, 2147483648
  %v3081 = vmul.f32 %v3080, 1.442695
  %v3082 = vpow.pop %v3081
  %v3083 = vadd.f32 %v3082, 1.0
  %v3084 = vrcp.pop %v3083
  %v3085 = vmul.f32 1.0, %v3084
  %v3086 = vmul.f32 %v3085, %v3077
  %v3087 = vadd.f32 %v3006, %v3086
  %v3088 = vtanh.pop %v3087
  %v3089 = vsub.f32 1.0, %v3085
  %3091 = vrot.lane.b32.xlu0 %v3088, 64
  %v3092 = vpop.permute.xlu0 %3091
  %v3094 = vmul.f32 %v3089, %v3092
  %v3095 = vmul.f32 %v3085, %v2689
  %v3096 = vadd.f32 %v3094, %v3095
  %3098 = vrot.lane.b32.xlu0 %v3096, 64
  %v3099 = vpop.permute.xlu0 %3098
  %v3100 = vsel %vm220, %v3099, 0
  %3102 = vmatprep.subr.mxu0 0.0
  %3103 = vmatpush1.msra.mxu0 0.0
  %3104 = vmatprep.subr.mxu0 0.0
  %3105 = vmatpush1.msra.mxu0 0.0
  %3106 = vmatprep.subr.mxu0 0.0
  %3107 = vmatpush1.msra.mxu0 0.0
  %3108 = vmatprep.subr.mxu0 0.0
  %3109 = vmatpush1.msra.mxu0 0.0
  %3110 = vmatprep.subr.mxu0 0.0
  %3111 = vmatpush1.msra.mxu0 0.0
  %3112 = vmatprep.subr.mxu0 0.0
  %3113 = vmatpush1.msra.mxu0 0.0
  %3114 = vmatprep.subr.mxu0 0.0
  %3115 = vmatpush1.msra.mxu0 0.0
  %3116 = vmatprep.subr.mxu0 0.0
  %3117 = vmatpush1.msra.mxu0 0.0
  %3118 = vmatprep.subr.mxu0 0.0
  %3119 = vmatpush1.msra.mxu0 %v187
  %3120 = vmatprep.subr.mxu0 0.0
  %3121 = vmatpush1.msra.mxu0 %v186
  %3122 = vmatprep.subr.mxu0 0.0
  %3123 = vmatpush1.msra.mxu0 %v185
  %3124 = vmatprep.subr.mxu0 0.0
  %3125 = vmatpush1.msra.mxu0 %v184
  %3126 = vmatprep.subr.mxu0 0.0
  %3127 = vmatpush1.msra.mxu0 %v183
  %3128 = vmatprep.subr.mxu0 0.0
  %3129 = vmatpush1.msra.mxu0 %v182
  %3130 = vmatprep.subr.mxu0 0.0
  %3131 = vmatpush1.msra.mxu0 %v181
  %3132 = vmatprep.subr.mxu0 0.0
  %3133 = vmatpush1.msra.mxu0 %v180
  %3134 = vmatprep.subr.mxu0 0.0
  %3135 = vmatpush2.msra.mxu0 0.0
  %3136 = vmatprep.subr.mxu0 0.0
  %3137 = vmatpush2.msra.mxu0 0.0
  %3138 = vmatprep.subr.mxu0 0.0
  %3139 = vmatpush2.msra.mxu0 0.0
  %3140 = vmatprep.subr.mxu0 0.0
  %3141 = vmatpush2.msra.mxu0 0.0
  %3142 = vmatprep.subr.mxu0 0.0
  %3143 = vmatpush2.msra.mxu0 0.0
  %3144 = vmatprep.subr.mxu0 0.0
  %3145 = vmatpush2.msra.mxu0 0.0
  %3146 = vmatprep.subr.mxu0 0.0
  %3147 = vmatpush2.msra.mxu0 0.0
  %3148 = vmatprep.subr.mxu0 0.0
  %3149 = vmatpush2.msra.mxu0 0.0
  %3150 = vmatprep.subr.mxu0 0.0
  %3151 = vmatpush2.msra.mxu0 0.0
  %3152 = vmatprep.subr.mxu0 0.0
  %3153 = vmatpush2.msra.mxu0 0.0
  %3154 = vmatprep.subr.mxu0 0.0
  %3155 = vmatpush2.msra.mxu0 0.0
  %3156 = vmatprep.subr.mxu0 0.0
  %3157 = vmatpush2.msra.mxu0 0.0
  %3158 = vmatprep.subr.mxu0 0.0
  %3159 = vmatpush2.msra.mxu0 0.0
  %3160 = vmatprep.subr.mxu0 0.0
  %3161 = vmatpush2.msra.mxu0 0.0
  %3162 = vmatprep.subr.mxu0 0.0
  %3163 = vmatpush2.msra.mxu0 0.0
  %3164 = vmatprep.subr.mxu0 0.0
  %3165 = vmatpush2.msra.mxu0 0.0
  %3166 = vmatprep.mubr.f32.mxu0 0.0
  %3167 = vmatmul.mubr.f32.gmra.mxu0 %v3100
  %v3168 = vpop.f32.mrf.mxu0
  %v3169 = vadd.f32 %v2693, %v3168
  %v3170 = vpop.f32.mrf.mxu0
  %3171 = vdwg.mxu0
  %v3173 = vsel %vm218, %v3169, 0
  %3175 = vmatprep.subr.mxu0 0.0
  %3176 = vmatpush1.msra.mxu0 0.0
  %3177 = vmatprep.subr.mxu0 0.0
  %3178 = vmatpush1.msra.mxu0 0.0
  %3179 = vmatprep.subr.mxu0 0.0
  %3180 = vmatpush1.msra.mxu0 0.0
  %3181 = vmatprep.subr.mxu0 0.0
  %3182 = vmatpush1.msra.mxu0 0.0
  %3183 = vmatprep.subr.mxu0 0.0
  %3184 = vmatpush1.msra.mxu0 0.0
  %3185 = vmatprep.subr.mxu0 0.0
  %3186 = vmatpush1.msra.mxu0 0.0
  %3187 = vmatprep.subr.mxu0 0.0
  %3188 = vmatpush1.msra.mxu0 0.0
  %3189 = vmatprep.subr.mxu0 0.0
  %3190 = vmatpush1.msra.mxu0 0.0
  %3191 = vmatprep.subr.mxu0 0.0
  %3192 = vmatpush1.msra.mxu0 0.0
  %3193 = vmatprep.subr.mxu0 0.0
  %3194 = vmatpush1.msra.mxu0 0.0
  %3195 = vmatprep.subr.mxu0 0.0
  %3196 = vmatpush1.msra.mxu0 0.0
  %3197 = vmatprep.subr.mxu0 0.0
  %3198 = vmatpush1.msra.mxu0 0.0
  %3199 = vmatprep.subr.mxu0 %v130
  %3200 = vmatpush1.msra.mxu0 %v129
  %3201 = vmatprep.subr.mxu0 %v128
  %3202 = vmatpush1.msra.mxu0 %v127
  %3203 = vmatprep.subr.mxu0 %v126
  %3204 = vmatpush1.msra.mxu0 %v125
  %3205 = vmatprep.subr.mxu0 %v124
  %3206 = vmatpush1.msra.mxu0 %v123
  %3207 = vmatprep.subr.mxu0 0.0
  %3208 = vmatpush2.msra.mxu0 0.0
  %3209 = vmatprep.subr.mxu0 0.0
  %3210 = vmatpush2.msra.mxu0 0.0
  %3211 = vmatprep.subr.mxu0 0.0
  %3212 = vmatpush2.msra.mxu0 0.0
  %3213 = vmatprep.subr.mxu0 0.0
  %3214 = vmatpush2.msra.mxu0 0.0
  %3215 = vmatprep.subr.mxu0 0.0
  %3216 = vmatpush2.msra.mxu0 0.0
  %3217 = vmatprep.subr.mxu0 0.0
  %3218 = vmatpush2.msra.mxu0 0.0
  %3219 = vmatprep.subr.mxu0 0.0
  %3220 = vmatpush2.msra.mxu0 0.0
  %3221 = vmatprep.subr.mxu0 0.0
  %3222 = vmatpush2.msra.mxu0 0.0
  %3223 = vmatprep.subr.mxu0 0.0
  %3224 = vmatpush2.msra.mxu0 0.0
  %3225 = vmatprep.subr.mxu0 0.0
  %3226 = vmatpush2.msra.mxu0 0.0
  %3227 = vmatprep.subr.mxu0 0.0
  %3228 = vmatpush2.msra.mxu0 0.0
  %3229 = vmatprep.subr.mxu0 0.0
  %3230 = vmatpush2.msra.mxu0 0.0
  %3231 = vmatprep.subr.mxu0 0.0
  %3232 = vmatpush2.msra.mxu0 0.0
  %3233 = vmatprep.subr.mxu0 0.0
  %3234 = vmatpush2.msra.mxu0 0.0
  %3235 = vmatprep.subr.mxu0 0.0
  %3236 = vmatpush2.msra.mxu0 0.0
  %3237 = vmatprep.subr.mxu0 0.0
  %3238 = vmatpush2.msra.mxu0 0.0
  %3239 = vmatprep.mubr.f32.mxu0 0.0
  %3240 = vmatmul.mubr.f32.gmra.mxu0 %v3173
  %v3241 = vpop.f32.mrf.mxu0
  %v3242 = vadd.f32 %v2293, %v3241
  %v3243 = vpop.f32.mrf.mxu0
  %v3244 = vadd.f32 %v2297, %v3243
  %3245 = vdwg.mxu0
  %3246 = vmatprep.subr.mxu0 0.0
  %3247 = vmatpush1.msra.mxu0 0.0
  %3248 = vmatprep.subr.mxu0 0.0
  %3249 = vmatpush1.msra.mxu0 0.0
  %3250 = vmatprep.subr.mxu0 0.0
  %3251 = vmatpush1.msra.mxu0 0.0
  %3252 = vmatprep.subr.mxu0 0.0
  %3253 = vmatpush1.msra.mxu0 0.0
  %3254 = vmatprep.subr.mxu0 0.0
  %3255 = vmatpush1.msra.mxu0 0.0
  %3256 = vmatprep.subr.mxu0 0.0
  %3257 = vmatpush1.msra.mxu0 0.0
  %3258 = vmatprep.subr.mxu0 0.0
  %3259 = vmatpush1.msra.mxu0 0.0
  %3260 = vmatprep.subr.mxu0 0.0
  %3261 = vmatpush1.msra.mxu0 0.0
  %3262 = vmatprep.subr.mxu0 %v146
  %3263 = vmatpush1.msra.mxu0 %v145
  %3264 = vmatprep.subr.mxu0 %v144
  %3265 = vmatpush1.msra.mxu0 %v143
  %3266 = vmatprep.subr.mxu0 %v142
  %3267 = vmatpush1.msra.mxu0 %v141
  %3268 = vmatprep.subr.mxu0 %v140
  %3269 = vmatpush1.msra.mxu0 %v139
  %3270 = vmatprep.subr.mxu0 %v138
  %3271 = vmatpush1.msra.mxu0 %v137
  %3272 = vmatprep.subr.mxu0 %v136
  %3273 = vmatpush1.msra.mxu0 %v135
  %3274 = vmatprep.subr.mxu0 %v134
  %3275 = vmatpush1.msra.mxu0 %v133
  %3276 = vmatprep.subr.mxu0 %v132
  %3277 = vmatpush1.msra.mxu0 %v131
  %3278 = vmatprep.subr.mxu0 0.0
  %3279 = vmatpush2.msra.mxu0 0.0
  %3280 = vmatprep.subr.mxu0 0.0
  %3281 = vmatpush2.msra.mxu0 0.0
  %3282 = vmatprep.subr.mxu0 0.0
  %3283 = vmatpush2.msra.mxu0 0.0
  %3284 = vmatprep.subr.mxu0 0.0
  %3285 = vmatpush2.msra.mxu0 0.0
  %3286 = vmatprep.subr.mxu0 0.0
  %3287 = vmatpush2.msra.mxu0 0.0
  %3288 = vmatprep.subr.mxu0 0.0
  %3289 = vmatpush2.msra.mxu0 0.0
  %3290 = vmatprep.subr.mxu0 0.0
  %3291 = vmatpush2.msra.mxu0 0.0
  %3292 = vmatprep.subr.mxu0 0.0
  %3293 = vmatpush2.msra.mxu0 0.0
  %3294 = vmatprep.subr.mxu0 0.0
  %3295 = vmatpush2.msra.mxu0 0.0
  %3296 = vmatprep.subr.mxu0 0.0
  %3297 = vmatpush2.msra.mxu0 0.0
  %3298 = vmatprep.subr.mxu0 0.0
  %3299 = vmatpush2.msra.mxu0 0.0
  %3300 = vmatprep.subr.mxu0 0.0
  %3301 = vmatpush2.msra.mxu0 0.0
  %3302 = vmatprep.subr.mxu0 0.0
  %3303 = vmatpush2.msra.mxu0 0.0
  %3304 = vmatprep.subr.mxu0 0.0
  %3305 = vmatpush2.msra.mxu0 0.0
  %3306 = vmatprep.subr.mxu0 0.0
  %3307 = vmatpush2.msra.mxu0 0.0
  %3308 = vmatprep.subr.mxu0 0.0
  %3309 = vmatpush2.msra.mxu0 0.0
  %3310 = vmatprep.mubr.f32.mxu0 0.0
  %3311 = vmatmul.mubr.f32.gmra.mxu0 %v2935
  %v3312 = vpop.f32.mrf.mxu0
  %v3313 = vadd.f32 %v2384, %v3312
  %v3314 = vpop.f32.mrf.mxu0
  %v3315 = vadd.f32 %v2388, %v3314
  %3316 = vdwg.mxu0
  %v3317 = vadd.f32 %v3242, %v3313
  %v3318 = vxor.u32 %v3317, 2147483648
  %v3319 = vmul.f32 %v3318, 1.442695
  %v3320 = vpow.pop %v3319
  %v3321 = vadd.f32 %v3320, 1.0
  %v3322 = vrcp.pop %v3321
  %v3323 = vmul.f32 1.0, %v3322
  %v3324 = vmul.f32 %v3323, %v3315
  %v3325 = vadd.f32 %v3244, %v3324
  %v3326 = vtanh.pop %v3325
  %v3327 = vsub.f32 1.0, %v3323
  %3329 = vrot.lane.b32.xlu0 %v3326, 64
  %v3330 = vpop.permute.xlu0 %3329
  %v3332 = vmul.f32 %v3327, %v3330
  %v3333 = vmul.f32 %v3323, %v2931
  %v3334 = vadd.f32 %v3332, %v3333
  %3336 = vrot.lane.b32.xlu0 %v3334, 64
  %v3337 = vpop.permute.xlu0 %3336
  %v3338 = vsel %vm220, %v3337, 0
  %3340 = vmatprep.subr.mxu0 0.0
  %3341 = vmatpush1.msra.mxu0 0.0
  %3342 = vmatprep.subr.mxu0 0.0
  %3343 = vmatpush1.msra.mxu0 0.0
  %3344 = vmatprep.subr.mxu0 0.0
  %3345 = vmatpush1.msra.mxu0 0.0
  %3346 = vmatprep.subr.mxu0 0.0
  %3347 = vmatpush1.msra.mxu0 0.0
  %3348 = vmatprep.subr.mxu0 0.0
  %3349 = vmatpush1.msra.mxu0 0.0
  %3350 = vmatprep.subr.mxu0 0.0
  %3351 = vmatpush1.msra.mxu0 0.0
  %3352 = vmatprep.subr.mxu0 0.0
  %3353 = vmatpush1.msra.mxu0 0.0
  %3354 = vmatprep.subr.mxu0 0.0
  %3355 = vmatpush1.msra.mxu0 0.0
  %3356 = vmatprep.subr.mxu0 %v162
  %3357 = vmatpush1.msra.mxu0 %v161
  %3358 = vmatprep.subr.mxu0 %v160
  %3359 = vmatpush1.msra.mxu0 %v159
  %3360 = vmatprep.subr.mxu0 %v158
  %3361 = vmatpush1.msra.mxu0 %v157
  %3362 = vmatprep.subr.mxu0 %v156
  %3363 = vmatpush1.msra.mxu0 %v155
  %3364 = vmatprep.subr.mxu0 %v154
  %3365 = vmatpush1.msra.mxu0 %v153
  %3366 = vmatprep.subr.mxu0 %v152
  %3367 = vmatpush1.msra.mxu0 %v151
  %3368 = vmatprep.subr.mxu0 %v150
  %3369 = vmatpush1.msra.mxu0 %v149
  %3370 = vmatprep.subr.mxu0 %v148
  %3371 = vmatpush1.msra.mxu0 %v147
  %3372 = vmatprep.subr.mxu0 0.0
  %3373 = vmatpush2.msra.mxu0 0.0
  %3374 = vmatprep.subr.mxu0 0.0
  %3375 = vmatpush2.msra.mxu0 0.0
  %3376 = vmatprep.subr.mxu0 0.0
  %3377 = vmatpush2.msra.mxu0 0.0
  %3378 = vmatprep.subr.mxu0 0.0
  %3379 = vmatpush2.msra.mxu0 0.0
  %3380 = vmatprep.subr.mxu0 0.0
  %3381 = vmatpush2.msra.mxu0 0.0
  %3382 = vmatprep.subr.mxu0 0.0
  %3383 = vmatpush2.msra.mxu0 0.0
  %3384 = vmatprep.subr.mxu0 0.0
  %3385 = vmatpush2.msra.mxu0 0.0
  %3386 = vmatprep.subr.mxu0 0.0
  %3387 = vmatpush2.msra.mxu0 0.0
  %3388 = vmatprep.subr.mxu0 0.0
  %3389 = vmatpush2.msra.mxu0 0.0
  %3390 = vmatprep.subr.mxu0 0.0
  %3391 = vmatpush2.msra.mxu0 0.0
  %3392 = vmatprep.subr.mxu0 0.0
  %3393 = vmatpush2.msra.mxu0 0.0
  %3394 = vmatprep.subr.mxu0 0.0
  %3395 = vmatpush2.msra.mxu0 0.0
  %3396 = vmatprep.subr.mxu0 0.0
  %3397 = vmatpush2.msra.mxu0 0.0
  %3398 = vmatprep.subr.mxu0 0.0
  %3399 = vmatpush2.msra.mxu0 0.0
  %3400 = vmatprep.subr.mxu0 0.0
  %3401 = vmatpush2.msra.mxu0 0.0
  %3402 = vmatprep.subr.mxu0 0.0
  %3403 = vmatpush2.msra.mxu0 0.0
  %3404 = vmatprep.mubr.f32.mxu0 0.0
  %3405 = vmatmul.mubr.f32.gmra.mxu0 %v3338
  %v3406 = vpop.f32.mrf.mxu0
  %v3407 = vadd.f32 %v2495, %v3406
  %v3408 = vpop.f32.mrf.mxu0
  %v3409 = vadd.f32 %v2499, %v3408
  %3410 = vdwg.mxu0
  %3411 = vmatprep.subr.mxu0 0.0
  %3412 = vmatpush1.msra.mxu0 0.0
  %3413 = vmatprep.subr.mxu0 0.0
  %3414 = vmatpush1.msra.mxu0 0.0
  %3415 = vmatprep.subr.mxu0 0.0
  %3416 = vmatpush1.msra.mxu0 0.0
  %3417 = vmatprep.subr.mxu0 0.0
  %3418 = vmatpush1.msra.mxu0 0.0
  %3419 = vmatprep.subr.mxu0 0.0
  %3420 = vmatpush1.msra.mxu0 0.0
  %3421 = vmatprep.subr.mxu0 0.0
  %3422 = vmatpush1.msra.mxu0 0.0
  %3423 = vmatprep.subr.mxu0 0.0
  %3424 = vmatpush1.msra.mxu0 0.0
  %3425 = vmatprep.subr.mxu0 0.0
  %3426 = vmatpush1.msra.mxu0 0.0
  %3427 = vmatprep.subr.mxu0 %v178
  %3428 = vmatpush1.msra.mxu0 %v177
  %3429 = vmatprep.subr.mxu0 %v176
  %3430 = vmatpush1.msra.mxu0 %v175
  %3431 = vmatprep.subr.mxu0 %v174
  %3432 = vmatpush1.msra.mxu0 %v173
  %3433 = vmatprep.subr.mxu0 %v172
  %3434 = vmatpush1.msra.mxu0 %v171
  %3435 = vmatprep.subr.mxu0 %v170
  %3436 = vmatpush1.msra.mxu0 %v169
  %3437 = vmatprep.subr.mxu0 %v168
  %3438 = vmatpush1.msra.mxu0 %v167
  %3439 = vmatprep.subr.mxu0 %v166
  %3440 = vmatpush1.msra.mxu0 %v165
  %3441 = vmatprep.subr.mxu0 %v164
  %3442 = vmatpush1.msra.mxu0 %v163
  %3443 = vmatprep.subr.mxu0 0.0
  %3444 = vmatpush2.msra.mxu0 0.0
  %3445 = vmatprep.subr.mxu0 0.0
  %3446 = vmatpush2.msra.mxu0 0.0
  %3447 = vmatprep.subr.mxu0 0.0
  %3448 = vmatpush2.msra.mxu0 0.0
  %3449 = vmatprep.subr.mxu0 0.0
  %3450 = vmatpush2.msra.mxu0 0.0
  %3451 = vmatprep.subr.mxu0 0.0
  %3452 = vmatpush2.msra.mxu0 0.0
  %3453 = vmatprep.subr.mxu0 0.0
  %3454 = vmatpush2.msra.mxu0 0.0
  %3455 = vmatprep.subr.mxu0 0.0
  %3456 = vmatpush2.msra.mxu0 0.0
  %3457 = vmatprep.subr.mxu0 0.0
  %3458 = vmatpush2.msra.mxu0 0.0
  %3459 = vmatprep.subr.mxu0 0.0
  %3460 = vmatpush2.msra.mxu0 0.0
  %3461 = vmatprep.subr.mxu0 0.0
  %3462 = vmatpush2.msra.mxu0 0.0
  %3463 = vmatprep.subr.mxu0 0.0
  %3464 = vmatpush2.msra.mxu0 0.0
  %3465 = vmatprep.subr.mxu0 0.0
  %3466 = vmatpush2.msra.mxu0 0.0
  %3467 = vmatprep.subr.mxu0 0.0
  %3468 = vmatpush2.msra.mxu0 0.0
  %3469 = vmatprep.subr.mxu0 0.0
  %3470 = vmatpush2.msra.mxu0 0.0
  %3471 = vmatprep.subr.mxu0 0.0
  %3472 = vmatpush2.msra.mxu0 0.0
  %3473 = vmatprep.subr.mxu0 0.0
  %3474 = vmatpush2.msra.mxu0 0.0
  %3475 = vmatprep.mubr.f32.mxu0 0.0
  %3476 = vmatmul.mubr.f32.gmra.mxu0 %v3100
  %v3477 = vpop.f32.mrf.mxu0
  %v3478 = vadd.f32 %v2589, %v3477
  %v3479 = vpop.f32.mrf.mxu0
  %v3480 = vadd.f32 %v2593, %v3479
  %3481 = vdwg.mxu0
  %v3482 = vadd.f32 %v3407, %v3478
  %v3483 = vxor.u32 %v3482, 2147483648
  %v3484 = vmul.f32 %v3483, 1.442695
  %v3485 = vpow.pop %v3484
  %v3486 = vadd.f32 %v3485, 1.0
  %v3487 = vrcp.pop %v3486
  %v3488 = vmul.f32 1.0, %v3487
  %v3489 = vmul.f32 %v3488, %v3480
  %v3490 = vadd.f32 %v3409, %v3489
  %v3491 = vtanh.pop %v3490
  %v3492 = vsub.f32 1.0, %v3488
  %3494 = vrot.lane.b32.xlu0 %v3491, 64
  %v3495 = vpop.permute.xlu0 %3494
  %v3497 = vmul.f32 %v3492, %v3495
  %v3498 = vmul.f32 %v3488, %v3096
  %v3499 = vadd.f32 %v3497, %v3498
  %3501 = vrot.lane.b32.xlu0 %v3499, 64
  %v3502 = vpop.permute.xlu0 %3501
  %v3503 = vsel %vm220, %v3502, 0
  %3505 = vmatprep.subr.mxu0 0.0
  %3506 = vmatpush1.msra.mxu0 0.0
  %3507 = vmatprep.subr.mxu0 0.0
  %3508 = vmatpush1.msra.mxu0 0.0
  %3509 = vmatprep.subr.mxu0 0.0
  %3510 = vmatpush1.msra.mxu0 0.0
  %3511 = vmatprep.subr.mxu0 0.0
  %3512 = vmatpush1.msra.mxu0 0.0
  %3513 = vmatprep.subr.mxu0 0.0
  %3514 = vmatpush1.msra.mxu0 0.0
  %3515 = vmatprep.subr.mxu0 0.0
  %3516 = vmatpush1.msra.mxu0 0.0
  %3517 = vmatprep.subr.mxu0 0.0
  %3518 = vmatpush1.msra.mxu0 0.0
  %3519 = vmatprep.subr.mxu0 0.0
  %3520 = vmatpush1.msra.mxu0 0.0
  %3521 = vmatprep.subr.mxu0 0.0
  %3522 = vmatpush1.msra.mxu0 %v187
  %3523 = vmatprep.subr.mxu0 0.0
  %3524 = vmatpush1.msra.mxu0 %v186
  %3525 = vmatprep.subr.mxu0 0.0
  %3526 = vmatpush1.msra.mxu0 %v185
  %3527 = vmatprep.subr.mxu0 0.0
  %3528 = vmatpush1.msra.mxu0 %v184
  %3529 = vmatprep.subr.mxu0 0.0
  %3530 = vmatpush1.msra.mxu0 %v183
  %3531 = vmatprep.subr.mxu0 0.0
  %3532 = vmatpush1.msra.mxu0 %v182
  %3533 = vmatprep.subr.mxu0 0.0
  %3534 = vmatpush1.msra.mxu0 %v181
  %3535 = vmatprep.subr.mxu0 0.0
  %3536 = vmatpush1.msra.mxu0 %v180
  %3537 = vmatprep.subr.mxu0 0.0
  %3538 = vmatpush2.msra.mxu0 0.0
  %3539 = vmatprep.subr.mxu0 0.0
  %3540 = vmatpush2.msra.mxu0 0.0
  %3541 = vmatprep.subr.mxu0 0.0
  %3542 = vmatpush2.msra.mxu0 0.0
  %3543 = vmatprep.subr.mxu0 0.0
  %3544 = vmatpush2.msra.mxu0 0.0
  %3545 = vmatprep.subr.mxu0 0.0
  %3546 = vmatpush2.msra.mxu0 0.0
  %3547 = vmatprep.subr.mxu0 0.0
  %3548 = vmatpush2.msra.mxu0 0.0
  %3549 = vmatprep.subr.mxu0 0.0
  %3550 = vmatpush2.msra.mxu0 0.0
  %3551 = vmatprep.subr.mxu0 0.0
  %3552 = vmatpush2.msra.mxu0 0.0
  %3553 = vmatprep.subr.mxu0 0.0
  %3554 = vmatpush2.msra.mxu0 0.0
  %3555 = vmatprep.subr.mxu0 0.0
  %3556 = vmatpush2.msra.mxu0 0.0
  %3557 = vmatprep.subr.mxu0 0.0
  %3558 = vmatpush2.msra.mxu0 0.0
  %3559 = vmatprep.subr.mxu0 0.0
  %3560 = vmatpush2.msra.mxu0 0.0
  %3561 = vmatprep.subr.mxu0 0.0
  %3562 = vmatpush2.msra.mxu0 0.0
  %3563 = vmatprep.subr.mxu0 0.0
  %3564 = vmatpush2.msra.mxu0 0.0
  %3565 = vmatprep.subr.mxu0 0.0
  %3566 = vmatpush2.msra.mxu0 0.0
  %3567 = vmatprep.subr.mxu0 0.0
  %3568 = vmatpush2.msra.mxu0 0.0
  %3569 = vmatprep.mubr.f32.mxu0 0.0
  %3570 = vmatmul.mubr.f32.gmra.mxu0 %v3503
  %v3571 = vpop.f32.mrf.mxu0
  %v3572 = vadd.f32 %v2693, %v3571
  %v3573 = vpop.f32.mrf.mxu0
  %3574 = vdwg.mxu0
  %v3576 = vsel %vm218, %v3572, 0
  %3578 = vmatprep.subr.mxu0 0.0
  %3579 = vmatpush1.msra.mxu0 0.0
  %3580 = vmatprep.subr.mxu0 0.0
  %3581 = vmatpush1.msra.mxu0 0.0
  %3582 = vmatprep.subr.mxu0 0.0
  %3583 = vmatpush1.msra.mxu0 0.0
  %3584 = vmatprep.subr.mxu0 0.0
  %3585 = vmatpush1.msra.mxu0 0.0
  %3586 = vmatprep.subr.mxu0 0.0
  %3587 = vmatpush1.msra.mxu0 0.0
  %3588 = vmatprep.subr.mxu0 0.0
  %3589 = vmatpush1.msra.mxu0 0.0
  %3590 = vmatprep.subr.mxu0 0.0
  %3591 = vmatpush1.msra.mxu0 0.0
  %3592 = vmatprep.subr.mxu0 0.0
  %3593 = vmatpush1.msra.mxu0 0.0
  %3594 = vmatprep.subr.mxu0 0.0
  %3595 = vmatpush1.msra.mxu0 0.0
  %3596 = vmatprep.subr.mxu0 0.0
  %3597 = vmatpush1.msra.mxu0 0.0
  %3598 = vmatprep.subr.mxu0 0.0
  %3599 = vmatpush1.msra.mxu0 0.0
  %3600 = vmatprep.subr.mxu0 0.0
  %3601 = vmatpush1.msra.mxu0 0.0
  %3602 = vmatprep.subr.mxu0 %v130
  %3603 = vmatpush1.msra.mxu0 %v129
  %3604 = vmatprep.subr.mxu0 %v128
  %3605 = vmatpush1.msra.mxu0 %v127
  %3606 = vmatprep.subr.mxu0 %v126
  %3607 = vmatpush1.msra.mxu0 %v125
  %3608 = vmatprep.subr.mxu0 %v124
  %3609 = vmatpush1.msra.mxu0 %v123
  %3610 = vmatprep.subr.mxu0 0.0
  %3611 = vmatpush2.msra.mxu0 0.0
  %3612 = vmatprep.subr.mxu0 0.0
  %3613 = vmatpush2.msra.mxu0 0.0
  %3614 = vmatprep.subr.mxu0 0.0
  %3615 = vmatpush2.msra.mxu0 0.0
  %3616 = vmatprep.subr.mxu0 0.0
  %3617 = vmatpush2.msra.mxu0 0.0
  %3618 = vmatprep.subr.mxu0 0.0
  %3619 = vmatpush2.msra.mxu0 0.0
  %3620 = vmatprep.subr.mxu0 0.0
  %3621 = vmatpush2.msra.mxu0 0.0
  %3622 = vmatprep.subr.mxu0 0.0
  %3623 = vmatpush2.msra.mxu0 0.0
  %3624 = vmatprep.subr.mxu0 0.0
  %3625 = vmatpush2.msra.mxu0 0.0
  %3626 = vmatprep.subr.mxu0 0.0
  %3627 = vmatpush2.msra.mxu0 0.0
  %3628 = vmatprep.subr.mxu0 0.0
  %3629 = vmatpush2.msra.mxu0 0.0
  %3630 = vmatprep.subr.mxu0 0.0
  %3631 = vmatpush2.msra.mxu0 0.0
  %3632 = vmatprep.subr.mxu0 0.0
  %3633 = vmatpush2.msra.mxu0 0.0
  %3634 = vmatprep.subr.mxu0 0.0
  %3635 = vmatpush2.msra.mxu0 0.0
  %3636 = vmatprep.subr.mxu0 0.0
  %3637 = vmatpush2.msra.mxu0 0.0
  %3638 = vmatprep.subr.mxu0 0.0
  %3639 = vmatpush2.msra.mxu0 0.0
  %3640 = vmatprep.subr.mxu0 0.0
  %3641 = vmatpush2.msra.mxu0 0.0
  %3642 = vmatprep.mubr.f32.mxu0 0.0
  %3643 = vmatmul.mubr.f32.gmra.mxu0 %v3576
  %v3644 = vpop.f32.mrf.mxu0
  %v3645 = vadd.f32 %v2293, %v3644
  %v3646 = vpop.f32.mrf.mxu0
  %v3647 = vadd.f32 %v2297, %v3646
  %3648 = vdwg.mxu0
  %3649 = vmatprep.subr.mxu0 0.0
  %3650 = vmatpush1.msra.mxu0 0.0
  %3651 = vmatprep.subr.mxu0 0.0
  %3652 = vmatpush1.msra.mxu0 0.0
  %3653 = vmatprep.subr.mxu0 0.0
  %3654 = vmatpush1.msra.mxu0 0.0
  %3655 = vmatprep.subr.mxu0 0.0
  %3656 = vmatpush1.msra.mxu0 0.0
  %3657 = vmatprep.subr.mxu0 0.0
  %3658 = vmatpush1.msra.mxu0 0.0
  %3659 = vmatprep.subr.mxu0 0.0
  %3660 = vmatpush1.msra.mxu0 0.0
  %3661 = vmatprep.subr.mxu0 0.0
  %3662 = vmatpush1.msra.mxu0 0.0
  %3663 = vmatprep.subr.mxu0 0.0
  %3664 = vmatpush1.msra.mxu0 0.0
  %3665 = vmatprep.subr.mxu0 %v146
  %3666 = vmatpush1.msra.mxu0 %v145
  %3667 = vmatprep.subr.mxu0 %v144
  %3668 = vmatpush1.msra.mxu0 %v143
  %3669 = vmatprep.subr.mxu0 %v142
  %3670 = vmatpush1.msra.mxu0 %v141
  %3671 = vmatprep.subr.mxu0 %v140
  %3672 = vmatpush1.msra.mxu0 %v139
  %3673 = vmatprep.subr.mxu0 %v138
  %3674 = vmatpush1.msra.mxu0 %v137
  %3675 = vmatprep.subr.mxu0 %v136
  %3676 = vmatpush1.msra.mxu0 %v135
  %3677 = vmatprep.subr.mxu0 %v134
  %3678 = vmatpush1.msra.mxu0 %v133
  %3679 = vmatprep.subr.mxu0 %v132
  %3680 = vmatpush1.msra.mxu0 %v131
  %3681 = vmatprep.subr.mxu0 0.0
  %3682 = vmatpush2.msra.mxu0 0.0
  %3683 = vmatprep.subr.mxu0 0.0
  %3684 = vmatpush2.msra.mxu0 0.0
  %3685 = vmatprep.subr.mxu0 0.0
  %3686 = vmatpush2.msra.mxu0 0.0
  %3687 = vmatprep.subr.mxu0 0.0
  %3688 = vmatpush2.msra.mxu0 0.0
  %3689 = vmatprep.subr.mxu0 0.0
  %3690 = vmatpush2.msra.mxu0 0.0
  %3691 = vmatprep.subr.mxu0 0.0
  %3692 = vmatpush2.msra.mxu0 0.0
  %3693 = vmatprep.subr.mxu0 0.0
  %3694 = vmatpush2.msra.mxu0 0.0
  %3695 = vmatprep.subr.mxu0 0.0
  %3696 = vmatpush2.msra.mxu0 0.0
  %3697 = vmatprep.subr.mxu0 0.0
  %3698 = vmatpush2.msra.mxu0 0.0
  %3699 = vmatprep.subr.mxu0 0.0
  %3700 = vmatpush2.msra.mxu0 0.0
  %3701 = vmatprep.subr.mxu0 0.0
  %3702 = vmatpush2.msra.mxu0 0.0
  %3703 = vmatprep.subr.mxu0 0.0
  %3704 = vmatpush2.msra.mxu0 0.0
  %3705 = vmatprep.subr.mxu0 0.0
  %3706 = vmatpush2.msra.mxu0 0.0
  %3707 = vmatprep.subr.mxu0 0.0
  %3708 = vmatpush2.msra.mxu0 0.0
  %3709 = vmatprep.subr.mxu0 0.0
  %3710 = vmatpush2.msra.mxu0 0.0
  %3711 = vmatprep.subr.mxu0 0.0
  %3712 = vmatpush2.msra.mxu0 0.0
  %3713 = vmatprep.mubr.f32.mxu0 0.0
  %3714 = vmatmul.mubr.f32.gmra.mxu0 %v3338
  %v3715 = vpop.f32.mrf.mxu0
  %v3716 = vadd.f32 %v2384, %v3715
  %v3717 = vpop.f32.mrf.mxu0
  %v3718 = vadd.f32 %v2388, %v3717
  %3719 = vdwg.mxu0
  %v3720 = vadd.f32 %v3645, %v3716
  %v3721 = vxor.u32 %v3720, 2147483648
  %v3722 = vmul.f32 %v3721, 1.442695
  %v3723 = vpow.pop %v3722
  %v3724 = vadd.f32 %v3723, 1.0
  %v3725 = vrcp.pop %v3724
  %v3726 = vmul.f32 1.0, %v3725
  %v3727 = vmul.f32 %v3726, %v3718
  %v3728 = vadd.f32 %v3647, %v3727
  %v3729 = vtanh.pop %v3728
  %v3730 = vsub.f32 1.0, %v3726
  %3732 = vrot.lane.b32.xlu0 %v3729, 64
  %v3733 = vpop.permute.xlu0 %3732
  %v3735 = vmul.f32 %v3730, %v3733
  %v3736 = vmul.f32 %v3726, %v3334
  %v3737 = vadd.f32 %v3735, %v3736
  %3739 = vrot.lane.b32.xlu0 %v3737, 64
  %v3740 = vpop.permute.xlu0 %3739
  %v3741 = vsel %vm220, %v3740, 0
  %3743 = vmatprep.subr.mxu0 0.0
  %3744 = vmatpush1.msra.mxu0 0.0
  %3745 = vmatprep.subr.mxu0 0.0
  %3746 = vmatpush1.msra.mxu0 0.0
  %3747 = vmatprep.subr.mxu0 0.0
  %3748 = vmatpush1.msra.mxu0 0.0
  %3749 = vmatprep.subr.mxu0 0.0
  %3750 = vmatpush1.msra.mxu0 0.0
  %3751 = vmatprep.subr.mxu0 0.0
  %3752 = vmatpush1.msra.mxu0 0.0
  %3753 = vmatprep.subr.mxu0 0.0
  %3754 = vmatpush1.msra.mxu0 0.0
  %3755 = vmatprep.subr.mxu0 0.0
  %3756 = vmatpush1.msra.mxu0 0.0
  %3757 = vmatprep.subr.mxu0 0.0
  %3758 = vmatpush1.msra.mxu0 0.0
  %3759 = vmatprep.subr.mxu0 %v162
  %3760 = vmatpush1.msra.mxu0 %v161
  %3761 = vmatprep.subr.mxu0 %v160
  %3762 = vmatpush1.msra.mxu0 %v159
  %3763 = vmatprep.subr.mxu0 %v158
  %3764 = vmatpush1.msra.mxu0 %v157
  %3765 = vmatprep.subr.mxu0 %v156
  %3766 = vmatpush1.msra.mxu0 %v155
  %3767 = vmatprep.subr.mxu0 %v154
  %3768 = vmatpush1.msra.mxu0 %v153
  %3769 = vmatprep.subr.mxu0 %v152
  %3770 = vmatpush1.msra.mxu0 %v151
  %3771 = vmatprep.subr.mxu0 %v150
  %3772 = vmatpush1.msra.mxu0 %v149
  %3773 = vmatprep.subr.mxu0 %v148
  %3774 = vmatpush1.msra.mxu0 %v147
  %3775 = vmatprep.subr.mxu0 0.0
  %3776 = vmatpush2.msra.mxu0 0.0
  %3777 = vmatprep.subr.mxu0 0.0
  %3778 = vmatpush2.msra.mxu0 0.0
  %3779 = vmatprep.subr.mxu0 0.0
  %3780 = vmatpush2.msra.mxu0 0.0
  %3781 = vmatprep.subr.mxu0 0.0
  %3782 = vmatpush2.msra.mxu0 0.0
  %3783 = vmatprep.subr.mxu0 0.0
  %3784 = vmatpush2.msra.mxu0 0.0
  %3785 = vmatprep.subr.mxu0 0.0
  %3786 = vmatpush2.msra.mxu0 0.0
  %3787 = vmatprep.subr.mxu0 0.0
  %3788 = vmatpush2.msra.mxu0 0.0
  %3789 = vmatprep.subr.mxu0 0.0
  %3790 = vmatpush2.msra.mxu0 0.0
  %3791 = vmatprep.subr.mxu0 0.0
  %3792 = vmatpush2.msra.mxu0 0.0
  %3793 = vmatprep.subr.mxu0 0.0
  %3794 = vmatpush2.msra.mxu0 0.0
  %3795 = vmatprep.subr.mxu0 0.0
  %3796 = vmatpush2.msra.mxu0 0.0
  %3797 = vmatprep.subr.mxu0 0.0
  %3798 = vmatpush2.msra.mxu0 0.0
  %3799 = vmatprep.subr.mxu0 0.0
  %3800 = vmatpush2.msra.mxu0 0.0
  %3801 = vmatprep.subr.mxu0 0.0
  %3802 = vmatpush2.msra.mxu0 0.0
  %3803 = vmatprep.subr.mxu0 0.0
  %3804 = vmatpush2.msra.mxu0 0.0
  %3805 = vmatprep.subr.mxu0 0.0
  %3806 = vmatpush2.msra.mxu0 0.0
  %3807 = vmatprep.mubr.f32.mxu0 0.0
  %3808 = vmatmul.mubr.f32.gmra.mxu0 %v3741
  %v3809 = vpop.f32.mrf.mxu0
  %v3810 = vadd.f32 %v2495, %v3809
  %v3811 = vpop.f32.mrf.mxu0
  %v3812 = vadd.f32 %v2499, %v3811
  %3813 = vdwg.mxu0
  %3814 = vmatprep.subr.mxu0 0.0
  %3815 = vmatpush1.msra.mxu0 0.0
  %3816 = vmatprep.subr.mxu0 0.0
  %3817 = vmatpush1.msra.mxu0 0.0
  %3818 = vmatprep.subr.mxu0 0.0
  %3819 = vmatpush1.msra.mxu0 0.0
  %3820 = vmatprep.subr.mxu0 0.0
  %3821 = vmatpush1.msra.mxu0 0.0
  %3822 = vmatprep.subr.mxu0 0.0
  %3823 = vmatpush1.msra.mxu0 0.0
  %3824 = vmatprep.subr.mxu0 0.0
  %3825 = vmatpush1.msra.mxu0 0.0
  %3826 = vmatprep.subr.mxu0 0.0
  %3827 = vmatpush1.msra.mxu0 0.0
  %3828 = vmatprep.subr.mxu0 0.0
  %3829 = vmatpush1.msra.mxu0 0.0
  %3830 = vmatprep.subr.mxu0 %v178
  %3831 = vmatpush1.msra.mxu0 %v177
  %3832 = vmatprep.subr.mxu0 %v176
  %3833 = vmatpush1.msra.mxu0 %v175
  %3834 = vmatprep.subr.mxu0 %v174
  %3835 = vmatpush1.msra.mxu0 %v173
  %3836 = vmatprep.subr.mxu0 %v172
  %3837 = vmatpush1.msra.mxu0 %v171
  %3838 = vmatprep.subr.mxu0 %v170
  %3839 = vmatpush1.msra.mxu0 %v169
  %3840 = vmatprep.subr.mxu0 %v168
  %3841 = vmatpush1.msra.mxu0 %v167
  %3842 = vmatprep.subr.mxu0 %v166
  %3843 = vmatpush1.msra.mxu0 %v165
  %3844 = vmatprep.subr.mxu0 %v164
  %3845 = vmatpush1.msra.mxu0 %v163
  %3846 = vmatprep.subr.mxu0 0.0
  %3847 = vmatpush2.msra.mxu0 0.0
  %3848 = vmatprep.subr.mxu0 0.0
  %3849 = vmatpush2.msra.mxu0 0.0
  %3850 = vmatprep.subr.mxu0 0.0
  %3851 = vmatpush2.msra.mxu0 0.0
  %3852 = vmatprep.subr.mxu0 0.0
  %3853 = vmatpush2.msra.mxu0 0.0
  %3854 = vmatprep.subr.mxu0 0.0
  %3855 = vmatpush2.msra.mxu0 0.0
  %3856 = vmatprep.subr.mxu0 0.0
  %3857 = vmatpush2.msra.mxu0 0.0
  %3858 = vmatprep.subr.mxu0 0.0
  %3859 = vmatpush2.msra.mxu0 0.0
  %3860 = vmatprep.subr.mxu0 0.0
  %3861 = vmatpush2.msra.mxu0 0.0
  %3862 = vmatprep.subr.mxu0 0.0
  %3863 = vmatpush2.msra.mxu0 0.0
  %3864 = vmatprep.subr.mxu0 0.0
  %3865 = vmatpush2.msra.mxu0 0.0
  %3866 = vmatprep.subr.mxu0 0.0
  %3867 = vmatpush2.msra.mxu0 0.0
  %3868 = vmatprep.subr.mxu0 0.0
  %3869 = vmatpush2.msra.mxu0 0.0
  %3870 = vmatprep.subr.mxu0 0.0
  %3871 = vmatpush2.msra.mxu0 0.0
  %3872 = vmatprep.subr.mxu0 0.0
  %3873 = vmatpush2.msra.mxu0 0.0
  %3874 = vmatprep.subr.mxu0 0.0
  %3875 = vmatpush2.msra.mxu0 0.0
  %3876 = vmatprep.subr.mxu0 0.0
  %3877 = vmatpush2.msra.mxu0 0.0
  %3878 = vmatprep.mubr.f32.mxu0 0.0
  %3879 = vmatmul.mubr.f32.gmra.mxu0 %v3503
  %v3880 = vpop.f32.mrf.mxu0
  %v3881 = vadd.f32 %v2589, %v3880
  %v3882 = vpop.f32.mrf.mxu0
  %v3883 = vadd.f32 %v2593, %v3882
  %3884 = vdwg.mxu0
  %v3885 = vadd.f32 %v3810, %v3881
  %v3886 = vxor.u32 %v3885, 2147483648
  %v3887 = vmul.f32 %v3886, 1.442695
  %v3888 = vpow.pop %v3887
  %v3889 = vadd.f32 %v3888, 1.0
  %v3890 = vrcp.pop %v3889
  %v3891 = vmul.f32 1.0, %v3890
  %v3892 = vmul.f32 %v3891, %v3883
  %v3893 = vadd.f32 %v3812, %v3892
  %v3894 = vtanh.pop %v3893
  %v3895 = vsub.f32 1.0, %v3891
  %3897 = vrot.lane.b32.xlu0 %v3894, 64
  %v3898 = vpop.permute.xlu0 %3897
  %v3900 = vmul.f32 %v3895, %v3898
  %v3901 = vmul.f32 %v3891, %v3499
  %v3902 = vadd.f32 %v3900, %v3901
  %3904 = vrot.lane.b32.xlu0 %v3902, 64
  %v3905 = vpop.permute.xlu0 %3904
  %v3906 = vsel %vm220, %v3905, 0
  %3908 = vmatprep.subr.mxu0 0.0
  %3909 = vmatpush1.msra.mxu0 0.0
  %3910 = vmatprep.subr.mxu0 0.0
  %3911 = vmatpush1.msra.mxu0 0.0
  %3912 = vmatprep.subr.mxu0 0.0
  %3913 = vmatpush1.msra.mxu0 0.0
  %3914 = vmatprep.subr.mxu0 0.0
  %3915 = vmatpush1.msra.mxu0 0.0
  %3916 = vmatprep.subr.mxu0 0.0
  %3917 = vmatpush1.msra.mxu0 0.0
  %3918 = vmatprep.subr.mxu0 0.0
  %3919 = vmatpush1.msra.mxu0 0.0
  %3920 = vmatprep.subr.mxu0 0.0
  %3921 = vmatpush1.msra.mxu0 0.0
  %3922 = vmatprep.subr.mxu0 0.0
  %3923 = vmatpush1.msra.mxu0 0.0
  %3924 = vmatprep.subr.mxu0 0.0
  %3925 = vmatpush1.msra.mxu0 %v187
  %3926 = vmatprep.subr.mxu0 0.0
  %3927 = vmatpush1.msra.mxu0 %v186
  %3928 = vmatprep.subr.mxu0 0.0
  %3929 = vmatpush1.msra.mxu0 %v185
  %3930 = vmatprep.subr.mxu0 0.0
  %3931 = vmatpush1.msra.mxu0 %v184
  %3932 = vmatprep.subr.mxu0 0.0
  %3933 = vmatpush1.msra.mxu0 %v183
  %3934 = vmatprep.subr.mxu0 0.0
  %3935 = vmatpush1.msra.mxu0 %v182
  %3936 = vmatprep.subr.mxu0 0.0
  %3937 = vmatpush1.msra.mxu0 %v181
  %3938 = vmatprep.subr.mxu0 0.0
  %3939 = vmatpush1.msra.mxu0 %v180
  %3940 = vmatprep.subr.mxu0 0.0
  %3941 = vmatpush2.msra.mxu0 0.0
  %3942 = vmatprep.subr.mxu0 0.0
  %3943 = vmatpush2.msra.mxu0 0.0
  %3944 = vmatprep.subr.mxu0 0.0
  %3945 = vmatpush2.msra.mxu0 0.0
  %3946 = vmatprep.subr.mxu0 0.0
  %3947 = vmatpush2.msra.mxu0 0.0
  %3948 = vmatprep.subr.mxu0 0.0
  %3949 = vmatpush2.msra.mxu0 0.0
  %3950 = vmatprep.subr.mxu0 0.0
  %3951 = vmatpush2.msra.mxu0 0.0
  %3952 = vmatprep.subr.mxu0 0.0
  %3953 = vmatpush2.msra.mxu0 0.0
  %3954 = vmatprep.subr.mxu0 0.0
  %3955 = vmatpush2.msra.mxu0 0.0
  %3956 = vmatprep.subr.mxu0 0.0
  %3957 = vmatpush2.msra.mxu0 0.0
  %3958 = vmatprep.subr.mxu0 0.0
  %3959 = vmatpush2.msra.mxu0 0.0
  %3960 = vmatprep.subr.mxu0 0.0
  %3961 = vmatpush2.msra.mxu0 0.0
  %3962 = vmatprep.subr.mxu0 0.0
  %3963 = vmatpush2.msra.mxu0 0.0
  %3964 = vmatprep.subr.mxu0 0.0
  %3965 = vmatpush2.msra.mxu0 0.0
  %3966 = vmatprep.subr.mxu0 0.0
  %3967 = vmatpush2.msra.mxu0 0.0
  %3968 = vmatprep.subr.mxu0 0.0
  %3969 = vmatpush2.msra.mxu0 0.0
  %3970 = vmatprep.subr.mxu0 0.0
  %3971 = vmatpush2.msra.mxu0 0.0
  %3972 = vmatprep.mubr.f32.mxu0 0.0
  %3973 = vmatmul.mubr.f32.gmra.mxu0 %v3906
  %v3974 = vpop.f32.mrf.mxu0
  %v3975 = vadd.f32 %v2693, %v3974
  %v3976 = vpop.f32.mrf.mxu0
  %3977 = vdwg.mxu0
  %3978 = vrot.lane.b32.xlu0 %v3169, 32
  %v3979 = vpop.permute.xlu0 %3978
  %3981 = vrot.lane.b32.xlu0 %v3572, 64
  %v3982 = vpop.permute.xlu0 %3981
  %3985 = vrot.lane.b32.xlu0 %v3975, 96
  %v3986 = vpop.permute.xlu0 %3985
  %v3988 = vsel %vm218, %v2766, %v3979
  %v3989 = vsel %vm220, %v3988, %v3982
  %v3990 = vsel %vm222, %v3989, %v3986
  %3991 = vst [vmem:[%s7] sm:$0x3] %v3990
  // Predicated region
  $region30: #{_forward_core.1} parent=0 // pred_check
    _
  $region31: #{_forward_core.1} parent=0 // pred_check_branch
    %3993 = sbr.rel (0) target = $region33
  $region32: #{_forward_core.1} parent=0 // pred_region
    _
  $region33: #{_forward_core.1} parent=0 // pred_fallthru
    _
  // Predicated region
  $region34: #{_forward_core.1} parent=0 // pred_check
    _
  $region35: #{_forward_core.1} parent=0 // pred_check_branch
    %3995 = sbr.rel (0) target = $region37
  $region36: #{_forward_core.1} parent=0 // pred_region
    _
  $region37: #{_forward_core.1} parent=0 // pred_fallthru
    _

</llo_original>
